<compile_context>
chip_gen: v7x
topology: tpu7x:2x2x1
jax: 0.10.0
libtpu: 0.0.40
codegen_flags: <defaults>
</compile_context>

<pallas_src>
import numpy as np
import jax
import jax.numpy as jnp
from jax import lax
from jax.experimental import pallas as pl
from jax.experimental.pallas import tpu as pltpu

BN_EPS = 0.8   # nn.BatchNorm1d(out_feat, 0.8): second positional arg is eps
LEAK = 0.2     # LeakyReLU negative slope


def _leaky(x):
    # max(x, 0.2*x) == LeakyReLU(0.2) for slope in [0,1): single VPU op.
    return jnp.maximum(x, LEAK * x)


def _bn_leaky(h, gamma, beta):
    # Training-mode BatchNorm1d, one data sweep, folded into fused scale/shift:
    #   s = gamma * rsqrt(var + eps)   (1, fout)
    #   t = beta  - mean * s           (1, fout)
    #   h = h * s + t                  -> 2 VPU ops on the (B, fout) tensor
    mean = jnp.mean(h, axis=0, keepdims=True)
    var = jnp.mean(h * h, axis=0, keepdims=True) - mean * mean
    var = jnp.maximum(var, 0.0)           # guard one-pass cancellation
    s = gamma * lax.rsqrt(var + BN_EPS)
    t = beta - mean * s
    return _leaky(h * s + t)


def _mm(a_f32, w_ref):
    # bf16 operands (weights already bf16), f32 MXU accumulation.
    return jnp.dot(a_f32.astype(jnp.bfloat16), w_ref[...],
                   preferred_element_type=jnp.float32)


# --------------------------------------------------------------------------
# Call 1: embedding + Linear1/LeakyReLU + 3x (Linear/BN/LeakyReLU) -> h4 bf16
# Runs as a single grid step over the FULL batch (BN statistics need it).
# --------------------------------------------------------------------------
def _backbone_kernel(lab_ref, noise_ref, embw1_ref, w1b_ref, b1_ref,
                     w2_ref, b2_ref, g2_ref, be2_ref,
                     w3_ref, b3_ref, g3_ref, be3_ref,
                     w4_ref, b4_ref, g4_ref, be4_ref,
                     h4_ref):
    B = noise_ref.shape[0]
    aux = embw1_ref.shape[0]
    # Fused nn.Embedding lookup + cat(emb, noise) @ W1:
    #   cat(emb, noise) @ W1 == (emb @ W1[:aux]) + noise @ W1[aux:]
    # emb @ W1[:aux] is precomputed (embW1, f32); the one-hot matmul below is
    # an EXACT row-select of that f32 slab (single 1.0 per row).
    onehot = (lab_ref[...] ==
              lax.broadcasted_iota(jnp.int32, (B, aux), 1))
    emb_part = jnp.dot(onehot.astype(jnp.float32), embw1_ref[...],
                       preferred_element_type=jnp.float32)
    h = _leaky(emb_part + _mm(noise_ref[...], w1b_ref) + b1_ref[...])
    h = _bn_leaky(_mm(h, w2_ref) + b2_ref[...], g2_ref[...], be2_ref[...])
    h = _bn_leaky(_mm(h, w3_ref) + b3_ref[...], g3_ref[...], be3_ref[...])
    h = _bn_leaky(_mm(h, w4_ref) + b4_ref[...], g4_ref[...], be4_ref[...])
    h4_ref[...] = h.astype(jnp.bfloat16)    # bf16 across the call boundary


# --------------------------------------------------------------------------
# Call 2: final Linear(1024, out_dim) + Tanh, column-tiled, parallel grid.
# h4 is resident (constant block index); w5/b5/out are lane-dense column tiles.
# --------------------------------------------------------------------------
def _head_kernel(h4_ref, w5_ref, b5_ref, out_ref):
    o = jnp.dot(h4_ref[...], w5_ref[...],
                preferred_element_type=jnp.float32) + b5_ref[...]
    out_ref[...] = jnp.tanh(o).astype(out_ref.dtype)


def init_generator_params(key, latent_dim, image_shape, auxiliary):
    """Deterministic synthetic parameters with the PyTorch module's shapes."""
    out_dim = int(np.prod(image_shape))
    in0 = auxiliary + latent_dim
    dims = [(in0, 128), (128, 256), (256, 512), (512, 1024), (1024, out_dim)]
    keys = jax.random.split(key, 1 + 2 * len(dims))
    # nn.Embedding(auxiliary, auxiliary): N(0,1) init.
    emb = jax.random.normal(keys[0], (auxiliary, auxiliary), jnp.float32)

    params = {}
    raw_w = {}
    for li, (fin, fout) in enumerate(dims, start=1):
        kw, kb = keys[2 * li - 1], keys[2 * li]
        bound = 1.0 / np.sqrt(fin)
        # Weights stored transposed to (in, out) so the kernels do x @ W;
        # bf16 halves the HBM->VMEM weight traffic (the dominant per-call cost).
        raw_w[li] = jax.random.uniform(
            kw, (fin, fout), jnp.float32, -bound, bound).astype(jnp.bfloat16)
        params[f"b{li}"] = jax.random.uniform(
            kb, (1, fout), jnp.float32, -bound, bound)
    # Layer 1 pre-split: embW1 = emb @ W1[:aux] precomputed once (f32 so the
    # in-kernel one-hot select stays exact); noise part stays bf16.
    params["embw1"] = jnp.dot(emb.astype(jnp.bfloat16), raw_w[1][:auxiliary],
                              preferred_element_type=jnp.float32)
    params["w1b"] = raw_w[1][auxiliary:]                 # (latent, 128) bf16
    for li in (2, 3, 4, 5):
        params[f"w{li}"] = raw_w[li]
    # BatchNorm affine params for blocks 2..4 (gamma=1, beta=0 torch init).
    for li, fout in [(2, 256), (3, 512), (4, 1024)]:
        params[f"g{li}"] = jnp.ones((1, fout), jnp.float32)
        params[f"be{li}"] = jnp.zeros((1, fout), jnp.float32)
    return params


def _pick_last_tile(out_dim_padded):
    # Lane-dense column tile for the final Linear; multiples of 256 preferred
    # (v6e/v7x 2x256^2 MXU), keeps w5 bounded in VMEM for large image_shape.
    for tn in (2048, 1024, 512, 256, 128):
        if out_dim_padded % tn == 0:
            return tn
    return out_dim_padded


def generator_forward(noise, labels, params, image_shape):
    """noise: (B, latent_dim) f32; labels: (B,) int32 in [0, auxiliary)."""
    B = noise.shape[0]
    hidden = params["w5"].shape[0]                       # 1024
    out_dim = int(np.prod(image_shape))

    labels2d = labels.reshape(B, 1).astype(jnp.int32)

    # ---------------- Call 1: backbone (whole batch, one grid step) --------
    back_args = [
        labels2d, noise.astype(jnp.float32), params["embw1"],
        params["w1b"], params["b1"],
        params["w2"], params["b2"], params["g2"], params["be2"],
        params["w3"], params["b3"], params["g3"], params["be3"],
        params["w4"], params["b4"], params["g4"], params["be4"],
    ]

    def full(a):
        # Full-array block, constant index: DMA'd once, resident in VMEM.
        assert a.ndim == 2
        return pl.BlockSpec(a.shape, lambda i: (0, 0))

    h4 = pl.pallas_call(
        _backbone_kernel,
        out_shape=jax.ShapeDtypeStruct((B, hidden), jnp.bfloat16),
        grid_spec=pltpu.PrefetchScalarGridSpec(
            num_scalar_prefetch=0,
            grid=(1,),
            in_specs=[full(a) for a in back_args],
            out_specs=pl.BlockSpec((B, hidden), lambda i: (0, 0))),
        compiler_params=pltpu.CompilerParams(
            # BN batch statistics -> layers 1-4 must not be split across
            # cores or batch tiles.
            dimension_semantics=("arbitrary",),
            vmem_limit_bytes=32 << 20),
    )(*back_args)

    # ---------------- Call 2: final Linear + tanh, parallel column tiles ---
    # Pad out_dim to a multiple of 128 so every output tile is lane-dense
    # (unmasked vst); slice the padding off outside the kernel.
    out_dim_p = ((out_dim + 127) // 128) * 128
    w5, b5 = params["w5"], params["b5"]
    if out_dim_p != out_dim:
        w5 = jnp.pad(w5, ((0, 0), (0, out_dim_p - out_dim)))
        b5 = jnp.pad(b5, ((0, 0), (0, out_dim_p - out_dim)))
    tn = _pick_last_tile(out_dim_p)

    img_flat = pl.pallas_call(
        _head_kernel,
        out_shape=jax.ShapeDtypeStruct((B, out_dim_p), jnp.bfloat16),
        grid_spec=pltpu.PrefetchScalarGridSpec(
            num_scalar_prefetch=0,
            grid=(out_dim_p // tn,),
            in_specs=[pl.BlockSpec((B, hidden), lambda j: (0, 0)),   # h4 resident
                      pl.BlockSpec((hidden, tn), lambda j: (0, j)),  # w5 col tile
                      pl.BlockSpec((1, tn), lambda j: (0, j))],      # b5 col tile
            out_specs=pl.BlockSpec((B, tn), lambda j: (0, j))),
        compiler_params=pltpu.CompilerParams(
            # No cross-tile dependency here -> v7x can split column tiles
            # across both TensorCores.
            dimension_semantics=("parallel",),
            vmem_limit_bytes=32 << 20),
    )(h4, w5, b5)

    if out_dim_p != out_dim:
        img_flat = img_flat[:, :out_dim]
    # img.view(B, *image_shape) -> NCHW
    return img_flat.reshape((B,) + tuple(image_shape))


def generator_reference(noise, labels, params, image_shape):
    """Pure-JAX reference using the same bf16 weights / f32 accumulation."""
    def mm(a, w):
        return jnp.dot(a.astype(jnp.bfloat16), w,
                       preferred_element_type=jnp.float32)

    h = _leaky(params["embw1"][labels] + mm(noise, params["w1b"])
               + params["b1"])
    for li in (2, 3, 4):
        h = mm(h, params[f"w{li}"]) + params[f"b{li}"]
        mean = jnp.mean(h, axis=0, keepdims=True)
        var = jnp.maximum(
            jnp.mean(h * h, axis=0, keepdims=True) - mean * mean, 0.0)
        s = params[f"g{li}"] * lax.rsqrt(var + BN_EPS)
        t = params[f"be{li}"] - mean * s
        h = _leaky(h * s + t)
    h = jnp.tanh(mm(h, params["w5"]) + params["b5"])
    return h.reshape((noise.shape[0],) + tuple(image_shape))


if __name__ == "__main__":
    latent_dim = 32
    auxiliary = 10
    image_shape = (1, 16, 16)   # C, H, W  -> out_dim = 256
    batch = 16                  # small demo; keep multiples of 16 (bf16 packing)

    root = jax.random.PRNGKey(0)
    k_params, k_noise, k_labels = jax.random.split(root, 3)

    params = init_generator_params(k_params, latent_dim, image_shape, auxiliary)
    noise = jax.random.normal(k_noise, (batch, latent_dim), jnp.float32)
    labels = jax.random.randint(k_labels, (batch,), 0, auxiliary, jnp.int32)

    fwd = jax.jit(generator_forward, static_argnums=3)
    img = jax.block_until_ready(fwd(noise, labels, params, image_shape))

    assert img.shape == (batch,) + image_shape, img.shape
    assert img.dtype == jnp.bfloat16
    assert bool(jnp.all(jnp.isfinite(img.astype(jnp.float32))))

    ref = jax.block_until_ready(
        generator_reference(noise, labels, params, image_shape))
    # bf16 weights + bf16 output -> relaxed tolerance.
    np.testing.assert_allclose(np.asarray(img.astype(jnp.float32)),
                               np.asarray(ref), atol=2e-2, rtol=2e-2)

    print("KERNEL_OK")
</pallas_src>

<mosaic_0001>
module attributes {stable_mosaic.version = 11 : i64} {
  func.func @_backbone_kernel(%arg0: i32, %arg1: memref<16x1xi32, #tpu.memory_space<vmem>>, %arg2: memref<16x32xf32, #tpu.memory_space<vmem>>, %arg3: memref<10x128xf32, #tpu.memory_space<vmem>>, %arg4: memref<32x128xbf16, #tpu.memory_space<vmem>>, %arg5: memref<1x128xf32, #tpu.memory_space<vmem>>, %arg6: memref<128x256xbf16, #tpu.memory_space<vmem>>, %arg7: memref<1x256xf32, #tpu.memory_space<vmem>>, %arg8: memref<1x256xf32, #tpu.memory_space<vmem>>, %arg9: memref<1x256xf32, #tpu.memory_space<vmem>>, %arg10: memref<256x512xbf16, #tpu.memory_space<vmem>>, %arg11: memref<1x512xf32, #tpu.memory_space<vmem>>, %arg12: memref<1x512xf32, #tpu.memory_space<vmem>>, %arg13: memref<1x512xf32, #tpu.memory_space<vmem>>, %arg14: memref<512x1024xbf16, #tpu.memory_space<vmem>>, %arg15: memref<1x1024xf32, #tpu.memory_space<vmem>>, %arg16: memref<1x1024xf32, #tpu.memory_space<vmem>>, %arg17: memref<1x1024xf32, #tpu.memory_space<vmem>>, %arg18: memref<16x1024xbf16, #tpu.memory_space<vmem>>) attributes {dimension_semantics = [#tpu.dimension_semantics<arbitrary>], iteration_bounds = array<i64: 1>, scalar_prefetch = 0 : i64, scratch_operands = 0 : i64, tpu.core_type = #tpu.core_type<tc>, window_params = [{pipeline_mode = #tpu.pipeline_mode<synchronous>, transform_indices = @transform_0, window_bounds = array<i64: 16, 1>}, {pipeline_mode = #tpu.pipeline_mode<synchronous>, transform_indices = @transform_1, window_bounds = array<i64: 16, 32>}, {pipeline_mode = #tpu.pipeline_mode<synchronous>, transform_indices = @transform_2, window_bounds = array<i64: 10, 128>}, {pipeline_mode = #tpu.pipeline_mode<synchronous>, transform_indices = @transform_3, window_bounds = array<i64: 32, 128>}, {pipeline_mode = #tpu.pipeline_mode<synchronous>, transform_indices = @transform_4, window_bounds = array<i64: 1, 128>}, {pipeline_mode = #tpu.pipeline_mode<synchronous>, transform_indices = @transform_5, window_bounds = array<i64: 128, 256>}, {pipeline_mode = #tpu.pipeline_mode<synchronous>, transform_indices = @transform_6, window_bounds = array<i64: 1, 256>}, {pipeline_mode = #tpu.pipeline_mode<synchronous>, transform_indices = @transform_7, window_bounds = array<i64: 1, 256>}, {pipeline_mode = #tpu.pipeline_mode<synchronous>, transform_indices = @transform_8, window_bounds = array<i64: 1, 256>}, {pipeline_mode = #tpu.pipeline_mode<synchronous>, transform_indices = @transform_9, window_bounds = array<i64: 256, 512>}, {pipeline_mode = #tpu.pipeline_mode<synchronous>, transform_indices = @transform_10, window_bounds = array<i64: 1, 512>}, {pipeline_mode = #tpu.pipeline_mode<synchronous>, transform_indices = @transform_11, window_bounds = array<i64: 1, 512>}, {pipeline_mode = #tpu.pipeline_mode<synchronous>, transform_indices = @transform_12, window_bounds = array<i64: 1, 512>}, {pipeline_mode = #tpu.pipeline_mode<synchronous>, transform_indices = @transform_13, window_bounds = array<i64: 512, 1024>}, {pipeline_mode = #tpu.pipeline_mode<synchronous>, transform_indices = @transform_14, window_bounds = array<i64: 1, 1024>}, {pipeline_mode = #tpu.pipeline_mode<synchronous>, transform_indices = @transform_15, window_bounds = array<i64: 1, 1024>}, {pipeline_mode = #tpu.pipeline_mode<synchronous>, transform_indices = @transform_16, window_bounds = array<i64: 1, 1024>}, {pipeline_mode = #tpu.pipeline_mode<synchronous>, transform_indices = @transform_17, window_bounds = array<i64: 16, 1024>}]} {
    %c0 = arith.constant 0 : index
    %c0_0 = arith.constant 0 : index
    %0 = vector.load %arg1[%c0, %c0_0] : memref<16x1xi32, #tpu.memory_space<vmem>>, vector<16x1xi32>
    %1 = tpu.iota {dimensions = array<i32: 1>} : vector<16x10xi32>
    %2 = vector.broadcast %0 : vector<16x1xi32> to vector<16x10xi32>
    %3 = arith.cmpi eq, %2, %1 : vector<16x10xi32>
    %4 = arith.extui %3 : vector<16x10xi1> to vector<16x10xi32>
    %5 = arith.sitofp %4 : vector<16x10xi32> to vector<16x10xf32>
    %c0_1 = arith.constant 0 : index
    %c0_2 = arith.constant 0 : index
    %6 = vector.load %arg3[%c0_1, %c0_2] : memref<10x128xf32, #tpu.memory_space<vmem>>, vector<10x128xf32>
    %cst = arith.constant dense<0.000000e+00> : vector<16x128xf32>
    %7 = tpu.matmul %5, %6, %cst {dimension_numbers = #tpu.dot_dimension_numbers<[1], [0], [0], [1], [0, 0, 1, 1], [], []>} : vector<16x10xf32>, vector<10x128xf32>, vector<16x128xf32> -> vector<16x128xf32>
    %c0_3 = arith.constant 0 : index
    %c0_4 = arith.constant 0 : index
    %8 = vector.load %arg2[%c0_3, %c0_4] : memref<16x32xf32, #tpu.memory_space<vmem>>, vector<16x32xf32>
    %9 = arith.truncf %8 : vector<16x32xf32> to vector<16x32xbf16>
    %c0_5 = arith.constant 0 : index
    %c0_6 = arith.constant 0 : index
    %10 = vector.load %arg4[%c0_5, %c0_6] : memref<32x128xbf16, #tpu.memory_space<vmem>>, vector<32x128xbf16>
    %cst_7 = arith.constant dense<0.000000e+00> : vector<16x128xf32>
    %11 = tpu.matmul %9, %10, %cst_7 {dimension_numbers = #tpu.dot_dimension_numbers<[1], [0], [0], [1], [0, 0, 1, 1], [], []>} : vector<16x32xbf16>, vector<32x128xbf16>, vector<16x128xf32> -> vector<16x128xf32>
    %12 = arith.addf %7, %11 : vector<16x128xf32>
    %c0_8 = arith.constant 0 : index
    %c0_9 = arith.constant 0 : index
    %13 = vector.load %arg5[%c0_8, %c0_9] : memref<1x128xf32, #tpu.memory_space<vmem>>, vector<1x128xf32>
    %14 = vector.broadcast %13 : vector<1x128xf32> to vector<16x128xf32>
    %15 = arith.addf %12, %14 : vector<16x128xf32>
    %cst_10 = arith.constant 2.000000e-01 : f32
    %16 = vector.broadcast %cst_10 : f32 to vector<16x128xf32>
    %17 = arith.mulf %16, %15 : vector<16x128xf32>
    %18 = arith.maximumf %15, %17 : vector<16x128xf32>
    %19 = arith.truncf %18 : vector<16x128xf32> to vector<16x128xbf16>
    %c0_11 = arith.constant 0 : index
    %c0_12 = arith.constant 0 : index
    %20 = vector.load %arg6[%c0_11, %c0_12] : memref<128x256xbf16, #tpu.memory_space<vmem>>, vector<128x256xbf16>
    %cst_13 = arith.constant dense<0.000000e+00> : vector<16x256xf32>
    %21 = tpu.matmul %19, %20, %cst_13 {dimension_numbers = #tpu.dot_dimension_numbers<[1], [0], [0], [1], [0, 0, 1, 1], [], []>} : vector<16x128xbf16>, vector<128x256xbf16>, vector<16x256xf32> -> vector<16x256xf32>
    %c0_14 = arith.constant 0 : index
    %c0_15 = arith.constant 0 : index
    %22 = vector.load %arg7[%c0_14, %c0_15] : memref<1x256xf32, #tpu.memory_space<vmem>>, vector<1x256xf32>
    %23 = vector.broadcast %22 : vector<1x256xf32> to vector<16x256xf32>
    %24 = arith.addf %21, %23 : vector<16x256xf32>
    %c0_16 = arith.constant 0 : index
    %c0_17 = arith.constant 0 : index
    %25 = vector.load %arg8[%c0_16, %c0_17] : memref<1x256xf32, #tpu.memory_space<vmem>>, vector<1x256xf32>
    %c0_18 = arith.constant 0 : index
    %c0_19 = arith.constant 0 : index
    %26 = vector.load %arg9[%c0_18, %c0_19] : memref<1x256xf32, #tpu.memory_space<vmem>>, vector<1x256xf32>
    %cst_20 = arith.constant dense<0.000000e+00> : vector<256xf32>
    %27 = vector.multi_reduction <add>, %24, %cst_20 [0] : vector<16x256xf32> to vector<256xf32>
    %28 = vector.shape_cast %27 : vector<256xf32> to vector<1x256xf32>
    %cst_21 = arith.constant 1.600000e+01 : f32
    %29 = vector.broadcast %cst_21 : f32 to vector<1x256xf32>
    %30 = arith.divf %28, %29 : vector<1x256xf32>
    %31 = arith.mulf %24, %24 : vector<16x256xf32>
    %cst_22 = arith.constant dense<0.000000e+00> : vector<256xf32>
    %32 = vector.multi_reduction <add>, %31, %cst_22 [0] : vector<16x256xf32> to vector<256xf32>
    %33 = vector.shape_cast %32 : vector<256xf32> to vector<1x256xf32>
    %cst_23 = arith.constant 1.600000e+01 : f32
    %34 = vector.broadcast %cst_23 : f32 to vector<1x256xf32>
    %35 = arith.divf %33, %34 : vector<1x256xf32>
    %36 = arith.mulf %30, %30 : vector<1x256xf32>
    %37 = arith.subf %35, %36 : vector<1x256xf32>
    %cst_24 = arith.constant 0.000000e+00 : f32
    %38 = vector.broadcast %cst_24 : f32 to vector<1x256xf32>
    %39 = arith.maximumf %37, %38 : vector<1x256xf32>
    %cst_25 = arith.constant 8.000000e-01 : f32
    %40 = vector.broadcast %cst_25 : f32 to vector<1x256xf32>
    %41 = arith.addf %39, %40 : vector<1x256xf32>
    %42 = math.rsqrt %41 : vector<1x256xf32>
    %43 = arith.mulf %25, %42 : vector<1x256xf32>
    %44 = arith.mulf %30, %43 : vector<1x256xf32>
    %45 = arith.subf %26, %44 : vector<1x256xf32>
    %46 = vector.broadcast %43 : vector<1x256xf32> to vector<16x256xf32>
    %47 = arith.mulf %24, %46 : vector<16x256xf32>
    %48 = vector.broadcast %45 : vector<1x256xf32> to vector<16x256xf32>
    %49 = arith.addf %47, %48 : vector<16x256xf32>
    %cst_26 = arith.constant 2.000000e-01 : f32
    %50 = vector.broadcast %cst_26 : f32 to vector<16x256xf32>
    %51 = arith.mulf %50, %49 : vector<16x256xf32>
    %52 = arith.maximumf %49, %51 : vector<16x256xf32>
    %53 = arith.truncf %52 : vector<16x256xf32> to vector<16x256xbf16>
    %c0_27 = arith.constant 0 : index
    %c0_28 = arith.constant 0 : index
    %54 = vector.load %arg10[%c0_27, %c0_28] : memref<256x512xbf16, #tpu.memory_space<vmem>>, vector<256x512xbf16>
    %cst_29 = arith.constant dense<0.000000e+00> : vector<16x512xf32>
    %55 = tpu.matmul %53, %54, %cst_29 {dimension_numbers = #tpu.dot_dimension_numbers<[1], [0], [0], [1], [0, 0, 1, 1], [], []>} : vector<16x256xbf16>, vector<256x512xbf16>, vector<16x512xf32> -> vector<16x512xf32>
    %c0_30 = arith.constant 0 : index
    %c0_31 = arith.constant 0 : index
    %56 = vector.load %arg11[%c0_30, %c0_31] : memref<1x512xf32, #tpu.memory_space<vmem>>, vector<1x512xf32>
    %57 = vector.broadcast %56 : vector<1x512xf32> to vector<16x512xf32>
    %58 = arith.addf %55, %57 : vector<16x512xf32>
    %c0_32 = arith.constant 0 : index
    %c0_33 = arith.constant 0 : index
    %59 = vector.load %arg12[%c0_32, %c0_33] : memref<1x512xf32, #tpu.memory_space<vmem>>, vector<1x512xf32>
    %c0_34 = arith.constant 0 : index
    %c0_35 = arith.constant 0 : index
    %60 = vector.load %arg13[%c0_34, %c0_35] : memref<1x512xf32, #tpu.memory_space<vmem>>, vector<1x512xf32>
    %cst_36 = arith.constant dense<0.000000e+00> : vector<512xf32>
    %61 = vector.multi_reduction <add>, %58, %cst_36 [0] : vector<16x512xf32> to vector<512xf32>
    %62 = vector.shape_cast %61 : vector<512xf32> to vector<1x512xf32>
    %cst_37 = arith.constant 1.600000e+01 : f32
    %63 = vector.broadcast %cst_37 : f32 to vector<1x512xf32>
    %64 = arith.divf %62, %63 : vector<1x512xf32>
    %65 = arith.mulf %58, %58 : vector<16x512xf32>
    %cst_38 = arith.constant dense<0.000000e+00> : vector<512xf32>
    %66 = vector.multi_reduction <add>, %65, %cst_38 [0] : vector<16x512xf32> to vector<512xf32>
    %67 = vector.shape_cast %66 : vector<512xf32> to vector<1x512xf32>
    %cst_39 = arith.constant 1.600000e+01 : f32
    %68 = vector.broadcast %cst_39 : f32 to vector<1x512xf32>
    %69 = arith.divf %67, %68 : vector<1x512xf32>
    %70 = arith.mulf %64, %64 : vector<1x512xf32>
    %71 = arith.subf %69, %70 : vector<1x512xf32>
    %cst_40 = arith.constant 0.000000e+00 : f32
    %72 = vector.broadcast %cst_40 : f32 to vector<1x512xf32>
    %73 = arith.maximumf %71, %72 : vector<1x512xf32>
    %cst_41 = arith.constant 8.000000e-01 : f32
    %74 = vector.broadcast %cst_41 : f32 to vector<1x512xf32>
    %75 = arith.addf %73, %74 : vector<1x512xf32>
    %76 = math.rsqrt %75 : vector<1x512xf32>
    %77 = arith.mulf %59, %76 : vector<1x512xf32>
    %78 = arith.mulf %64, %77 : vector<1x512xf32>
    %79 = arith.subf %60, %78 : vector<1x512xf32>
    %80 = vector.broadcast %77 : vector<1x512xf32> to vector<16x512xf32>
    %81 = arith.mulf %58, %80 : vector<16x512xf32>
    %82 = vector.broadcast %79 : vector<1x512xf32> to vector<16x512xf32>
    %83 = arith.addf %81, %82 : vector<16x512xf32>
    %cst_42 = arith.constant 2.000000e-01 : f32
    %84 = vector.broadcast %cst_42 : f32 to vector<16x512xf32>
    %85 = arith.mulf %84, %83 : vector<16x512xf32>
    %86 = arith.maximumf %83, %85 : vector<16x512xf32>
    %87 = arith.truncf %86 : vector<16x512xf32> to vector<16x512xbf16>
    %c0_43 = arith.constant 0 : index
    %c0_44 = arith.constant 0 : index
    %88 = vector.load %arg14[%c0_43, %c0_44] : memref<512x1024xbf16, #tpu.memory_space<vmem>>, vector<512x1024xbf16>
    %cst_45 = arith.constant dense<0.000000e+00> : vector<16x1024xf32>
    %89 = tpu.matmul %87, %88, %cst_45 {dimension_numbers = #tpu.dot_dimension_numbers<[1], [0], [0], [1], [0, 0, 1, 1], [], []>} : vector<16x512xbf16>, vector<512x1024xbf16>, vector<16x1024xf32> -> vector<16x1024xf32>
    %c0_46 = arith.constant 0 : index
    %c0_47 = arith.constant 0 : index
    %90 = vector.load %arg15[%c0_46, %c0_47] : memref<1x1024xf32, #tpu.memory_space<vmem>>, vector<1x1024xf32>
    %91 = vector.broadcast %90 : vector<1x1024xf32> to vector<16x1024xf32>
    %92 = arith.addf %89, %91 : vector<16x1024xf32>
    %c0_48 = arith.constant 0 : index
    %c0_49 = arith.constant 0 : index
    %93 = vector.load %arg16[%c0_48, %c0_49] : memref<1x1024xf32, #tpu.memory_space<vmem>>, vector<1x1024xf32>
    %c0_50 = arith.constant 0 : index
    %c0_51 = arith.constant 0 : index
    %94 = vector.load %arg17[%c0_50, %c0_51] : memref<1x1024xf32, #tpu.memory_space<vmem>>, vector<1x1024xf32>
    %cst_52 = arith.constant dense<0.000000e+00> : vector<1024xf32>
    %95 = vector.multi_reduction <add>, %92, %cst_52 [0] : vector<16x1024xf32> to vector<1024xf32>
    %96 = vector.shape_cast %95 : vector<1024xf32> to vector<1x1024xf32>
    %cst_53 = arith.constant 1.600000e+01 : f32
    %97 = vector.broadcast %cst_53 : f32 to vector<1x1024xf32>
    %98 = arith.divf %96, %97 : vector<1x1024xf32>
    %99 = arith.mulf %92, %92 : vector<16x1024xf32>
    %cst_54 = arith.constant dense<0.000000e+00> : vector<1024xf32>
    %100 = vector.multi_reduction <add>, %99, %cst_54 [0] : vector<16x1024xf32> to vector<1024xf32>
    %101 = vector.shape_cast %100 : vector<1024xf32> to vector<1x1024xf32>
    %cst_55 = arith.constant 1.600000e+01 : f32
    %102 = vector.broadcast %cst_55 : f32 to vector<1x1024xf32>
    %103 = arith.divf %101, %102 : vector<1x1024xf32>
    %104 = arith.mulf %98, %98 : vector<1x1024xf32>
    %105 = arith.subf %103, %104 : vector<1x1024xf32>
    %cst_56 = arith.constant 0.000000e+00 : f32
    %106 = vector.broadcast %cst_56 : f32 to vector<1x1024xf32>
    %107 = arith.maximumf %105, %106 : vector<1x1024xf32>
    %cst_57 = arith.constant 8.000000e-01 : f32
    %108 = vector.broadcast %cst_57 : f32 to vector<1x1024xf32>
    %109 = arith.addf %107, %108 : vector<1x1024xf32>
    %110 = math.rsqrt %109 : vector<1x1024xf32>
    %111 = arith.mulf %93, %110 : vector<1x1024xf32>
    %112 = arith.mulf %98, %111 : vector<1x1024xf32>
    %113 = arith.subf %94, %112 : vector<1x1024xf32>
    %114 = vector.broadcast %111 : vector<1x1024xf32> to vector<16x1024xf32>
    %115 = arith.mulf %92, %114 : vector<16x1024xf32>
    %116 = vector.broadcast %113 : vector<1x1024xf32> to vector<16x1024xf32>
    %117 = arith.addf %115, %116 : vector<16x1024xf32>
    %cst_58 = arith.constant 2.000000e-01 : f32
    %118 = vector.broadcast %cst_58 : f32 to vector<16x1024xf32>
    %119 = arith.mulf %118, %117 : vector<16x1024xf32>
    %120 = arith.maximumf %117, %119 : vector<16x1024xf32>
    %121 = arith.truncf %120 : vector<16x1024xf32> to vector<16x1024xbf16>
    %c0_59 = arith.constant 0 : index
    %c0_60 = arith.constant 0 : index
    %122 = vector.load %arg18[%c0_59, %c0_60] : memref<16x1024xbf16, #tpu.memory_space<vmem>>, vector<16x1024xbf16>
    tpu.vector_store %arg18[%c0_59, %c0_60], %121 {strides = array<i32>} : memref<16x1024xbf16, #tpu.memory_space<vmem>>, vector<16x1024xbf16>,
    return
  }
  func.func @transform_0(%arg0: i32) -> (i32, i32) {
    %c0_i32 = arith.constant 0 : i32
    %c0_i32_0 = arith.constant 0 : i32
    %c0_i32_1 = arith.constant 0 : i32
    return %c0_i32, %c0_i32_0 : i32, i32
  }
  func.func @transform_1(%arg0: i32) -> (i32, i32) {
    %c0_i32 = arith.constant 0 : i32
    %c0_i32_0 = arith.constant 0 : i32
    %c0_i32_1 = arith.constant 0 : i32
    return %c0_i32, %c0_i32_0 : i32, i32
  }
  func.func @transform_2(%arg0: i32) -> (i32, i32) {
    %c0_i32 = arith.constant 0 : i32
    %c0_i32_0 = arith.constant 0 : i32
    %c0_i32_1 = arith.constant 0 : i32
    return %c0_i32, %c0_i32_0 : i32, i32
  }
  func.func @transform_3(%arg0: i32) -> (i32, i32) {
    %c0_i32 = arith.constant 0 : i32
    %c0_i32_0 = arith.constant 0 : i32
    %c0_i32_1 = arith.constant 0 : i32
    return %c0_i32, %c0_i32_0 : i32, i32
  }
  func.func @transform_4(%arg0: i32) -> (i32, i32) {
    %c0_i32 = arith.constant 0 : i32
    %c0_i32_0 = arith.constant 0 : i32
    %c0_i32_1 = arith.constant 0 : i32
    return %c0_i32, %c0_i32_0 : i32, i32
  }
  func.func @transform_5(%arg0: i32) -> (i32, i32) {
    %c0_i32 = arith.constant 0 : i32
    %c0_i32_0 = arith.constant 0 : i32
    %c0_i32_1 = arith.constant 0 : i32
    return %c0_i32, %c0_i32_0 : i32, i32
  }
  func.func @transform_6(%arg0: i32) -> (i32, i32) {
    %c0_i32 = arith.constant 0 : i32
    %c0_i32_0 = arith.constant 0 : i32
    %c0_i32_1 = arith.constant 0 : i32
    return %c0_i32, %c0_i32_0 : i32, i32
  }
  func.func @transform_7(%arg0: i32) -> (i32, i32) {
    %c0_i32 = arith.constant 0 : i32
    %c0_i32_0 = arith.constant 0 : i32
    %c0_i32_1 = arith.constant 0 : i32
    return %c0_i32, %c0_i32_0 : i32, i32
  }
  func.func @transform_8(%arg0: i32) -> (i32, i32) {
    %c0_i32 = arith.constant 0 : i32
    %c0_i32_0 = arith.constant 0 : i32
    %c0_i32_1 = arith.constant 0 : i32
    return %c0_i32, %c0_i32_0 : i32, i32
  }
  func.func @transform_9(%arg0: i32) -> (i32, i32) {
    %c0_i32 = arith.constant 0 : i32
    %c0_i32_0 = arith.constant 0 : i32
    %c0_i32_1 = arith.constant 0 : i32
    return %c0_i32, %c0_i32_0 : i32, i32
  }
  func.func @transform_10(%arg0: i32) -> (i32, i32) {
    %c0_i32 = arith.constant 0 : i32
    %c0_i32_0 = arith.constant 0 : i32
    %c0_i32_1 = arith.constant 0 : i32
    return %c0_i32, %c0_i32_0 : i32, i32
  }
  func.func @transform_11(%arg0: i32) -> (i32, i32) {
    %c0_i32 = arith.constant 0 : i32
    %c0_i32_0 = arith.constant 0 : i32
    %c0_i32_1 = arith.constant 0 : i32
    return %c0_i32, %c0_i32_0 : i32, i32
  }
  func.func @transform_12(%arg0: i32) -> (i32, i32) {
    %c0_i32 = arith.constant 0 : i32
    %c0_i32_0 = arith.constant 0 : i32
    %c0_i32_1 = arith.constant 0 : i32
    return %c0_i32, %c0_i32_0 : i32, i32
  }
  func.func @transform_13(%arg0: i32) -> (i32, i32) {
    %c0_i32 = arith.constant 0 : i32
    %c0_i32_0 = arith.constant 0 : i32
    %c0_i32_1 = arith.constant 0 : i32
    return %c0_i32, %c0_i32_0 : i32, i32
  }
  func.func @transform_14(%arg0: i32) -> (i32, i32) {
    %c0_i32 = arith.constant 0 : i32
    %c0_i32_0 = arith.constant 0 : i32
    %c0_i32_1 = arith.constant 0 : i32
    return %c0_i32, %c0_i32_0 : i32, i32
  }
  func.func @transform_15(%arg0: i32) -> (i32, i32) {
    %c0_i32 = arith.constant 0 : i32
    %c0_i32_0 = arith.constant 0 : i32
    %c0_i32_1 = arith.constant 0 : i32
    return %c0_i32, %c0_i32_0 : i32, i32
  }
  func.func @transform_16(%arg0: i32) -> (i32, i32) {
    %c0_i32 = arith.constant 0 : i32
    %c0_i32_0 = arith.constant 0 : i32
    %c0_i32_1 = arith.constant 0 : i32
    return %c0_i32, %c0_i32_0 : i32, i32
  }
  func.func @transform_17(%arg0: i32) -> (i32, i32) {
    %c0_i32 = arith.constant 0 : i32
    %c0_i32_0 = arith.constant 0 : i32
    %c0_i32_1 = arith.constant 0 : i32
    return %c0_i32, %c0_i32_0 : i32, i32
  }
}

module attributes {stable_mosaic.version = 11 : i64} {
  func.func @_head_kernel(%arg0: i32, %arg1: memref<16x1024xbf16, #tpu.memory_space<vmem>>, %arg2: memref<1024x256xbf16, #tpu.memory_space<vmem>>, %arg3: memref<1x256xf32, #tpu.memory_space<vmem>>, %arg4: memref<16x256xbf16, #tpu.memory_space<vmem>>) attributes {dimension_semantics = [#tpu.dimension_semantics<parallel>], iteration_bounds = array<i64: 1>, scalar_prefetch = 0 : i64, scratch_operands = 0 : i64, tpu.core_type = #tpu.core_type<tc>, window_params = [{pipeline_mode = #tpu.pipeline_mode<synchronous>, transform_indices = @transform_0, window_bounds = array<i64: 16, 1024>}, {transform_indices = @transform_1, window_bounds = array<i64: 1024, 256>}, {transform_indices = @transform_2, window_bounds = array<i64: 1, 256>}, {transform_indices = @transform_3, window_bounds = array<i64: 16, 256>}]} {
    %c0 = arith.constant 0 : index
    %c0_0 = arith.constant 0 : index
    %0 = vector.load %arg1[%c0, %c0_0] : memref<16x1024xbf16, #tpu.memory_space<vmem>>, vector<16x1024xbf16>
    %c0_1 = arith.constant 0 : index
    %c0_2 = arith.constant 0 : index
    %1 = vector.load %arg2[%c0_1, %c0_2] : memref<1024x256xbf16, #tpu.memory_space<vmem>>, vector<1024x256xbf16>
    %cst = arith.constant dense<0.000000e+00> : vector<16x256xf32>
    %2 = tpu.matmul %0, %1, %cst {dimension_numbers = #tpu.dot_dimension_numbers<[1], [0], [0], [1], [0, 0, 1, 1], [], []>} : vector<16x1024xbf16>, vector<1024x256xbf16>, vector<16x256xf32> -> vector<16x256xf32>
    %c0_3 = arith.constant 0 : index
    %c0_4 = arith.constant 0 : index
    %3 = vector.load %arg3[%c0_3, %c0_4] : memref<1x256xf32, #tpu.memory_space<vmem>>, vector<1x256xf32>
    %4 = vector.broadcast %3 : vector<1x256xf32> to vector<16x256xf32>
    %5 = arith.addf %2, %4 : vector<16x256xf32>
    %6 = math.tanh %5 : vector<16x256xf32>
    %7 = arith.truncf %6 : vector<16x256xf32> to vector<16x256xbf16>
    %c0_5 = arith.constant 0 : index
    %c0_6 = arith.constant 0 : index
    %8 = vector.load %arg4[%c0_5, %c0_6] : memref<16x256xbf16, #tpu.memory_space<vmem>>, vector<16x256xbf16>
    tpu.vector_store %arg4[%c0_5, %c0_6], %7 {strides = array<i32>} : memref<16x256xbf16, #tpu.memory_space<vmem>>, vector<16x256xbf16>,
    return
  }
  func.func @transform_0(%arg0: i32) -> (i32, i32) {
    %c0_i32 = arith.constant 0 : i32
    %c0_i32_0 = arith.constant 0 : i32
    %c0_i32_1 = arith.constant 0 : i32
    return %c0_i32, %c0_i32_0 : i32, i32
  }
  func.func @transform_1(%arg0: i32) -> (i32, i32) {
    %c0_i32 = arith.constant 0 : i32
    %c0_i32_0 = arith.constant 0 : i32
    return %c0_i32, %arg0 : i32, i32
  }
  func.func @transform_2(%arg0: i32) -> (i32, i32) {
    %c0_i32 = arith.constant 0 : i32
    %c0_i32_0 = arith.constant 0 : i32
    return %c0_i32, %arg0 : i32, i32
  }
  func.func @transform_3(%arg0: i32) -> (i32, i32) {
    %c0_i32 = arith.constant 0 : i32
    %c0_i32_0 = arith.constant 0 : i32
    return %c0_i32, %arg0 : i32, i32
  }
}

</mosaic_0001>

<llo_original>
// kernel: generator_forward.3
$region0: #{generator_forward.3}
  #allocation0 [shape = 'u32[]', space=smem, size = 0x4, offset = 0x4, fixed_abs, tag = 'smem constant byte address 0x4 - core index']
  #allocation1 [shape = 'u32[144,128]{1,0:T(1,128)}', space=vmem, size = 0x12000, scoped, tag = 'internal scratch']
  %s0 = inlined_call_operand.vmem [shape: bf16[16,1024], index: 0, kind: input, shape index: {}]
  %s1 = inlined_call_operand.vmem [shape: bf16[1024,256], index: 1, kind: input, shape index: {}]
  %s2 = inlined_call_operand.vmem [shape: f32[1,256], index: 2, kind: input, shape index: {}]
  %s3 = inlined_call_operand.vmem [shape: bf16[16,256], index: 3, kind: output, shape index: {}]
  %s4 = sld [smem:[#allocation0]]
  $region22: #{generator_forward.3} parent=0
    _
  %s6 = ssub.s32 1, %s4
  %s7 = scalar_select 0, %s6, %s4
  // Predicated region
  $region2: #{generator_forward.3} parent=0 // pred_check
    _
  $region3: #{generator_forward.3} parent=0 // pred_check_branch
    %9 = sbr.rel (0) target = $region5
  $region4: #{generator_forward.3} parent=0 // pred_region
    _
  $region5: #{generator_forward.3} parent=0 // pred_fallthru
    _
  // Predicated region
  $region6: #{generator_forward.3} parent=0 // pred_check
    _
  $region7: #{generator_forward.3} parent=0 // pred_check_branch
    %11 = sbr.rel (0) target = $region9
  $region8: #{generator_forward.3} parent=0 // pred_region
    _
  $region9: #{generator_forward.3} parent=0 // pred_fallthru
    _
  // Predicated region
  $region10: #{generator_forward.3} parent=0 // pred_check
    _
  $region11: #{generator_forward.3} parent=0 // pred_check_branch
    %13 = sbr.rel (0) target = $region13
  $region12: #{generator_forward.3} parent=0 // pred_region
    _
  $region13: #{generator_forward.3} parent=0 // pred_fallthru
    _
  %v14 = vld [vmem:[%s0] sm:$0xff]
  %v15 = vld [vmem:[%s0 + $0x8] sm:$0xff]
  %v16 = vld [vmem:[%s0 + $0x10] sm:$0xff]
  %v17 = vld [vmem:[%s0 + $0x18] sm:$0xff]
  %v18 = vld [vmem:[%s0 + $0x20] sm:$0xff]
  %v19 = vld [vmem:[%s0 + $0x28] sm:$0xff]
  %v20 = vld [vmem:[%s0 + $0x30] sm:$0xff]
  %v21 = vld [vmem:[%s0 + $0x38] sm:$0xff]
  %v22 = vld [vmem:[%s1] sm:$0xff]
  %v23 = vld [vmem:[%s1 + $0x8] sm:$0xff]
  %v24 = vld [vmem:[%s1 + $0x10] sm:$0xff]
  %v25 = vld [vmem:[%s1 + $0x18] sm:$0xff]
  %v26 = vld [vmem:[%s1 + $0x20] sm:$0xff]
  %v27 = vld [vmem:[%s1 + $0x28] sm:$0xff]
  %v28 = vld [vmem:[%s1 + $0x30] sm:$0xff]
  %v29 = vld [vmem:[%s1 + $0x38] sm:$0xff]
  %v30 = vld [vmem:[%s1 + $0x40] sm:$0xff]
  %v31 = vld [vmem:[%s1 + $0x48] sm:$0xff]
  %v32 = vld [vmem:[%s1 + $0x50] sm:$0xff]
  %v33 = vld [vmem:[%s1 + $0x58] sm:$0xff]
  %v34 = vld [vmem:[%s1 + $0x60] sm:$0xff]
  %v35 = vld [vmem:[%s1 + $0x68] sm:$0xff]
  %v36 = vld [vmem:[%s1 + $0x70] sm:$0xff]
  %v37 = vld [vmem:[%s1 + $0x78] sm:$0xff]
  %v38 = vld [vmem:[%s1 + $0x80] sm:$0xff]
  %v39 = vld [vmem:[%s1 + $0x88] sm:$0xff]
  %v40 = vld [vmem:[%s1 + $0x90] sm:$0xff]
  %v41 = vld [vmem:[%s1 + $0x98] sm:$0xff]
  %v42 = vld [vmem:[%s1 + $0xa0] sm:$0xff]
  %v43 = vld [vmem:[%s1 + $0xa8] sm:$0xff]
  %v44 = vld [vmem:[%s1 + $0xb0] sm:$0xff]
  %v45 = vld [vmem:[%s1 + $0xb8] sm:$0xff]
  %v46 = vld [vmem:[%s1 + $0xc0] sm:$0xff]
  %v47 = vld [vmem:[%s1 + $0xc8] sm:$0xff]
  %v48 = vld [vmem:[%s1 + $0xd0] sm:$0xff]
  %v49 = vld [vmem:[%s1 + $0xd8] sm:$0xff]
  %v50 = vld [vmem:[%s1 + $0xe0] sm:$0xff]
  %v51 = vld [vmem:[%s1 + $0xe8] sm:$0xff]
  %v52 = vld [vmem:[%s1 + $0xf0] sm:$0xff]
  %v53 = vld [vmem:[%s1 + $0xf8] sm:$0xff]
  %v54 = vld [vmem:[%s1 + $0x100] sm:$0xff]
  %v55 = vld [vmem:[%s1 + $0x108] sm:$0xff]
  %v56 = vld [vmem:[%s1 + $0x110] sm:$0xff]
  %v57 = vld [vmem:[%s1 + $0x118] sm:$0xff]
  %v58 = vld [vmem:[%s1 + $0x120] sm:$0xff]
  %v59 = vld [vmem:[%s1 + $0x128] sm:$0xff]
  %v60 = vld [vmem:[%s1 + $0x130] sm:$0xff]
  %v61 = vld [vmem:[%s1 + $0x138] sm:$0xff]
  %v62 = vld [vmem:[%s1 + $0x140] sm:$0xff]
  %v63 = vld [vmem:[%s1 + $0x148] sm:$0xff]
  %v64 = vld [vmem:[%s1 + $0x150] sm:$0xff]
  %v65 = vld [vmem:[%s1 + $0x158] sm:$0xff]
  %v66 = vld [vmem:[%s1 + $0x160] sm:$0xff]
  %v67 = vld [vmem:[%s1 + $0x168] sm:$0xff]
  %v68 = vld [vmem:[%s1 + $0x170] sm:$0xff]
  %v69 = vld [vmem:[%s1 + $0x178] sm:$0xff]
  %v70 = vld [vmem:[%s1 + $0x180] sm:$0xff]
  %v71 = vld [vmem:[%s1 + $0x188] sm:$0xff]
  %v72 = vld [vmem:[%s1 + $0x190] sm:$0xff]
  %v73 = vld [vmem:[%s1 + $0x198] sm:$0xff]
  %v74 = vld [vmem:[%s1 + $0x1a0] sm:$0xff]
  %v75 = vld [vmem:[%s1 + $0x1a8] sm:$0xff]
  %v76 = vld [vmem:[%s1 + $0x1b0] sm:$0xff]
  %v77 = vld [vmem:[%s1 + $0x1b8] sm:$0xff]
  %v78 = vld [vmem:[%s1 + $0x1c0] sm:$0xff]
  %v79 = vld [vmem:[%s1 + $0x1c8] sm:$0xff]
  %v80 = vld [vmem:[%s1 + $0x1d0] sm:$0xff]
  %v81 = vld [vmem:[%s1 + $0x1d8] sm:$0xff]
  %v82 = vld [vmem:[%s1 + $0x1e0] sm:$0xff]
  %v83 = vld [vmem:[%s1 + $0x1e8] sm:$0xff]
  %v84 = vld [vmem:[%s1 + $0x1f0] sm:$0xff]
  %v85 = vld [vmem:[%s1 + $0x1f8] sm:$0xff]
  %v86 = vld [vmem:[%s1 + $0x200] sm:$0xff]
  %v87 = vld [vmem:[%s1 + $0x208] sm:$0xff]
  %v88 = vld [vmem:[%s1 + $0x210] sm:$0xff]
  %v89 = vld [vmem:[%s1 + $0x218] sm:$0xff]
  %v90 = vld [vmem:[%s1 + $0x220] sm:$0xff]
  %v91 = vld [vmem:[%s1 + $0x228] sm:$0xff]
  %v92 = vld [vmem:[%s1 + $0x230] sm:$0xff]
  %v93 = vld [vmem:[%s1 + $0x238] sm:$0xff]
  %v94 = vld [vmem:[%s1 + $0x240] sm:$0xff]
  %v95 = vld [vmem:[%s1 + $0x248] sm:$0xff]
  %v96 = vld [vmem:[%s1 + $0x250] sm:$0xff]
  %v97 = vld [vmem:[%s1 + $0x258] sm:$0xff]
  %v98 = vld [vmem:[%s1 + $0x260] sm:$0xff]
  %v99 = vld [vmem:[%s1 + $0x268] sm:$0xff]
  %v100 = vld [vmem:[%s1 + $0x270] sm:$0xff]
  %v101 = vld [vmem:[%s1 + $0x278] sm:$0xff]
  %v102 = vld [vmem:[%s1 + $0x280] sm:$0xff]
  %v103 = vld [vmem:[%s1 + $0x288] sm:$0xff]
  %v104 = vld [vmem:[%s1 + $0x290] sm:$0xff]
  %v105 = vld [vmem:[%s1 + $0x298] sm:$0xff]
  %v106 = vld [vmem:[%s1 + $0x2a0] sm:$0xff]
  %v107 = vld [vmem:[%s1 + $0x2a8] sm:$0xff]
  %v108 = vld [vmem:[%s1 + $0x2b0] sm:$0xff]
  %v109 = vld [vmem:[%s1 + $0x2b8] sm:$0xff]
  %v110 = vld [vmem:[%s1 + $0x2c0] sm:$0xff]
  %v111 = vld [vmem:[%s1 + $0x2c8] sm:$0xff]
  %v112 = vld [vmem:[%s1 + $0x2d0] sm:$0xff]
  %v113 = vld [vmem:[%s1 + $0x2d8] sm:$0xff]
  %v114 = vld [vmem:[%s1 + $0x2e0] sm:$0xff]
  %v115 = vld [vmem:[%s1 + $0x2e8] sm:$0xff]
  %v116 = vld [vmem:[%s1 + $0x2f0] sm:$0xff]
  %v117 = vld [vmem:[%s1 + $0x2f8] sm:$0xff]
  %v118 = vld [vmem:[%s1 + $0x300] sm:$0xff]
  %v119 = vld [vmem:[%s1 + $0x308] sm:$0xff]
  %v120 = vld [vmem:[%s1 + $0x310] sm:$0xff]
  %v121 = vld [vmem:[%s1 + $0x318] sm:$0xff]
  %v122 = vld [vmem:[%s1 + $0x320] sm:$0xff]
  %v123 = vld [vmem:[%s1 + $0x328] sm:$0xff]
  %v124 = vld [vmem:[%s1 + $0x330] sm:$0xff]
  %v125 = vld [vmem:[%s1 + $0x338] sm:$0xff]
  %v126 = vld [vmem:[%s1 + $0x340] sm:$0xff]
  %v127 = vld [vmem:[%s1 + $0x348] sm:$0xff]
  %v128 = vld [vmem:[%s1 + $0x350] sm:$0xff]
  %v129 = vld [vmem:[%s1 + $0x358] sm:$0xff]
  %v130 = vld [vmem:[%s1 + $0x360] sm:$0xff]
  %v131 = vld [vmem:[%s1 + $0x368] sm:$0xff]
  %v132 = vld [vmem:[%s1 + $0x370] sm:$0xff]
  %v133 = vld [vmem:[%s1 + $0x378] sm:$0xff]
  %v134 = vld [vmem:[%s1 + $0x380] sm:$0xff]
  %v135 = vld [vmem:[%s1 + $0x388] sm:$0xff]
  %v136 = vld [vmem:[%s1 + $0x390] sm:$0xff]
  %v137 = vld [vmem:[%s1 + $0x398] sm:$0xff]
  %v138 = vld [vmem:[%s1 + $0x3a0] sm:$0xff]
  %v139 = vld [vmem:[%s1 + $0x3a8] sm:$0xff]
  %v140 = vld [vmem:[%s1 + $0x3b0] sm:$0xff]
  %v141 = vld [vmem:[%s1 + $0x3b8] sm:$0xff]
  %v142 = vld [vmem:[%s1 + $0x3c0] sm:$0xff]
  %v143 = vld [vmem:[%s1 + $0x3c8] sm:$0xff]
  %v144 = vld [vmem:[%s1 + $0x3d0] sm:$0xff]
  %v145 = vld [vmem:[%s1 + $0x3d8] sm:$0xff]
  %v146 = vld [vmem:[%s1 + $0x3e0] sm:$0xff]
  %v147 = vld [vmem:[%s1 + $0x3e8] sm:$0xff]
  %v148 = vld [vmem:[%s1 + $0x3f0] sm:$0xff]
  %v149 = vld [vmem:[%s1 + $0x3f8] sm:$0xff]
  %v150 = vld [vmem:[%s2] sm:$0x3]
  %v152 = vlaneseq
  %v153 = vshrl.u32 %v152, 7
  %v154 = vsub.s32 0, %v153
  %v155 = vrot.slane %v150, %v154
  %v156 = vlaneseq
  %v157 = vshrl.u32 %v156, 7
  %v158 = vsub.s32 1, %v157
  %v159 = vrot.slane %v150, %v158
  %v170 = vunpack.c.l.b16 %v14
  %v171 = vunpack.c.h.b16 %v14
  %v172 = vunpack.c.l.b16 %v15
  %v173 = vunpack.c.h.b16 %v15
  %v174 = vunpack.c.l.b16 %v16
  %v175 = vunpack.c.h.b16 %v16
  %v176 = vunpack.c.l.b16 %v17
  %v177 = vunpack.c.h.b16 %v17
  %v178 = vunpack.c.l.b16 %v18
  %v179 = vunpack.c.h.b16 %v18
  %v180 = vunpack.c.l.b16 %v19
  %v181 = vunpack.c.h.b16 %v19
  %v182 = vunpack.c.l.b16 %v20
  %v183 = vunpack.c.h.b16 %v20
  %v184 = vunpack.c.l.b16 %v21
  %v185 = vunpack.c.h.b16 %v21
  %v186 = vpack.c.b16 %v178, %v170
  %v187 = vpack.c.b16 %v179, %v171
  %v188 = vpack.c.b16 %v180, %v172
  %v189 = vpack.c.b16 %v181, %v173
  %v190 = vpack.c.b16 %v182, %v174
  %v191 = vpack.c.b16 %v183, %v175
  %v192 = vpack.c.b16 %v184, %v176
  %v193 = vpack.c.b16 %v185, %v177
  %v330 = vunpack.c.l.b16 %v22
  %v331 = vunpack.c.h.b16 %v22
  %v332 = vunpack.c.l.b16 %v23
  %v333 = vunpack.c.h.b16 %v23
  %v334 = vunpack.c.l.b16 %v24
  %v335 = vunpack.c.h.b16 %v24
  %v336 = vunpack.c.l.b16 %v25
  %v337 = vunpack.c.h.b16 %v25
  %v338 = vunpack.c.l.b16 %v26
  %v339 = vunpack.c.h.b16 %v26
  %v340 = vunpack.c.l.b16 %v27
  %v341 = vunpack.c.h.b16 %v27
  %v342 = vunpack.c.l.b16 %v28
  %v343 = vunpack.c.h.b16 %v28
  %v344 = vunpack.c.l.b16 %v29
  %v345 = vunpack.c.h.b16 %v29
  %v346 = vunpack.c.l.b16 %v30
  %v347 = vunpack.c.h.b16 %v30
  %v348 = vunpack.c.l.b16 %v31
  %v349 = vunpack.c.h.b16 %v31
  %v350 = vunpack.c.l.b16 %v32
  %v351 = vunpack.c.h.b16 %v32
  %v352 = vunpack.c.l.b16 %v33
  %v353 = vunpack.c.h.b16 %v33
  %v354 = vunpack.c.l.b16 %v34
  %v355 = vunpack.c.h.b16 %v34
  %v356 = vunpack.c.l.b16 %v35
  %v357 = vunpack.c.h.b16 %v35
  %v358 = vunpack.c.l.b16 %v36
  %v359 = vunpack.c.h.b16 %v36
  %v360 = vunpack.c.l.b16 %v37
  %v361 = vunpack.c.h.b16 %v37
  %v362 = vunpack.c.l.b16 %v38
  %v363 = vunpack.c.h.b16 %v38
  %v364 = vunpack.c.l.b16 %v39
  %v365 = vunpack.c.h.b16 %v39
  %v366 = vunpack.c.l.b16 %v40
  %v367 = vunpack.c.h.b16 %v40
  %v368 = vunpack.c.l.b16 %v41
  %v369 = vunpack.c.h.b16 %v41
  %v370 = vunpack.c.l.b16 %v42
  %v371 = vunpack.c.h.b16 %v42
  %v372 = vunpack.c.l.b16 %v43
  %v373 = vunpack.c.h.b16 %v43
  %v374 = vunpack.c.l.b16 %v44
  %v375 = vunpack.c.h.b16 %v44
  %v376 = vunpack.c.l.b16 %v45
  %v377 = vunpack.c.h.b16 %v45
  %v378 = vunpack.c.l.b16 %v46
  %v379 = vunpack.c.h.b16 %v46
  %v380 = vunpack.c.l.b16 %v47
  %v381 = vunpack.c.h.b16 %v47
  %v382 = vunpack.c.l.b16 %v48
  %v383 = vunpack.c.h.b16 %v48
  %v384 = vunpack.c.l.b16 %v49
  %v385 = vunpack.c.h.b16 %v49
  %v386 = vunpack.c.l.b16 %v50
  %v387 = vunpack.c.h.b16 %v50
  %v388 = vunpack.c.l.b16 %v51
  %v389 = vunpack.c.h.b16 %v51
  %v390 = vunpack.c.l.b16 %v52
  %v391 = vunpack.c.h.b16 %v52
  %v392 = vunpack.c.l.b16 %v53
  %v393 = vunpack.c.h.b16 %v53
  %v394 = vunpack.c.l.b16 %v54
  %v395 = vunpack.c.h.b16 %v54
  %v396 = vunpack.c.l.b16 %v55
  %v397 = vunpack.c.h.b16 %v55
  %v398 = vunpack.c.l.b16 %v56
  %v399 = vunpack.c.h.b16 %v56
  %v400 = vunpack.c.l.b16 %v57
  %v401 = vunpack.c.h.b16 %v57
  %v402 = vunpack.c.l.b16 %v58
  %v403 = vunpack.c.h.b16 %v58
  %v404 = vunpack.c.l.b16 %v59
  %v405 = vunpack.c.h.b16 %v59
  %v406 = vunpack.c.l.b16 %v60
  %v407 = vunpack.c.h.b16 %v60
  %v408 = vunpack.c.l.b16 %v61
  %v409 = vunpack.c.h.b16 %v61
  %v410 = vunpack.c.l.b16 %v62
  %v411 = vunpack.c.h.b16 %v62
  %v412 = vunpack.c.l.b16 %v63
  %v413 = vunpack.c.h.b16 %v63
  %v414 = vunpack.c.l.b16 %v64
  %v415 = vunpack.c.h.b16 %v64
  %v416 = vunpack.c.l.b16 %v65
  %v417 = vunpack.c.h.b16 %v65
  %v418 = vunpack.c.l.b16 %v66
  %v419 = vunpack.c.h.b16 %v66
  %v420 = vunpack.c.l.b16 %v67
  %v421 = vunpack.c.h.b16 %v67
  %v422 = vunpack.c.l.b16 %v68
  %v423 = vunpack.c.h.b16 %v68
  %v424 = vunpack.c.l.b16 %v69
  %v425 = vunpack.c.h.b16 %v69
  %v426 = vunpack.c.l.b16 %v70
  %v427 = vunpack.c.h.b16 %v70
  %v428 = vunpack.c.l.b16 %v71
  %v429 = vunpack.c.h.b16 %v71
  %v430 = vunpack.c.l.b16 %v72
  %v431 = vunpack.c.h.b16 %v72
  %v432 = vunpack.c.l.b16 %v73
  %v433 = vunpack.c.h.b16 %v73
  %v434 = vunpack.c.l.b16 %v74
  %v435 = vunpack.c.h.b16 %v74
  %v436 = vunpack.c.l.b16 %v75
  %v437 = vunpack.c.h.b16 %v75
  %v438 = vunpack.c.l.b16 %v76
  %v439 = vunpack.c.h.b16 %v76
  %v440 = vunpack.c.l.b16 %v77
  %v441 = vunpack.c.h.b16 %v77
  %v442 = vunpack.c.l.b16 %v78
  %v443 = vunpack.c.h.b16 %v78
  %v444 = vunpack.c.l.b16 %v79
  %v445 = vunpack.c.h.b16 %v79
  %v446 = vunpack.c.l.b16 %v80
  %v447 = vunpack.c.h.b16 %v80
  %v448 = vunpack.c.l.b16 %v81
  %v449 = vunpack.c.h.b16 %v81
  %v450 = vunpack.c.l.b16 %v82
  %v451 = vunpack.c.h.b16 %v82
  %v452 = vunpack.c.l.b16 %v83
  %v453 = vunpack.c.h.b16 %v83
  %v454 = vunpack.c.l.b16 %v84
  %v455 = vunpack.c.h.b16 %v84
  %v456 = vunpack.c.l.b16 %v85
  %v457 = vunpack.c.h.b16 %v85
  %v458 = vunpack.c.l.b16 %v86
  %v459 = vunpack.c.h.b16 %v86
  %v460 = vunpack.c.l.b16 %v87
  %v461 = vunpack.c.h.b16 %v87
  %v462 = vunpack.c.l.b16 %v88
  %v463 = vunpack.c.h.b16 %v88
  %v464 = vunpack.c.l.b16 %v89
  %v465 = vunpack.c.h.b16 %v89
  %v466 = vunpack.c.l.b16 %v90
  %v467 = vunpack.c.h.b16 %v90
  %v468 = vunpack.c.l.b16 %v91
  %v469 = vunpack.c.h.b16 %v91
  %v470 = vunpack.c.l.b16 %v92
  %v471 = vunpack.c.h.b16 %v92
  %v472 = vunpack.c.l.b16 %v93
  %v473 = vunpack.c.h.b16 %v93
  %v474 = vunpack.c.l.b16 %v94
  %v475 = vunpack.c.h.b16 %v94
  %v476 = vunpack.c.l.b16 %v95
  %v477 = vunpack.c.h.b16 %v95
  %v478 = vunpack.c.l.b16 %v96
  %v479 = vunpack.c.h.b16 %v96
  %v480 = vunpack.c.l.b16 %v97
  %v481 = vunpack.c.h.b16 %v97
  %v482 = vunpack.c.l.b16 %v98
  %v483 = vunpack.c.h.b16 %v98
  %v484 = vunpack.c.l.b16 %v99
  %v485 = vunpack.c.h.b16 %v99
  %v486 = vunpack.c.l.b16 %v100
  %v487 = vunpack.c.h.b16 %v100
  %v488 = vunpack.c.l.b16 %v101
  %v489 = vunpack.c.h.b16 %v101
  %v490 = vunpack.c.l.b16 %v102
  %v491 = vunpack.c.h.b16 %v102
  %v492 = vunpack.c.l.b16 %v103
  %v493 = vunpack.c.h.b16 %v103
  %v494 = vunpack.c.l.b16 %v104
  %v495 = vunpack.c.h.b16 %v104
  %v496 = vunpack.c.l.b16 %v105
  %v497 = vunpack.c.h.b16 %v105
  %v498 = vunpack.c.l.b16 %v106
  %v499 = vunpack.c.h.b16 %v106
  %v500 = vunpack.c.l.b16 %v107
  %v501 = vunpack.c.h.b16 %v107
  %v502 = vunpack.c.l.b16 %v108
  %v503 = vunpack.c.h.b16 %v108
  %v504 = vunpack.c.l.b16 %v109
  %v505 = vunpack.c.h.b16 %v109
  %v506 = vunpack.c.l.b16 %v110
  %v507 = vunpack.c.h.b16 %v110
  %v508 = vunpack.c.l.b16 %v111
  %v509 = vunpack.c.h.b16 %v111
  %v510 = vunpack.c.l.b16 %v112
  %v511 = vunpack.c.h.b16 %v112
  %v512 = vunpack.c.l.b16 %v113
  %v513 = vunpack.c.h.b16 %v113
  %v514 = vunpack.c.l.b16 %v114
  %v515 = vunpack.c.h.b16 %v114
  %v516 = vunpack.c.l.b16 %v115
  %v517 = vunpack.c.h.b16 %v115
  %v518 = vunpack.c.l.b16 %v116
  %v519 = vunpack.c.h.b16 %v116
  %v520 = vunpack.c.l.b16 %v117
  %v521 = vunpack.c.h.b16 %v117
  %v522 = vunpack.c.l.b16 %v118
  %v523 = vunpack.c.h.b16 %v118
  %v524 = vunpack.c.l.b16 %v119
  %v525 = vunpack.c.h.b16 %v119
  %v526 = vunpack.c.l.b16 %v120
  %v527 = vunpack.c.h.b16 %v120
  %v528 = vunpack.c.l.b16 %v121
  %v529 = vunpack.c.h.b16 %v121
  %v530 = vunpack.c.l.b16 %v122
  %v531 = vunpack.c.h.b16 %v122
  %v532 = vunpack.c.l.b16 %v123
  %v533 = vunpack.c.h.b16 %v123
  %v534 = vunpack.c.l.b16 %v124
  %v535 = vunpack.c.h.b16 %v124
  %v536 = vunpack.c.l.b16 %v125
  %v537 = vunpack.c.h.b16 %v125
  %v538 = vunpack.c.l.b16 %v126
  %v539 = vunpack.c.h.b16 %v126
  %v540 = vunpack.c.l.b16 %v127
  %v541 = vunpack.c.h.b16 %v127
  %v542 = vunpack.c.l.b16 %v128
  %v543 = vunpack.c.h.b16 %v128
  %v544 = vunpack.c.l.b16 %v129
  %v545 = vunpack.c.h.b16 %v129
  %v546 = vunpack.c.l.b16 %v130
  %v547 = vunpack.c.h.b16 %v130
  %v548 = vunpack.c.l.b16 %v131
  %v549 = vunpack.c.h.b16 %v131
  %v550 = vunpack.c.l.b16 %v132
  %v551 = vunpack.c.h.b16 %v132
  %v552 = vunpack.c.l.b16 %v133
  %v553 = vunpack.c.h.b16 %v133
  %v554 = vunpack.c.l.b16 %v134
  %v555 = vunpack.c.h.b16 %v134
  %v556 = vunpack.c.l.b16 %v135
  %v557 = vunpack.c.h.b16 %v135
  %v558 = vunpack.c.l.b16 %v136
  %v559 = vunpack.c.h.b16 %v136
  %v560 = vunpack.c.l.b16 %v137
  %v561 = vunpack.c.h.b16 %v137
  %v562 = vunpack.c.l.b16 %v138
  %v563 = vunpack.c.h.b16 %v138
  %v564 = vunpack.c.l.b16 %v139
  %v565 = vunpack.c.h.b16 %v139
  %v566 = vunpack.c.l.b16 %v140
  %v567 = vunpack.c.h.b16 %v140
  %v568 = vunpack.c.l.b16 %v141
  %v569 = vunpack.c.h.b16 %v141
  %v570 = vunpack.c.l.b16 %v142
  %v571 = vunpack.c.h.b16 %v142
  %v572 = vunpack.c.l.b16 %v143
  %v573 = vunpack.c.h.b16 %v143
  %v574 = vunpack.c.l.b16 %v144
  %v575 = vunpack.c.h.b16 %v144
  %v576 = vunpack.c.l.b16 %v145
  %v577 = vunpack.c.h.b16 %v145
  %v578 = vunpack.c.l.b16 %v146
  %v579 = vunpack.c.h.b16 %v146
  %v580 = vunpack.c.l.b16 %v147
  %v581 = vunpack.c.h.b16 %v147
  %v582 = vunpack.c.l.b16 %v148
  %v583 = vunpack.c.h.b16 %v148
  %v584 = vunpack.c.l.b16 %v149
  %v585 = vunpack.c.h.b16 %v149
  %v586 = vpack.c.b16 %v332, %v330
  %v587 = vpack.c.b16 %v333, %v331
  %v588 = vpack.c.b16 %v336, %v334
  %v589 = vpack.c.b16 %v337, %v335
  %v590 = vpack.c.b16 %v340, %v338
  %v591 = vpack.c.b16 %v341, %v339
  %v592 = vpack.c.b16 %v344, %v342
  %v593 = vpack.c.b16 %v345, %v343
  %v594 = vpack.c.b16 %v348, %v346
  %v595 = vpack.c.b16 %v349, %v347
  %v596 = vpack.c.b16 %v352, %v350
  %v597 = vpack.c.b16 %v353, %v351
  %v598 = vpack.c.b16 %v356, %v354
  %v599 = vpack.c.b16 %v357, %v355
  %v600 = vpack.c.b16 %v360, %v358
  %v601 = vpack.c.b16 %v361, %v359
  %v602 = vpack.c.b16 %v364, %v362
  %v603 = vpack.c.b16 %v365, %v363
  %v604 = vpack.c.b16 %v368, %v366
  %v605 = vpack.c.b16 %v369, %v367
  %v606 = vpack.c.b16 %v372, %v370
  %v607 = vpack.c.b16 %v373, %v371
  %v608 = vpack.c.b16 %v376, %v374
  %v609 = vpack.c.b16 %v377, %v375
  %v610 = vpack.c.b16 %v380, %v378
  %v611 = vpack.c.b16 %v381, %v379
  %v612 = vpack.c.b16 %v384, %v382
  %v613 = vpack.c.b16 %v385, %v383
  %v614 = vpack.c.b16 %v388, %v386
  %v615 = vpack.c.b16 %v389, %v387
  %v616 = vpack.c.b16 %v392, %v390
  %v617 = vpack.c.b16 %v393, %v391
  %v618 = vpack.c.b16 %v396, %v394
  %v619 = vpack.c.b16 %v397, %v395
  %v620 = vpack.c.b16 %v400, %v398
  %v621 = vpack.c.b16 %v401, %v399
  %v622 = vpack.c.b16 %v404, %v402
  %v623 = vpack.c.b16 %v405, %v403
  %v624 = vpack.c.b16 %v408, %v406
  %v625 = vpack.c.b16 %v409, %v407
  %v626 = vpack.c.b16 %v412, %v410
  %v627 = vpack.c.b16 %v413, %v411
  %v628 = vpack.c.b16 %v416, %v414
  %v629 = vpack.c.b16 %v417, %v415
  %v630 = vpack.c.b16 %v420, %v418
  %v631 = vpack.c.b16 %v421, %v419
  %v632 = vpack.c.b16 %v424, %v422
  %v633 = vpack.c.b16 %v425, %v423
  %v634 = vpack.c.b16 %v428, %v426
  %v635 = vpack.c.b16 %v429, %v427
  %v636 = vpack.c.b16 %v432, %v430
  %v637 = vpack.c.b16 %v433, %v431
  %v638 = vpack.c.b16 %v436, %v434
  %v639 = vpack.c.b16 %v437, %v435
  %v640 = vpack.c.b16 %v440, %v438
  %v641 = vpack.c.b16 %v441, %v439
  %v642 = vpack.c.b16 %v444, %v442
  %v643 = vpack.c.b16 %v445, %v443
  %v644 = vpack.c.b16 %v448, %v446
  %v645 = vpack.c.b16 %v449, %v447
  %v646 = vpack.c.b16 %v452, %v450
  %v647 = vpack.c.b16 %v453, %v451
  %v648 = vpack.c.b16 %v456, %v454
  %v649 = vpack.c.b16 %v457, %v455
  %v650 = vpack.c.b16 %v460, %v458
  %v651 = vpack.c.b16 %v461, %v459
  %v652 = vpack.c.b16 %v464, %v462
  %v653 = vpack.c.b16 %v465, %v463
  %v654 = vpack.c.b16 %v468, %v466
  %v655 = vpack.c.b16 %v469, %v467
  %v656 = vpack.c.b16 %v472, %v470
  %v657 = vpack.c.b16 %v473, %v471
  %v658 = vpack.c.b16 %v476, %v474
  %v659 = vpack.c.b16 %v477, %v475
  %v660 = vpack.c.b16 %v480, %v478
  %v661 = vpack.c.b16 %v481, %v479
  %v662 = vpack.c.b16 %v484, %v482
  %v663 = vpack.c.b16 %v485, %v483
  %v664 = vpack.c.b16 %v488, %v486
  %v665 = vpack.c.b16 %v489, %v487
  %v666 = vpack.c.b16 %v492, %v490
  %v667 = vpack.c.b16 %v493, %v491
  %v668 = vpack.c.b16 %v496, %v494
  %v669 = vpack.c.b16 %v497, %v495
  %v670 = vpack.c.b16 %v500, %v498
  %v671 = vpack.c.b16 %v501, %v499
  %v672 = vpack.c.b16 %v504, %v502
  %v673 = vpack.c.b16 %v505, %v503
  %v674 = vpack.c.b16 %v508, %v506
  %v675 = vpack.c.b16 %v509, %v507
  %v676 = vpack.c.b16 %v512, %v510
  %v677 = vpack.c.b16 %v513, %v511
  %v678 = vpack.c.b16 %v516, %v514
  %v679 = vpack.c.b16 %v517, %v515
  %v680 = vpack.c.b16 %v520, %v518
  %v681 = vpack.c.b16 %v521, %v519
  %v682 = vpack.c.b16 %v524, %v522
  %v683 = vpack.c.b16 %v525, %v523
  %v684 = vpack.c.b16 %v528, %v526
  %v685 = vpack.c.b16 %v529, %v527
  %v686 = vpack.c.b16 %v532, %v530
  %v687 = vpack.c.b16 %v533, %v531
  %v688 = vpack.c.b16 %v536, %v534
  %v689 = vpack.c.b16 %v537, %v535
  %v690 = vpack.c.b16 %v540, %v538
  %v691 = vpack.c.b16 %v541, %v539
  %v692 = vpack.c.b16 %v544, %v542
  %v693 = vpack.c.b16 %v545, %v543
  %v694 = vpack.c.b16 %v548, %v546
  %v695 = vpack.c.b16 %v549, %v547
  %v696 = vpack.c.b16 %v552, %v550
  %v697 = vpack.c.b16 %v553, %v551
  %v698 = vpack.c.b16 %v556, %v554
  %v699 = vpack.c.b16 %v557, %v555
  %v700 = vpack.c.b16 %v560, %v558
  %v701 = vpack.c.b16 %v561, %v559
  %v702 = vpack.c.b16 %v564, %v562
  %v703 = vpack.c.b16 %v565, %v563
  %v704 = vpack.c.b16 %v568, %v566
  %v705 = vpack.c.b16 %v569, %v567
  %v706 = vpack.c.b16 %v572, %v570
  %v707 = vpack.c.b16 %v573, %v571
  %v708 = vpack.c.b16 %v576, %v574
  %v709 = vpack.c.b16 %v577, %v575
  %v710 = vpack.c.b16 %v580, %v578
  %v711 = vpack.c.b16 %v581, %v579
  %v712 = vpack.c.b16 %v584, %v582
  %v713 = vpack.c.b16 %v585, %v583
  %842 = vmatprep.subr.bf16.mxu0 %v587
  %843 = vmatpush1.bf16.msra.mxu0 %v586
  %844 = vmatprep.subr.bf16.mxu0 %v589
  %845 = vmatpush1.bf16.msra.mxu0 %v588
  %846 = vmatprep.subr.bf16.mxu0 %v591
  %847 = vmatpush1.bf16.msra.mxu0 %v590
  %848 = vmatprep.subr.bf16.mxu0 %v593
  %849 = vmatpush1.bf16.msra.mxu0 %v592
  %850 = vmatprep.subr.bf16.mxu0 %v595
  %851 = vmatpush1.bf16.msra.mxu0 %v594
  %852 = vmatprep.subr.bf16.mxu0 %v597
  %853 = vmatpush1.bf16.msra.mxu0 %v596
  %854 = vmatprep.subr.bf16.mxu0 %v599
  %855 = vmatpush1.bf16.msra.mxu0 %v598
  %856 = vmatprep.subr.bf16.mxu0 %v601
  %857 = vmatpush1.bf16.msra.mxu0 %v600
  %858 = vmatprep.subr.bf16.mxu0 %v603
  %859 = vmatpush1.bf16.msra.mxu0 %v602
  %860 = vmatprep.subr.bf16.mxu0 %v605
  %861 = vmatpush1.bf16.msra.mxu0 %v604
  %862 = vmatprep.subr.bf16.mxu0 %v607
  %863 = vmatpush1.bf16.msra.mxu0 %v606
  %864 = vmatprep.subr.bf16.mxu0 %v609
  %865 = vmatpush1.bf16.msra.mxu0 %v608
  %866 = vmatprep.subr.bf16.mxu0 %v611
  %867 = vmatpush1.bf16.msra.mxu0 %v610
  %868 = vmatprep.subr.bf16.mxu0 %v613
  %869 = vmatpush1.bf16.msra.mxu0 %v612
  %870 = vmatprep.subr.bf16.mxu0 %v615
  %871 = vmatpush1.bf16.msra.mxu0 %v614
  %872 = vmatprep.subr.bf16.mxu0 %v617
  %873 = vmatpush1.bf16.msra.mxu0 %v616
  %874 = vmatprep.mubr.bf16.mxu0 %v187
  %875 = vmatmul.mubr.bf16.gmra.mrb[0].mxu0 %v186
  %v876 = vpop.f32.mrb[0].mxu0
  %v877 = vadd.f32 %v155, %v876
  %v878 = vpop.f32.mrb[0].mxu0
  %v879 = vadd.f32 %v159, %v878
  %v880 = vpop.f32.mrb[0].mxu0
  %v881 = vadd.f32 %v155, %v880
  %v882 = vpop.f32.mrb[0].mxu0
  %v883 = vadd.f32 %v159, %v882
  %884 = vdwg.mxu0
  %885 = vmatprep.subr.bf16.mxu0 %v619
  %886 = vmatpush1.bf16.msra.mxu0 %v618
  %887 = vmatprep.subr.bf16.mxu0 %v621
  %888 = vmatpush1.bf16.msra.mxu0 %v620
  %889 = vmatprep.subr.bf16.mxu0 %v623
  %890 = vmatpush1.bf16.msra.mxu0 %v622
  %891 = vmatprep.subr.bf16.mxu0 %v625
  %892 = vmatpush1.bf16.msra.mxu0 %v624
  %893 = vmatprep.subr.bf16.mxu0 %v627
  %894 = vmatpush1.bf16.msra.mxu0 %v626
  %895 = vmatprep.subr.bf16.mxu0 %v629
  %896 = vmatpush1.bf16.msra.mxu0 %v628
  %897 = vmatprep.subr.bf16.mxu0 %v631
  %898 = vmatpush1.bf16.msra.mxu0 %v630
  %899 = vmatprep.subr.bf16.mxu0 %v633
  %900 = vmatpush1.bf16.msra.mxu0 %v632
  %901 = vmatprep.subr.bf16.mxu0 %v635
  %902 = vmatpush1.bf16.msra.mxu0 %v634
  %903 = vmatprep.subr.bf16.mxu0 %v637
  %904 = vmatpush1.bf16.msra.mxu0 %v636
  %905 = vmatprep.subr.bf16.mxu0 %v639
  %906 = vmatpush1.bf16.msra.mxu0 %v638
  %907 = vmatprep.subr.bf16.mxu0 %v641
  %908 = vmatpush1.bf16.msra.mxu0 %v640
  %909 = vmatprep.subr.bf16.mxu0 %v643
  %910 = vmatpush1.bf16.msra.mxu0 %v642
  %911 = vmatprep.subr.bf16.mxu0 %v645
  %912 = vmatpush1.bf16.msra.mxu0 %v644
  %913 = vmatprep.subr.bf16.mxu0 %v647
  %914 = vmatpush1.bf16.msra.mxu0 %v646
  %915 = vmatprep.subr.bf16.mxu0 %v649
  %916 = vmatpush1.bf16.msra.mxu0 %v648
  %917 = vmatprep.mubr.bf16.mxu0 %v189
  %918 = vmatmul.mubr.bf16.gmra.mrb[0].mxu0 %v188
  %v919 = vpop.f32.mrb[0].mxu0
  %v920 = vadd.f32 %v877, %v919
  %v921 = vpop.f32.mrb[0].mxu0
  %v922 = vadd.f32 %v879, %v921
  %v923 = vpop.f32.mrb[0].mxu0
  %v924 = vadd.f32 %v881, %v923
  %v925 = vpop.f32.mrb[0].mxu0
  %v926 = vadd.f32 %v883, %v925
  %927 = vdwg.mxu0
  %928 = vmatprep.subr.bf16.mxu0 %v651
  %929 = vmatpush1.bf16.msra.mxu0 %v650
  %930 = vmatprep.subr.bf16.mxu0 %v653
  %931 = vmatpush1.bf16.msra.mxu0 %v652
  %932 = vmatprep.subr.bf16.mxu0 %v655
  %933 = vmatpush1.bf16.msra.mxu0 %v654
  %934 = vmatprep.subr.bf16.mxu0 %v657
  %935 = vmatpush1.bf16.msra.mxu0 %v656
  %936 = vmatprep.subr.bf16.mxu0 %v659
  %937 = vmatpush1.bf16.msra.mxu0 %v658
  %938 = vmatprep.subr.bf16.mxu0 %v661
  %939 = vmatpush1.bf16.msra.mxu0 %v660
  %940 = vmatprep.subr.bf16.mxu0 %v663
  %941 = vmatpush1.bf16.msra.mxu0 %v662
  %942 = vmatprep.subr.bf16.mxu0 %v665
  %943 = vmatpush1.bf16.msra.mxu0 %v664
  %944 = vmatprep.subr.bf16.mxu0 %v667
  %945 = vmatpush1.bf16.msra.mxu0 %v666
  %946 = vmatprep.subr.bf16.mxu0 %v669
  %947 = vmatpush1.bf16.msra.mxu0 %v668
  %948 = vmatprep.subr.bf16.mxu0 %v671
  %949 = vmatpush1.bf16.msra.mxu0 %v670
  %950 = vmatprep.subr.bf16.mxu0 %v673
  %951 = vmatpush1.bf16.msra.mxu0 %v672
  %952 = vmatprep.subr.bf16.mxu0 %v675
  %953 = vmatpush1.bf16.msra.mxu0 %v674
  %954 = vmatprep.subr.bf16.mxu0 %v677
  %955 = vmatpush1.bf16.msra.mxu0 %v676
  %956 = vmatprep.subr.bf16.mxu0 %v679
  %957 = vmatpush1.bf16.msra.mxu0 %v678
  %958 = vmatprep.subr.bf16.mxu0 %v681
  %959 = vmatpush1.bf16.msra.mxu0 %v680
  %960 = vmatprep.mubr.bf16.mxu0 %v191
  %961 = vmatmul.mubr.bf16.gmra.mrb[0].mxu0 %v190
  %v962 = vpop.f32.mrb[0].mxu0
  %v963 = vadd.f32 %v920, %v962
  %v964 = vpop.f32.mrb[0].mxu0
  %v965 = vadd.f32 %v922, %v964
  %v966 = vpop.f32.mrb[0].mxu0
  %v967 = vadd.f32 %v924, %v966
  %v968 = vpop.f32.mrb[0].mxu0
  %v969 = vadd.f32 %v926, %v968
  %970 = vdwg.mxu0
  %971 = vmatprep.subr.bf16.mxu0 %v683
  %972 = vmatpush1.bf16.msra.mxu0 %v682
  %973 = vmatprep.subr.bf16.mxu0 %v685
  %974 = vmatpush1.bf16.msra.mxu0 %v684
  %975 = vmatprep.subr.bf16.mxu0 %v687
  %976 = vmatpush1.bf16.msra.mxu0 %v686
  %977 = vmatprep.subr.bf16.mxu0 %v689
  %978 = vmatpush1.bf16.msra.mxu0 %v688
  %979 = vmatprep.subr.bf16.mxu0 %v691
  %980 = vmatpush1.bf16.msra.mxu0 %v690
  %981 = vmatprep.subr.bf16.mxu0 %v693
  %982 = vmatpush1.bf16.msra.mxu0 %v692
  %983 = vmatprep.subr.bf16.mxu0 %v695
  %984 = vmatpush1.bf16.msra.mxu0 %v694
  %985 = vmatprep.subr.bf16.mxu0 %v697
  %986 = vmatpush1.bf16.msra.mxu0 %v696
  %987 = vmatprep.subr.bf16.mxu0 %v699
  %988 = vmatpush1.bf16.msra.mxu0 %v698
  %989 = vmatprep.subr.bf16.mxu0 %v701
  %990 = vmatpush1.bf16.msra.mxu0 %v700
  %991 = vmatprep.subr.bf16.mxu0 %v703
  %992 = vmatpush1.bf16.msra.mxu0 %v702
  %993 = vmatprep.subr.bf16.mxu0 %v705
  %994 = vmatpush1.bf16.msra.mxu0 %v704
  %995 = vmatprep.subr.bf16.mxu0 %v707
  %996 = vmatpush1.bf16.msra.mxu0 %v706
  %997 = vmatprep.subr.bf16.mxu0 %v709
  %998 = vmatpush1.bf16.msra.mxu0 %v708
  %999 = vmatprep.subr.bf16.mxu0 %v711
  %1000 = vmatpush1.bf16.msra.mxu0 %v710
  %1001 = vmatprep.subr.bf16.mxu0 %v713
  %1002 = vmatpush1.bf16.msra.mxu0 %v712
  %1003 = vmatprep.mubr.bf16.mxu0 %v193
  %1004 = vmatmul.mubr.bf16.gmra.mrb[0].mxu0 %v192
  %v1005 = vpop.f32.mrb[0].mxu0
  %v1006 = vadd.f32 %v963, %v1005
  %v1007 = vpop.f32.mrb[0].mxu0
  %v1008 = vadd.f32 %v965, %v1007
  %v1009 = vpop.f32.mrb[0].mxu0
  %v1010 = vadd.f32 %v967, %v1009
  %v1011 = vpop.f32.mrb[0].mxu0
  %v1012 = vadd.f32 %v969, %v1011
  %1013 = vdwg.mxu0
  %v1014 = vtanh.pop %v1006
  %v1015 = vtanh.pop %v1008
  %v1016 = vtanh.pop %v1010
  %v1017 = vtanh.pop %v1012
  %v1018 = vpack.c.bf16 %v1016, %v1014
  %v1019 = vpack.c.bf16 %v1017, %v1015
  %v1022 = vunpack.c.l.b16 %v1018
  %v1023 = vunpack.c.l.b16 %v1019
  %v1024 = vunpack.c.h.b16 %v1018
  %v1025 = vunpack.c.h.b16 %v1019
  %v1026 = vpack.c.b16 %v1023, %v1022
  %v1027 = vpack.c.b16 %v1025, %v1024
  %1030 = vst [vmem:[%s3] sm:$0xff] %v1026
  %1031 = vst [vmem:[%s3 + $0x8] sm:$0xff] %v1027
  // Predicated region
  $region14: #{generator_forward.3} parent=0 // pred_check
    _
  $region15: #{generator_forward.3} parent=0 // pred_check_branch
    %1033 = sbr.rel (0) target = $region17
  $region16: #{generator_forward.3} parent=0 // pred_region
    _
  $region17: #{generator_forward.3} parent=0 // pred_fallthru
    _
  // Predicated region
  $region18: #{generator_forward.3} parent=0 // pred_check
    _
  $region19: #{generator_forward.3} parent=0 // pred_check_branch
    %1035 = sbr.rel (0) target = $region21
  $region20: #{generator_forward.3} parent=0 // pred_region
    _
  $region21: #{generator_forward.3} parent=0 // pred_fallthru
    _

// kernel: generator_forward.2
$region0: #{generator_forward.2}
  #allocation0 [shape = 'u32[]', space=smem, size = 0x4, offset = 0x4, fixed_abs, tag = 'smem constant byte address 0x4 - core index']
  #allocation1 [shape = 'u32[144,128]{1,0:T(1,128)}', space=vmem, size = 0x12000, scoped, tag = 'internal scratch']
  %s0 = inlined_call_operand.vmem [shape: s32[16,1], index: 0, kind: input, shape index: {}]
  %s1 = inlined_call_operand.vmem [shape: f32[16,32], index: 1, kind: input, shape index: {}]
  %s2 = inlined_call_operand.vmem [shape: f32[10,128], index: 2, kind: input, shape index: {}]
  %s3 = inlined_call_operand.vmem [shape: bf16[32,128], index: 3, kind: input, shape index: {}]
  %s4 = inlined_call_operand.hbm [shape: f32[1,128], index: 4, kind: input, shape index: {}]
  %s5 = inlined_call_operand.hbm [shape: bf16[128,256], index: 5, kind: input, shape index: {}]
  %s6 = inlined_call_operand.hbm [shape: f32[1,256], index: 6, kind: input, shape index: {}]
  %s7 = inlined_call_operand.vmem [shape: f32[1,256], index: 7, kind: input, shape index: {}]
  %s8 = inlined_call_operand.hbm [shape: f32[1,256], index: 8, kind: input, shape index: {}]
  %s9 = inlined_call_operand.hbm [shape: bf16[256,512], index: 9, kind: input, shape index: {}]
  %s10 = inlined_call_operand.hbm [shape: f32[1,512], index: 10, kind: input, shape index: {}]
  %s11 = inlined_call_operand.vmem [shape: f32[1,512], index: 11, kind: input, shape index: {}]
  %s12 = inlined_call_operand.hbm [shape: f32[1,512], index: 12, kind: input, shape index: {}]
  %s13 = inlined_call_operand.hbm [shape: bf16[512,1024], index: 13, kind: input, shape index: {}]
  %s14 = inlined_call_operand.hbm [shape: f32[1,1024], index: 14, kind: input, shape index: {}]
  %s15 = inlined_call_operand.vmem [shape: f32[1,1024], index: 15, kind: input, shape index: {}]
  %s16 = inlined_call_operand.hbm [shape: f32[1,1024], index: 16, kind: input, shape index: {}]
  %s17 = inlined_call_operand.vmem [shape: bf16[16,1024], index: 17, kind: output, shape index: {}]
  %s18 = sld [smem:[#allocation0]]
  $region118: #{generator_forward.2} parent=0
    _
  %s20 = ssub.s32 1, %s18
  %s21 = scalar_select 0, %s20, %s18
  $region1: #{generator_forward.2} parent=0
    #allocation2 [shape = 'u8[512]{0}', space=vmem, size = 0x400, scoped, tag = 'input window, operand 4, single buffered']
    #allocation3 [shape = 's32[1]{0}', space=sflag, size = 0x4, scoped, tag = 'scoped memory for generator_forward.2']
    #allocation4 [shape = 'u8[65536]{0}', space=vmem, size = 0x10000, scoped, tag = 'input window, operand 5, single buffered']
    #allocation5 [shape = 's32[1]{0}', space=sflag, size = 0x4, scoped, tag = 'scoped memory for generator_forward.2']
    #allocation6 [shape = 'u8[1024]{0}', space=vmem, size = 0x400, scoped, tag = 'input window, operand 6, single buffered']
    #allocation7 [shape = 'u8[1024]{0}', space=vmem, size = 0x400, scoped, tag = 'input window, operand 8, single buffered']
    #allocation8 [shape = 's32[1]{0}', space=sflag, size = 0x4, scoped, tag = 'scoped memory for generator_forward.2']
    #allocation9 [shape = 'u8[262144]{0}', space=vmem, size = 0x40000, scoped, tag = 'input window, operand 9, single buffered']
    #allocation10 [shape = 'u8[2048]{0}', space=vmem, size = 0x800, scoped, tag = 'input window, operand 10, single buffered']
    #allocation11 [shape = 's32[1]{0}', space=sflag, size = 0x4, scoped, tag = 'scoped memory for generator_forward.2']
    #allocation12 [shape = 'u8[2048]{0}', space=vmem, size = 0x800, scoped, tag = 'input window, operand 12, single buffered']
    #allocation13 [shape = 'u8[1048576]{0}', space=vmem, size = 0x100000, scoped, tag = 'input window, operand 13, single buffered']
    #allocation14 [shape = 's32[1]{0}', space=sflag, size = 0x4, scoped, tag = 'scoped memory for generator_forward.2']
    #allocation15 [shape = 'u8[4096]{0}', space=vmem, size = 0x1000, scoped, tag = 'input window, operand 14, single buffered']
    #allocation16 [shape = 'u8[4096]{0}', space=vmem, size = 0x1000, scoped, tag = 'input window, operand 16, single buffered']
    #allocation17 [shape = 's32[1]{0}', space=sflag, size = 0x4, scoped, tag = 'scoped memory for generator_forward.2']
    %22 = vsyncpa [#allocation3], 0
    %23 = vsyncpa [#allocation5], 0
    %24 = vsyncpa [#allocation8], 0
    %25 = vsyncpa [#allocation11], 0
    %26 = vsyncpa [#allocation14], 0
    %27 = vsyncpa [#allocation17], 0
    // Predicated region
    $region2: #{generator_forward.2} parent=1 // pred_check
      _
    $region3: #{generator_forward.2} parent=1 // pred_check_branch
      %29 = sbr.rel (0) target = $region5
    $region4: #{generator_forward.2} parent=1 // pred_region
      _
    $region5: #{generator_forward.2} parent=1 // pred_fallthru
      _
    // Predicated region
    $region6: #{generator_forward.2} parent=1 // pred_check
      _
    $region7: #{generator_forward.2} parent=1 // pred_check_branch
      %31 = sbr.rel (0) target = $region9
    $region8: #{generator_forward.2} parent=1 // pred_region
      _
    $region9: #{generator_forward.2} parent=1 // pred_fallthru
      _
    // Predicated region
    $region10: #{generator_forward.2} parent=1 // pred_check
      _
    $region11: #{generator_forward.2} parent=1 // pred_check_branch
      %33 = sbr.rel (0) target = $region13
    $region12: #{generator_forward.2} parent=1 // pred_region
      _
    $region13: #{generator_forward.2} parent=1 // pred_fallthru
      _
    // Predicated region
    $region14: #{generator_forward.2} parent=1 // pred_check
      _
    $region15: #{generator_forward.2} parent=1 // pred_check_branch
      %35 = sbr.rel (0) target = $region17
    $region16: #{generator_forward.2} parent=1 // pred_region
      _
    $region17: #{generator_forward.2} parent=1 // pred_fallthru
      _
    // Predicated region
    $region18: #{generator_forward.2} parent=1 // pred_check
      _
    $region19: #{generator_forward.2} parent=1 // pred_check_branch
      %37 = sbr.rel (0) target = $region21
    $region20: #{generator_forward.2} parent=1 // pred_region
      %s39 = ssub.s32 16, 16
      %40 = vsyncadd [#allocation3], %s39
      %s42 = sshll.u32 [#allocation2], 4
      %s43 = int_to_ptr.vmem [resolvable:$true] %s42
      %45 = dma.hbm_to_vmem [thread:$0]  %s4, 16, %s43, [#allocation3]
    $region21: #{generator_forward.2} parent=1 // pred_fallthru
      _
    // Predicated region
    $region22: #{generator_forward.2} parent=1 // pred_check
      _
    $region23: #{generator_forward.2} parent=1 // pred_check_branch
      %47 = sbr.rel (0) target = $region25
    $region24: #{generator_forward.2} parent=1 // pred_region
      %s49 = ssub.s32 2048, 2048
      %50 = vsyncadd [#allocation5], %s49
      %s51 = sshll.u32 [#allocation4], 4
      %s52 = int_to_ptr.vmem [resolvable:$true] %s51
      %57 = dma.hbm_to_vmem [thread:$0]  %s5, 2048, %s52, [#allocation5], 128, 128, 8
    $region25: #{generator_forward.2} parent=1 // pred_fallthru
      _
    // Predicated region
    $region26: #{generator_forward.2} parent=1 // pred_check
      _
    $region27: #{generator_forward.2} parent=1 // pred_check_branch
      %59 = sbr.rel (0) target = $region29
    $region28: #{generator_forward.2} parent=1 // pred_region
      %s61 = ssub.s32 32, 32
      %62 = vsyncadd [#allocation5], %s61
      %s64 = sshll.u32 [#allocation6], 4
      %s65 = int_to_ptr.vmem [resolvable:$true] %s64
      %67 = dma.hbm_to_vmem [thread:$0]  %s6, 32, %s65, [#allocation5]
    $region29: #{generator_forward.2} parent=1 // pred_fallthru
      _
    // Predicated region
    $region30: #{generator_forward.2} parent=1 // pred_check
      _
    $region31: #{generator_forward.2} parent=1 // pred_check_branch
      %69 = sbr.rel (0) target = $region33
    $region32: #{generator_forward.2} parent=1 // pred_region
      _
    $region33: #{generator_forward.2} parent=1 // pred_fallthru
      _
    // Predicated region
    $region34: #{generator_forward.2} parent=1 // pred_check
      _
    $region35: #{generator_forward.2} parent=1 // pred_check_branch
      %71 = sbr.rel (0) target = $region37
    $region36: #{generator_forward.2} parent=1 // pred_region
      %s73 = ssub.s32 32, 32
      %74 = vsyncadd [#allocation8], %s73
      %s76 = sshll.u32 [#allocation7], 4
      %s77 = int_to_ptr.vmem [resolvable:$true] %s76
      %79 = dma.hbm_to_vmem [thread:$0]  %s8, 32, %s77, [#allocation8]
    $region37: #{generator_forward.2} parent=1 // pred_fallthru
      _
    // Predicated region
    $region38: #{generator_forward.2} parent=1 // pred_check
      _
    $region39: #{generator_forward.2} parent=1 // pred_check_branch
      %81 = sbr.rel (0) target = $region41
    $region40: #{generator_forward.2} parent=1 // pred_region
      %s83 = ssub.s32 8192, 8192
      %84 = vsyncadd [#allocation8], %s83
      %s85 = sshll.u32 [#allocation9], 4
      %s86 = int_to_ptr.vmem [resolvable:$true] %s85
      %91 = dma.hbm_to_vmem [thread:$0]  %s9, 8192, %s86, [#allocation8], 256, 256, 16
    $region41: #{generator_forward.2} parent=1 // pred_fallthru
      _
    // Predicated region
    $region42: #{generator_forward.2} parent=1 // pred_check
      _
    $region43: #{generator_forward.2} parent=1 // pred_check_branch
      %93 = sbr.rel (0) target = $region45
    $region44: #{generator_forward.2} parent=1 // pred_region
      %s95 = ssub.s32 64, 64
      %96 = vsyncadd [#allocation11], %s95
      %s98 = sshll.u32 [#allocation10], 4
      %s99 = int_to_ptr.vmem [resolvable:$true] %s98
      %101 = dma.hbm_to_vmem [thread:$0]  %s10, 64, %s99, [#allocation11]
    $region45: #{generator_forward.2} parent=1 // pred_fallthru
      _
    // Predicated region
    $region46: #{generator_forward.2} parent=1 // pred_check
      _
    $region47: #{generator_forward.2} parent=1 // pred_check_branch
      %103 = sbr.rel (0) target = $region49
    $region48: #{generator_forward.2} parent=1 // pred_region
      _
    $region49: #{generator_forward.2} parent=1 // pred_fallthru
      _
    // Predicated region
    $region50: #{generator_forward.2} parent=1 // pred_check
      _
    $region51: #{generator_forward.2} parent=1 // pred_check_branch
      %105 = sbr.rel (0) target = $region53
    $region52: #{generator_forward.2} parent=1 // pred_region
      %s107 = ssub.s32 64, 64
      %108 = vsyncadd [#allocation11], %s107
      %s110 = sshll.u32 [#allocation12], 4
      %s111 = int_to_ptr.vmem [resolvable:$true] %s110
      %113 = dma.hbm_to_vmem [thread:$0]  %s12, 64, %s111, [#allocation11]
    $region53: #{generator_forward.2} parent=1 // pred_fallthru
      _
    // Predicated region
    $region54: #{generator_forward.2} parent=1 // pred_check
      _
    $region55: #{generator_forward.2} parent=1 // pred_check_branch
      %115 = sbr.rel (0) target = $region57
    $region56: #{generator_forward.2} parent=1 // pred_region
      %s117 = ssub.s32 32768, 32768
      %118 = vsyncadd [#allocation14], %s117
      %s119 = sshll.u32 [#allocation13], 4
      %s120 = int_to_ptr.vmem [resolvable:$true] %s119
      %125 = dma.hbm_to_vmem [thread:$0]  %s13, 32768, %s120, [#allocation14], 512, 512, 32
    $region57: #{generator_forward.2} parent=1 // pred_fallthru
      _
    // Predicated region
    $region58: #{generator_forward.2} parent=1 // pred_check
      _
    $region59: #{generator_forward.2} parent=1 // pred_check_branch
      %127 = sbr.rel (0) target = $region61
    $region60: #{generator_forward.2} parent=1 // pred_region
      %s129 = ssub.s32 128, 128
      %130 = vsyncadd [#allocation14], %s129
      %s132 = sshll.u32 [#allocation15], 4
      %s133 = int_to_ptr.vmem [resolvable:$true] %s132
      %135 = dma.hbm_to_vmem [thread:$0]  %s14, 128, %s133, [#allocation14]
    $region61: #{generator_forward.2} parent=1 // pred_fallthru
      _
    // Predicated region
    $region62: #{generator_forward.2} parent=1 // pred_check
      _
    $region63: #{generator_forward.2} parent=1 // pred_check_branch
      %137 = sbr.rel (0) target = $region65
    $region64: #{generator_forward.2} parent=1 // pred_region
      _
    $region65: #{generator_forward.2} parent=1 // pred_fallthru
      _
    // Predicated region
    $region66: #{generator_forward.2} parent=1 // pred_check
      _
    $region67: #{generator_forward.2} parent=1 // pred_check_branch
      %139 = sbr.rel (0) target = $region69
    $region68: #{generator_forward.2} parent=1 // pred_region
      %s141 = ssub.s32 128, 128
      %142 = vsyncadd [#allocation17], %s141
      %s144 = sshll.u32 [#allocation16], 4
      %s145 = int_to_ptr.vmem [resolvable:$true] %s144
      %147 = dma.hbm_to_vmem [thread:$0]  %s16, 128, %s145, [#allocation17]
    $region69: #{generator_forward.2} parent=1 // pred_fallthru
      _
    // Predicated region
    $region70: #{generator_forward.2} parent=1 // pred_check
      _
    $region71: #{generator_forward.2} parent=1 // pred_check_branch
      %149 = sbr.rel (0) target = $region73
    $region72: #{generator_forward.2} parent=1 // pred_region
      %150 = dma.done [#allocation3], 16
    $region73: #{generator_forward.2} parent=1 // pred_fallthru
      _
    // Predicated region
    $region74: #{generator_forward.2} parent=1 // pred_check
      _
    $region75: #{generator_forward.2} parent=1 // pred_check_branch
      %152 = sbr.rel (0) target = $region77
    $region76: #{generator_forward.2} parent=1 // pred_region
      %153 = dma.done [#allocation5], 2048
    $region77: #{generator_forward.2} parent=1 // pred_fallthru
      _
    // Predicated region
    $region78: #{generator_forward.2} parent=1 // pred_check
      _
    $region79: #{generator_forward.2} parent=1 // pred_check_branch
      %155 = sbr.rel (0) target = $region81
    $region80: #{generator_forward.2} parent=1 // pred_region
      %156 = dma.done [#allocation5], 32
    $region81: #{generator_forward.2} parent=1 // pred_fallthru
      _
    // Predicated region
    $region82: #{generator_forward.2} parent=1 // pred_check
      _
    $region83: #{generator_forward.2} parent=1 // pred_check_branch
      %158 = sbr.rel (0) target = $region85
    $region84: #{generator_forward.2} parent=1 // pred_region
      %159 = dma.done [#allocation8], 32
    $region85: #{generator_forward.2} parent=1 // pred_fallthru
      _
    // Predicated region
    $region86: #{generator_forward.2} parent=1 // pred_check
      _
    $region87: #{generator_forward.2} parent=1 // pred_check_branch
      %161 = sbr.rel (0) target = $region89
    $region88: #{generator_forward.2} parent=1 // pred_region
      %162 = dma.done [#allocation8], 8192
    $region89: #{generator_forward.2} parent=1 // pred_fallthru
      _
    // Predicated region
    $region90: #{generator_forward.2} parent=1 // pred_check
      _
    $region91: #{generator_forward.2} parent=1 // pred_check_branch
      %164 = sbr.rel (0) target = $region93
    $region92: #{generator_forward.2} parent=1 // pred_region
      %165 = dma.done [#allocation11], 64
    $region93: #{generator_forward.2} parent=1 // pred_fallthru
      _
    // Predicated region
    $region94: #{generator_forward.2} parent=1 // pred_check
      _
    $region95: #{generator_forward.2} parent=1 // pred_check_branch
      %167 = sbr.rel (0) target = $region97
    $region96: #{generator_forward.2} parent=1 // pred_region
      %168 = dma.done [#allocation11], 64
    $region97: #{generator_forward.2} parent=1 // pred_fallthru
      _
    // Predicated region
    $region98: #{generator_forward.2} parent=1 // pred_check
      _
    $region99: #{generator_forward.2} parent=1 // pred_check_branch
      %170 = sbr.rel (0) target = $region101
    $region100: #{generator_forward.2} parent=1 // pred_region
      %171 = dma.done [#allocation14], 32768
    $region101: #{generator_forward.2} parent=1 // pred_fallthru
      _
    // Predicated region
    $region102: #{generator_forward.2} parent=1 // pred_check
      _
    $region103: #{generator_forward.2} parent=1 // pred_check_branch
      %173 = sbr.rel (0) target = $region105
    $region104: #{generator_forward.2} parent=1 // pred_region
      %174 = dma.done [#allocation14], 128
    $region105: #{generator_forward.2} parent=1 // pred_fallthru
      _
    // Predicated region
    $region106: #{generator_forward.2} parent=1 // pred_check
      _
    $region107: #{generator_forward.2} parent=1 // pred_check_branch
      %176 = sbr.rel (0) target = $region109
    $region108: #{generator_forward.2} parent=1 // pred_region
      %177 = dma.done [#allocation17], 128
    $region109: #{generator_forward.2} parent=1 // pred_fallthru
      _
    %v179 = vld [vmem:[%s0] sm:$0xff]
    %v180 = vld [vmem:[%s0 + $0x8] sm:$0xff]
    %v181 = vlaneseq
    %v182 = vand.u32 %v181, 127
    %183 = vset.pattern.permute.xlu0 0
    %184 = vperm.xlu0 %183, %v179
    %v185 = vpop.permute.xlu0 %184
    %186 = vset.pattern.permute.xlu0 0
    %187 = vperm.xlu0 %186, %v180
    %v188 = vpop.permute.xlu0 %187
    %vm189 = vcmp.eq.s32.totalorder %v185, %v182
    %vm190 = vcmp.eq.s32.totalorder %v188, %v182
    %v191 = vsel %vm189, 1, 0
    %v192 = vsel %vm190, 1, 0
    %v193 = vcvt.s32.f32 %v191
    %v194 = vcvt.s32.f32 %v192
    %v195 = vld [vmem:[%s2] sm:$0xff]
    %v196 = vld [vmem:[%s2 + $0x8] sm:$0x3]
    %v197 = vld [vmem:[%s1] sm:$0xff]
    %v198 = vld [vmem:[%s1 + $0x8] sm:$0xff]
    %v199 = vpack.c.bf16 %v198, %v197
    %v200 = vld [vmem:[%s3] sm:$0xf]
    %v201 = vld [vmem:[%s3 + $0x4] sm:$0xf]
    %v202 = vld [vmem:[%s3 + $0x8] sm:$0xf]
    %v203 = vld [vmem:[%s3 + $0xc] sm:$0xf]
    %v208 = vunpack.c.l.b16 %v200
    %v209 = vunpack.c.l.b16 %v201
    %v210 = vunpack.c.l.b16 %v202
    %v211 = vunpack.c.l.b16 %v203
    %v212 = vpack.c.b16 %v209, %v208
    %v213 = vpack.c.b16 %v211, %v210
    %vm216 = vcmask 261120
    %v218 = vsel %vm216, %v199, 0
    %220 = vmatprep.subr.bf16.mxu0 0
    %221 = vmatpush1.bf16.msra.mxu0 %v212
    %222 = vmatprep.subr.bf16.mxu0 0
    %223 = vmatpush1.bf16.msra.mxu0 %v213
    %224 = vmatprep.subr.bf16.mxu0 0
    %225 = vmatpush1.bf16.msra.mxu0 0
    %226 = vmatprep.subr.bf16.mxu0 0
    %227 = vmatpush1.bf16.msra.mxu0 0
    %228 = vmatprep.subr.bf16.mxu0 0
    %229 = vmatpush1.bf16.msra.mxu0 0
    %230 = vmatprep.subr.bf16.mxu0 0
    %231 = vmatpush1.bf16.msra.mxu0 0
    %232 = vmatprep.subr.bf16.mxu0 0
    %233 = vmatpush1.bf16.msra.mxu0 0
    %234 = vmatprep.subr.bf16.mxu0 0
    %235 = vmatpush1.bf16.msra.mxu0 0
    %236 = vmatprep.subr.bf16.mxu0 0
    %237 = vmatpush1.bf16.msra.mxu0 0
    %238 = vmatprep.subr.bf16.mxu0 0
    %239 = vmatpush1.bf16.msra.mxu0 0
    %240 = vmatprep.subr.bf16.mxu0 0
    %241 = vmatpush1.bf16.msra.mxu0 0
    %242 = vmatprep.subr.bf16.mxu0 0
    %243 = vmatpush1.bf16.msra.mxu0 0
    %244 = vmatprep.subr.bf16.mxu0 0
    %245 = vmatpush1.bf16.msra.mxu0 0
    %246 = vmatprep.subr.bf16.mxu0 0
    %247 = vmatpush1.bf16.msra.mxu0 0
    %248 = vmatprep.subr.bf16.mxu0 0
    %249 = vmatpush1.bf16.msra.mxu0 0
    %250 = vmatprep.subr.bf16.mxu0 0
    %251 = vmatpush1.bf16.msra.mxu0 0
    %252 = vmatprep.mubr.bf16.mxu0 0
    %253 = vmatmul.mubr.bf16.gmra.mrb[0].mxu0 %v218
    %v254 = vpop.f32.mrb[0].mxu0
    %v255 = vadd.f32 0.0, %v254
    %v256 = vpop.f32.mrb[0].mxu0
    %v257 = vpop.f32.mrb[0].mxu0
    %v258 = vadd.f32 0.0, %v257
    %v259 = vpop.f32.mrb[0].mxu0
    %260 = vdwg.mxu0
    %vm261 = vcmask 80896
    %v263 = vsel %vm261, %v193, 0
    %v266 = vsel %vm261, %v194, 0
    %vm268 = vcmask 1041408
    %v270 = vsel %vm268, %v196, 0
    %272 = vmatprep.subr.mxu0 0.0
    %273 = vmatpush1.msra.mxu0 %v195
    %274 = vmatprep.subr.mxu0 0.0
    %275 = vmatpush1.msra.mxu0 %v270
    %276 = vmatprep.subr.mxu0 0.0
    %277 = vmatpush1.msra.mxu0 0.0
    %278 = vmatprep.subr.mxu0 0.0
    %279 = vmatpush1.msra.mxu0 0.0
    %280 = vmatprep.subr.mxu0 0.0
    %281 = vmatpush1.msra.mxu0 0.0
    %282 = vmatprep.subr.mxu0 0.0
    %283 = vmatpush1.msra.mxu0 0.0
    %284 = vmatprep.subr.mxu0 0.0
    %285 = vmatpush1.msra.mxu0 0.0
    %286 = vmatprep.subr.mxu0 0.0
    %287 = vmatpush1.msra.mxu0 0.0
    %288 = vmatprep.subr.mxu0 0.0
    %289 = vmatpush1.msra.mxu0 0.0
    %290 = vmatprep.subr.mxu0 0.0
    %291 = vmatpush1.msra.mxu0 0.0
    %292 = vmatprep.subr.mxu0 0.0
    %293 = vmatpush1.msra.mxu0 0.0
    %294 = vmatprep.subr.mxu0 0.0
    %295 = vmatpush1.msra.mxu0 0.0
    %296 = vmatprep.subr.mxu0 0.0
    %297 = vmatpush1.msra.mxu0 0.0
    %298 = vmatprep.subr.mxu0 0.0
    %299 = vmatpush1.msra.mxu0 0.0
    %300 = vmatprep.subr.mxu0 0.0
    %301 = vmatpush1.msra.mxu0 0.0
    %302 = vmatprep.subr.mxu0 0.0
    %303 = vmatpush1.msra.mxu0 0.0
    %304 = vmatprep.subr.mxu0 0.0
    %305 = vmatpush1.msra.mxu0 0.0
    %306 = vmatprep.subr.mxu0 0.0
    %307 = vmatpush1.msra.mxu0 0.0
    %308 = vmatprep.subr.mxu0 0.0
    %309 = vmatpush1.msra.mxu0 0.0
    %310 = vmatprep.subr.mxu0 0.0
    %311 = vmatpush1.msra.mxu0 0.0
    %312 = vmatprep.subr.mxu0 0.0
    %313 = vmatpush1.msra.mxu0 0.0
    %314 = vmatprep.subr.mxu0 0.0
    %315 = vmatpush1.msra.mxu0 0.0
    %316 = vmatprep.subr.mxu0 0.0
    %317 = vmatpush1.msra.mxu0 0.0
    %318 = vmatprep.subr.mxu0 0.0
    %319 = vmatpush1.msra.mxu0 0.0
    %320 = vmatprep.subr.mxu0 0.0
    %321 = vmatpush1.msra.mxu0 0.0
    %322 = vmatprep.subr.mxu0 0.0
    %323 = vmatpush1.msra.mxu0 0.0
    %324 = vmatprep.subr.mxu0 0.0
    %325 = vmatpush1.msra.mxu0 0.0
    %326 = vmatprep.subr.mxu0 0.0
    %327 = vmatpush1.msra.mxu0 0.0
    %328 = vmatprep.subr.mxu0 0.0
    %329 = vmatpush1.msra.mxu0 0.0
    %330 = vmatprep.subr.mxu0 0.0
    %331 = vmatpush1.msra.mxu0 0.0
    %332 = vmatprep.subr.mxu0 0.0
    %333 = vmatpush1.msra.mxu0 0.0
    %334 = vmatprep.subr.mxu0 0.0
    %335 = vmatpush1.msra.mxu0 0.0
    %336 = vmatprep.mubr.f32.mxu0 0.0
    %337 = vmatmul.mubr.f32.gmra.mrb[0].mxu0 %v263
    %v338 = vpop.f32.mrb[0].mxu0
    %v339 = vadd.f32 %v255, %v338
    %v340 = vpop.f32.mrb[0].mxu0
    %341 = vmatprep.mubr.f32.mxu0 0.0
    %342 = vmatmul.mubr.f32.gmra.mrb[0].mxu0 %v266
    %v343 = vpop.f32.mrb[0].mxu0
    %v344 = vadd.f32 %v258, %v343
    %v345 = vpop.f32.mrb[0].mxu0
    %346 = vdwg.mxu0
    %v347 = vld [vmem:[#allocation2] sm:$0x1]
    %v349 = vlaneseq
    %v350 = vshrl.u32 %v349, 7
    %v351 = vsub.s32 0, %v350
    %v352 = vrot.slane %v347, %v351
    %v354 = vadd.f32 %v339, %v352
    %v355 = vadd.f32 %v344, %v352
    %v356 = vmul.f32 %v354, 0.2
    %v357 = vmul.f32 %v355, 0.2
    %v358 = vmax.f32 %v354, %v356
    %v359 = vmax.f32 %v355, %v357
    %v360 = vpack.c.bf16 %v359, %v358
    %v361 = vld [vmem:[#allocation4] sm:$0xff]
    %v362 = vld [vmem:[#allocation4 + $0x8] sm:$0xff]
    %v363 = vld [vmem:[#allocation4 + $0x10] sm:$0xff]
    %v364 = vld [vmem:[#allocation4 + $0x18] sm:$0xff]
    %v365 = vld [vmem:[#allocation4 + $0x20] sm:$0xff]
    %v366 = vld [vmem:[#allocation4 + $0x28] sm:$0xff]
    %v367 = vld [vmem:[#allocation4 + $0x30] sm:$0xff]
    %v368 = vld [vmem:[#allocation4 + $0x38] sm:$0xff]
    %v369 = vld [vmem:[#allocation4 + $0x40] sm:$0xff]
    %v370 = vld [vmem:[#allocation4 + $0x48] sm:$0xff]
    %v371 = vld [vmem:[#allocation4 + $0x50] sm:$0xff]
    %v372 = vld [vmem:[#allocation4 + $0x58] sm:$0xff]
    %v373 = vld [vmem:[#allocation4 + $0x60] sm:$0xff]
    %v374 = vld [vmem:[#allocation4 + $0x68] sm:$0xff]
    %v375 = vld [vmem:[#allocation4 + $0x70] sm:$0xff]
    %v376 = vld [vmem:[#allocation4 + $0x78] sm:$0xff]
    %v377 = vld [vmem:[#allocation6] sm:$0x3]
    %v379 = vlaneseq
    %v380 = vshrl.u32 %v379, 7
    %v381 = vsub.s32 0, %v380
    %v382 = vrot.slane %v377, %v381
    %v383 = vlaneseq
    %v384 = vshrl.u32 %v383, 7
    %v385 = vsub.s32 1, %v384
    %v386 = vrot.slane %v377, %v385
    %v405 = vunpack.c.l.b16 %v361
    %v406 = vunpack.c.h.b16 %v361
    %v407 = vunpack.c.l.b16 %v362
    %v408 = vunpack.c.h.b16 %v362
    %v409 = vunpack.c.l.b16 %v363
    %v410 = vunpack.c.h.b16 %v363
    %v411 = vunpack.c.l.b16 %v364
    %v412 = vunpack.c.h.b16 %v364
    %v413 = vunpack.c.l.b16 %v365
    %v414 = vunpack.c.h.b16 %v365
    %v415 = vunpack.c.l.b16 %v366
    %v416 = vunpack.c.h.b16 %v366
    %v417 = vunpack.c.l.b16 %v367
    %v418 = vunpack.c.h.b16 %v367
    %v419 = vunpack.c.l.b16 %v368
    %v420 = vunpack.c.h.b16 %v368
    %v421 = vunpack.c.l.b16 %v369
    %v422 = vunpack.c.h.b16 %v369
    %v423 = vunpack.c.l.b16 %v370
    %v424 = vunpack.c.h.b16 %v370
    %v425 = vunpack.c.l.b16 %v371
    %v426 = vunpack.c.h.b16 %v371
    %v427 = vunpack.c.l.b16 %v372
    %v428 = vunpack.c.h.b16 %v372
    %v429 = vunpack.c.l.b16 %v373
    %v430 = vunpack.c.h.b16 %v373
    %v431 = vunpack.c.l.b16 %v374
    %v432 = vunpack.c.h.b16 %v374
    %v433 = vunpack.c.l.b16 %v375
    %v434 = vunpack.c.h.b16 %v375
    %v435 = vunpack.c.l.b16 %v376
    %v436 = vunpack.c.h.b16 %v376
    %v437 = vpack.c.b16 %v407, %v405
    %v438 = vpack.c.b16 %v408, %v406
    %v439 = vpack.c.b16 %v411, %v409
    %v440 = vpack.c.b16 %v412, %v410
    %v441 = vpack.c.b16 %v415, %v413
    %v442 = vpack.c.b16 %v416, %v414
    %v443 = vpack.c.b16 %v419, %v417
    %v444 = vpack.c.b16 %v420, %v418
    %v445 = vpack.c.b16 %v423, %v421
    %v446 = vpack.c.b16 %v424, %v422
    %v447 = vpack.c.b16 %v427, %v425
    %v448 = vpack.c.b16 %v428, %v426
    %v449 = vpack.c.b16 %v431, %v429
    %v450 = vpack.c.b16 %v432, %v430
    %v451 = vpack.c.b16 %v435, %v433
    %v452 = vpack.c.b16 %v436, %v434
    %469 = vmatprep.subr.bf16.mxu0 %v438
    %470 = vmatpush1.bf16.msra.mxu0 %v437
    %471 = vmatprep.subr.bf16.mxu0 %v440
    %472 = vmatpush1.bf16.msra.mxu0 %v439
    %473 = vmatprep.subr.bf16.mxu0 %v442
    %474 = vmatpush1.bf16.msra.mxu0 %v441
    %475 = vmatprep.subr.bf16.mxu0 %v444
    %476 = vmatpush1.bf16.msra.mxu0 %v443
    %477 = vmatprep.subr.bf16.mxu0 %v446
    %478 = vmatpush1.bf16.msra.mxu0 %v445
    %479 = vmatprep.subr.bf16.mxu0 %v448
    %480 = vmatpush1.bf16.msra.mxu0 %v447
    %481 = vmatprep.subr.bf16.mxu0 %v450
    %482 = vmatpush1.bf16.msra.mxu0 %v449
    %483 = vmatprep.subr.bf16.mxu0 %v452
    %484 = vmatpush1.bf16.msra.mxu0 %v451
    %485 = vmatprep.subr.bf16.mxu0 0
    %486 = vmatpush1.bf16.msra.mxu0 0
    %487 = vmatprep.subr.bf16.mxu0 0
    %488 = vmatpush1.bf16.msra.mxu0 0
    %489 = vmatprep.subr.bf16.mxu0 0
    %490 = vmatpush1.bf16.msra.mxu0 0
    %491 = vmatprep.subr.bf16.mxu0 0
    %492 = vmatpush1.bf16.msra.mxu0 0
    %493 = vmatprep.subr.bf16.mxu0 0
    %494 = vmatpush1.bf16.msra.mxu0 0
    %495 = vmatprep.subr.bf16.mxu0 0
    %496 = vmatpush1.bf16.msra.mxu0 0
    %497 = vmatprep.subr.bf16.mxu0 0
    %498 = vmatpush1.bf16.msra.mxu0 0
    %499 = vmatprep.subr.bf16.mxu0 0
    %500 = vmatpush1.bf16.msra.mxu0 0
    %501 = vmatprep.mubr.bf16.mxu0 0
    %502 = vmatmul.mubr.bf16.gmra.mrb[0].mxu0 %v360
    %v503 = vpop.f32.mrb[0].mxu0
    %v504 = vadd.f32 %v382, %v503
    %v505 = vpop.f32.mrb[0].mxu0
    %v506 = vadd.f32 %v386, %v505
    %v507 = vpop.f32.mrb[0].mxu0
    %v508 = vadd.f32 %v382, %v507
    %v509 = vpop.f32.mrb[0].mxu0
    %v510 = vadd.f32 %v386, %v509
    %511 = vdwg.mxu0
    %v512 = vld [vmem:[%s7] sm:$0x3]
    %v513 = vld [vmem:[#allocation7] sm:$0x3]
    %v514 = vadd.f32 %v504, %v508
    %v515 = vrot.slane %v514, 4
    %v516 = vadd.f32 %v514, %v515
    %v517 = vrot.slane %v516, 2
    %v518 = vadd.f32 %v516, %v517
    %v519 = vrot.slane %v518, 1
    %v520 = vadd.f32 %v518, %v519
    %v521 = vadd.f32 %v506, %v510
    %v522 = vrot.slane %v521, 4
    %v523 = vadd.f32 %v521, %v522
    %v524 = vrot.slane %v523, 2
    %v525 = vadd.f32 %v523, %v524
    %v526 = vrot.slane %v525, 1
    %v527 = vadd.f32 %v525, %v526
    %v528 = vrcp.pop 16.0
    %v529 = vmul.f32 %v520, %v528
    %v530 = vmul.f32 %v527, %v528
    %v531 = vmul.f32 %v504, %v504
    %v532 = vmul.f32 %v506, %v506
    %v533 = vmul.f32 %v508, %v508
    %v534 = vmul.f32 %v510, %v510
    %v535 = vadd.f32 %v531, %v533
    %v536 = vrot.slane %v535, 4
    %v537 = vadd.f32 %v535, %v536
    %v538 = vrot.slane %v537, 2
    %v539 = vadd.f32 %v537, %v538
    %v540 = vrot.slane %v539, 1
    %v541 = vadd.f32 %v539, %v540
    %v542 = vadd.f32 %v532, %v534
    %v543 = vrot.slane %v542, 4
    %v544 = vadd.f32 %v542, %v543
    %v545 = vrot.slane %v544, 2
    %v546 = vadd.f32 %v544, %v545
    %v547 = vrot.slane %v546, 1
    %v548 = vadd.f32 %v546, %v547
    %v549 = vmul.f32 %v541, %v528
    %v550 = vmul.f32 %v548, %v528
    %v551 = vmul.f32 %v529, %v529
    %v552 = vmul.f32 %v530, %v530
    %v553 = vsub.f32 %v549, %v551
    %v554 = vsub.f32 %v550, %v552
    %v555 = vmax.f32 %v553, 0.0
    %v556 = vmax.f32 %v554, 0.0
    %v557 = vadd.f32 %v555, 0.8
    %v558 = vadd.f32 %v556, 0.8
    %v559 = vrsqrt.pop %v557
    %v560 = vrsqrt.pop %v558
    %v563 = vcombine.low %v559, %v560
    %v565 = vunpack.c.l.s4 1966171168
    %v566 = vunpack.c.0.s8 %v565
    %v567 = vlaneseq
    %v568 = vshrl.u32 %v567, 7
    %v569 = vsub.s32 %v566, %v568
    %v570 = vrot.slane %v563, %v569
    %v572 = vunpack.c.l.s4 1966171168
    %v573 = vunpack.c.0.s8 %v572
    %v574 = vlaneseq
    %v575 = vshrl.u32 %v574, 7
    %v576 = vsub.s32 %v573, %v575
    %v577 = vrot.slane %v570, %v576
    %v579 = vmul.f32 %v512, %v577
    %v581 = vlaneseq
    %v582 = vshrl.u32 %v581, 7
    %v583 = vsub.s32 0, %v582
    %v584 = vrot.slane %v579, %v583
    %v585 = vlaneseq
    %v586 = vshrl.u32 %v585, 7
    %v587 = vsub.s32 1, %v586
    %v588 = vrot.slane %v579, %v587
    %v591 = vmul.f32 %v529, %v584
    %v592 = vmul.f32 %v530, %v588
    %v595 = vcombine.low %v591, %v592
    %v597 = vunpack.c.l.s4 1966171168
    %v598 = vunpack.c.0.s8 %v597
    %v599 = vlaneseq
    %v600 = vshrl.u32 %v599, 7
    %v601 = vsub.s32 %v598, %v600
    %v602 = vrot.slane %v595, %v601
    %v604 = vunpack.c.l.s4 1966171168
    %v605 = vunpack.c.0.s8 %v604
    %v606 = vlaneseq
    %v607 = vshrl.u32 %v606, 7
    %v608 = vsub.s32 %v605, %v607
    %v609 = vrot.slane %v602, %v608
    %v611 = vsub.f32 %v513, %v609
    %v612 = vmul.f32 %v504, %v584
    %v613 = vmul.f32 %v506, %v588
    %v614 = vmul.f32 %v508, %v584
    %v615 = vmul.f32 %v510, %v588
    %v617 = vlaneseq
    %v618 = vshrl.u32 %v617, 7
    %v619 = vsub.s32 0, %v618
    %v620 = vrot.slane %v611, %v619
    %v621 = vlaneseq
    %v622 = vshrl.u32 %v621, 7
    %v623 = vsub.s32 1, %v622
    %v624 = vrot.slane %v611, %v623
    %v627 = vadd.f32 %v612, %v620
    %v628 = vadd.f32 %v613, %v624
    %v629 = vadd.f32 %v614, %v620
    %v630 = vadd.f32 %v615, %v624
    %v631 = vmul.f32 %v627, 0.2
    %v632 = vmul.f32 %v628, 0.2
    %v633 = vmul.f32 %v629, 0.2
    %v634 = vmul.f32 %v630, 0.2
    %v635 = vmax.f32 %v627, %v631
    %v636 = vmax.f32 %v628, %v632
    %v637 = vmax.f32 %v629, %v633
    %v638 = vmax.f32 %v630, %v634
    %v639 = vpack.c.bf16 %v637, %v635
    %v640 = vpack.c.bf16 %v638, %v636
    %v641 = vld [vmem:[#allocation9] sm:$0xff]
    %v642 = vld [vmem:[#allocation9 + $0x8] sm:$0xff]
    %v643 = vld [vmem:[#allocation9 + $0x10] sm:$0xff]
    %v644 = vld [vmem:[#allocation9 + $0x18] sm:$0xff]
    %v645 = vld [vmem:[#allocation9 + $0x20] sm:$0xff]
    %v646 = vld [vmem:[#allocation9 + $0x28] sm:$0xff]
    %v647 = vld [vmem:[#allocation9 + $0x30] sm:$0xff]
    %v648 = vld [vmem:[#allocation9 + $0x38] sm:$0xff]
    %v649 = vld [vmem:[#allocation9 + $0x40] sm:$0xff]
    %v650 = vld [vmem:[#allocation9 + $0x48] sm:$0xff]
    %v651 = vld [vmem:[#allocation9 + $0x50] sm:$0xff]
    %v652 = vld [vmem:[#allocation9 + $0x58] sm:$0xff]
    %v653 = vld [vmem:[#allocation9 + $0x60] sm:$0xff]
    %v654 = vld [vmem:[#allocation9 + $0x68] sm:$0xff]
    %v655 = vld [vmem:[#allocation9 + $0x70] sm:$0xff]
    %v656 = vld [vmem:[#allocation9 + $0x78] sm:$0xff]
    %v657 = vld [vmem:[#allocation9 + $0x80] sm:$0xff]
    %v658 = vld [vmem:[#allocation9 + $0x88] sm:$0xff]
    %v659 = vld [vmem:[#allocation9 + $0x90] sm:$0xff]
    %v660 = vld [vmem:[#allocation9 + $0x98] sm:$0xff]
    %v661 = vld [vmem:[#allocation9 + $0xa0] sm:$0xff]
    %v662 = vld [vmem:[#allocation9 + $0xa8] sm:$0xff]
    %v663 = vld [vmem:[#allocation9 + $0xb0] sm:$0xff]
    %v664 = vld [vmem:[#allocation9 + $0xb8] sm:$0xff]
    %v665 = vld [vmem:[#allocation9 + $0xc0] sm:$0xff]
    %v666 = vld [vmem:[#allocation9 + $0xc8] sm:$0xff]
    %v667 = vld [vmem:[#allocation9 + $0xd0] sm:$0xff]
    %v668 = vld [vmem:[#allocation9 + $0xd8] sm:$0xff]
    %v669 = vld [vmem:[#allocation9 + $0xe0] sm:$0xff]
    %v670 = vld [vmem:[#allocation9 + $0xe8] sm:$0xff]
    %v671 = vld [vmem:[#allocation9 + $0xf0] sm:$0xff]
    %v672 = vld [vmem:[#allocation9 + $0xf8] sm:$0xff]
    %v673 = vld [vmem:[#allocation9 + $0x100] sm:$0xff]
    %v674 = vld [vmem:[#allocation9 + $0x108] sm:$0xff]
    %v675 = vld [vmem:[#allocation9 + $0x110] sm:$0xff]
    %v676 = vld [vmem:[#allocation9 + $0x118] sm:$0xff]
    %v677 = vld [vmem:[#allocation9 + $0x120] sm:$0xff]
    %v678 = vld [vmem:[#allocation9 + $0x128] sm:$0xff]
    %v679 = vld [vmem:[#allocation9 + $0x130] sm:$0xff]
    %v680 = vld [vmem:[#allocation9 + $0x138] sm:$0xff]
    %v681 = vld [vmem:[#allocation9 + $0x140] sm:$0xff]
    %v682 = vld [vmem:[#allocation9 + $0x148] sm:$0xff]
    %v683 = vld [vmem:[#allocation9 + $0x150] sm:$0xff]
    %v684 = vld [vmem:[#allocation9 + $0x158] sm:$0xff]
    %v685 = vld [vmem:[#allocation9 + $0x160] sm:$0xff]
    %v686 = vld [vmem:[#allocation9 + $0x168] sm:$0xff]
    %v687 = vld [vmem:[#allocation9 + $0x170] sm:$0xff]
    %v688 = vld [vmem:[#allocation9 + $0x178] sm:$0xff]
    %v689 = vld [vmem:[#allocation9 + $0x180] sm:$0xff]
    %v690 = vld [vmem:[#allocation9 + $0x188] sm:$0xff]
    %v691 = vld [vmem:[#allocation9 + $0x190] sm:$0xff]
    %v692 = vld [vmem:[#allocation9 + $0x198] sm:$0xff]
    %v693 = vld [vmem:[#allocation9 + $0x1a0] sm:$0xff]
    %v694 = vld [vmem:[#allocation9 + $0x1a8] sm:$0xff]
    %v695 = vld [vmem:[#allocation9 + $0x1b0] sm:$0xff]
    %v696 = vld [vmem:[#allocation9 + $0x1b8] sm:$0xff]
    %v697 = vld [vmem:[#allocation9 + $0x1c0] sm:$0xff]
    %v698 = vld [vmem:[#allocation9 + $0x1c8] sm:$0xff]
    %v699 = vld [vmem:[#allocation9 + $0x1d0] sm:$0xff]
    %v700 = vld [vmem:[#allocation9 + $0x1d8] sm:$0xff]
    %v701 = vld [vmem:[#allocation9 + $0x1e0] sm:$0xff]
    %v702 = vld [vmem:[#allocation9 + $0x1e8] sm:$0xff]
    %v703 = vld [vmem:[#allocation9 + $0x1f0] sm:$0xff]
    %v704 = vld [vmem:[#allocation9 + $0x1f8] sm:$0xff]
    %v705 = vld [vmem:[#allocation10] sm:$0xf]
    %v707 = vlaneseq
    %v708 = vshrl.u32 %v707, 7
    %v709 = vsub.s32 0, %v708
    %v710 = vrot.slane %v705, %v709
    %v711 = vlaneseq
    %v712 = vshrl.u32 %v711, 7
    %v713 = vsub.s32 1, %v712
    %v714 = vrot.slane %v705, %v713
    %v715 = vlaneseq
    %v716 = vshrl.u32 %v715, 7
    %v717 = vsub.s32 2, %v716
    %v718 = vrot.slane %v705, %v717
    %v719 = vlaneseq
    %v720 = vshrl.u32 %v719, 7
    %v721 = vsub.s32 3, %v720
    %v722 = vrot.slane %v705, %v721
    %v791 = vunpack.c.l.b16 %v641
    %v792 = vunpack.c.h.b16 %v641
    %v793 = vunpack.c.l.b16 %v642
    %v794 = vunpack.c.h.b16 %v642
    %v795 = vunpack.c.l.b16 %v643
    %v796 = vunpack.c.h.b16 %v643
    %v797 = vunpack.c.l.b16 %v644
    %v798 = vunpack.c.h.b16 %v644
    %v799 = vunpack.c.l.b16 %v645
    %v800 = vunpack.c.h.b16 %v645
    %v801 = vunpack.c.l.b16 %v646
    %v802 = vunpack.c.h.b16 %v646
    %v803 = vunpack.c.l.b16 %v647
    %v804 = vunpack.c.h.b16 %v647
    %v805 = vunpack.c.l.b16 %v648
    %v806 = vunpack.c.h.b16 %v648
    %v807 = vunpack.c.l.b16 %v649
    %v808 = vunpack.c.h.b16 %v649
    %v809 = vunpack.c.l.b16 %v650
    %v810 = vunpack.c.h.b16 %v650
    %v811 = vunpack.c.l.b16 %v651
    %v812 = vunpack.c.h.b16 %v651
    %v813 = vunpack.c.l.b16 %v652
    %v814 = vunpack.c.h.b16 %v652
    %v815 = vunpack.c.l.b16 %v653
    %v816 = vunpack.c.h.b16 %v653
    %v817 = vunpack.c.l.b16 %v654
    %v818 = vunpack.c.h.b16 %v654
    %v819 = vunpack.c.l.b16 %v655
    %v820 = vunpack.c.h.b16 %v655
    %v821 = vunpack.c.l.b16 %v656
    %v822 = vunpack.c.h.b16 %v656
    %v823 = vunpack.c.l.b16 %v657
    %v824 = vunpack.c.h.b16 %v657
    %v825 = vunpack.c.l.b16 %v658
    %v826 = vunpack.c.h.b16 %v658
    %v827 = vunpack.c.l.b16 %v659
    %v828 = vunpack.c.h.b16 %v659
    %v829 = vunpack.c.l.b16 %v660
    %v830 = vunpack.c.h.b16 %v660
    %v831 = vunpack.c.l.b16 %v661
    %v832 = vunpack.c.h.b16 %v661
    %v833 = vunpack.c.l.b16 %v662
    %v834 = vunpack.c.h.b16 %v662
    %v835 = vunpack.c.l.b16 %v663
    %v836 = vunpack.c.h.b16 %v663
    %v837 = vunpack.c.l.b16 %v664
    %v838 = vunpack.c.h.b16 %v664
    %v839 = vunpack.c.l.b16 %v665
    %v840 = vunpack.c.h.b16 %v665
    %v841 = vunpack.c.l.b16 %v666
    %v842 = vunpack.c.h.b16 %v666
    %v843 = vunpack.c.l.b16 %v667
    %v844 = vunpack.c.h.b16 %v667
    %v845 = vunpack.c.l.b16 %v668
    %v846 = vunpack.c.h.b16 %v668
    %v847 = vunpack.c.l.b16 %v669
    %v848 = vunpack.c.h.b16 %v669
    %v849 = vunpack.c.l.b16 %v670
    %v850 = vunpack.c.h.b16 %v670
    %v851 = vunpack.c.l.b16 %v671
    %v852 = vunpack.c.h.b16 %v671
    %v853 = vunpack.c.l.b16 %v672
    %v854 = vunpack.c.h.b16 %v672
    %v855 = vunpack.c.l.b16 %v673
    %v856 = vunpack.c.h.b16 %v673
    %v857 = vunpack.c.l.b16 %v674
    %v858 = vunpack.c.h.b16 %v674
    %v859 = vunpack.c.l.b16 %v675
    %v860 = vunpack.c.h.b16 %v675
    %v861 = vunpack.c.l.b16 %v676
    %v862 = vunpack.c.h.b16 %v676
    %v863 = vunpack.c.l.b16 %v677
    %v864 = vunpack.c.h.b16 %v677
    %v865 = vunpack.c.l.b16 %v678
    %v866 = vunpack.c.h.b16 %v678
    %v867 = vunpack.c.l.b16 %v679
    %v868 = vunpack.c.h.b16 %v679
    %v869 = vunpack.c.l.b16 %v680
    %v870 = vunpack.c.h.b16 %v680
    %v871 = vunpack.c.l.b16 %v681
    %v872 = vunpack.c.h.b16 %v681
    %v873 = vunpack.c.l.b16 %v682
    %v874 = vunpack.c.h.b16 %v682
    %v875 = vunpack.c.l.b16 %v683
    %v876 = vunpack.c.h.b16 %v683
    %v877 = vunpack.c.l.b16 %v684
    %v878 = vunpack.c.h.b16 %v684
    %v879 = vunpack.c.l.b16 %v685
    %v880 = vunpack.c.h.b16 %v685
    %v881 = vunpack.c.l.b16 %v686
    %v882 = vunpack.c.h.b16 %v686
    %v883 = vunpack.c.l.b16 %v687
    %v884 = vunpack.c.h.b16 %v687
    %v885 = vunpack.c.l.b16 %v688
    %v886 = vunpack.c.h.b16 %v688
    %v887 = vunpack.c.l.b16 %v689
    %v888 = vunpack.c.h.b16 %v689
    %v889 = vunpack.c.l.b16 %v690
    %v890 = vunpack.c.h.b16 %v690
    %v891 = vunpack.c.l.b16 %v691
    %v892 = vunpack.c.h.b16 %v691
    %v893 = vunpack.c.l.b16 %v692
    %v894 = vunpack.c.h.b16 %v692
    %v895 = vunpack.c.l.b16 %v693
    %v896 = vunpack.c.h.b16 %v693
    %v897 = vunpack.c.l.b16 %v694
    %v898 = vunpack.c.h.b16 %v694
    %v899 = vunpack.c.l.b16 %v695
    %v900 = vunpack.c.h.b16 %v695
    %v901 = vunpack.c.l.b16 %v696
    %v902 = vunpack.c.h.b16 %v696
    %v903 = vunpack.c.l.b16 %v697
    %v904 = vunpack.c.h.b16 %v697
    %v905 = vunpack.c.l.b16 %v698
    %v906 = vunpack.c.h.b16 %v698
    %v907 = vunpack.c.l.b16 %v699
    %v908 = vunpack.c.h.b16 %v699
    %v909 = vunpack.c.l.b16 %v700
    %v910 = vunpack.c.h.b16 %v700
    %v911 = vunpack.c.l.b16 %v701
    %v912 = vunpack.c.h.b16 %v701
    %v913 = vunpack.c.l.b16 %v702
    %v914 = vunpack.c.h.b16 %v702
    %v915 = vunpack.c.l.b16 %v703
    %v916 = vunpack.c.h.b16 %v703
    %v917 = vunpack.c.l.b16 %v704
    %v918 = vunpack.c.h.b16 %v704
    %v919 = vpack.c.b16 %v795, %v791
    %v920 = vpack.c.b16 %v796, %v792
    %v921 = vpack.c.b16 %v797, %v793
    %v922 = vpack.c.b16 %v798, %v794
    %v923 = vpack.c.b16 %v803, %v799
    %v924 = vpack.c.b16 %v804, %v800
    %v925 = vpack.c.b16 %v805, %v801
    %v926 = vpack.c.b16 %v806, %v802
    %v927 = vpack.c.b16 %v811, %v807
    %v928 = vpack.c.b16 %v812, %v808
    %v929 = vpack.c.b16 %v813, %v809
    %v930 = vpack.c.b16 %v814, %v810
    %v931 = vpack.c.b16 %v819, %v815
    %v932 = vpack.c.b16 %v820, %v816
    %v933 = vpack.c.b16 %v821, %v817
    %v934 = vpack.c.b16 %v822, %v818
    %v935 = vpack.c.b16 %v827, %v823
    %v936 = vpack.c.b16 %v828, %v824
    %v937 = vpack.c.b16 %v829, %v825
    %v938 = vpack.c.b16 %v830, %v826
    %v939 = vpack.c.b16 %v835, %v831
    %v940 = vpack.c.b16 %v836, %v832
    %v941 = vpack.c.b16 %v837, %v833
    %v942 = vpack.c.b16 %v838, %v834
    %v943 = vpack.c.b16 %v843, %v839
    %v944 = vpack.c.b16 %v844, %v840
    %v945 = vpack.c.b16 %v845, %v841
    %v946 = vpack.c.b16 %v846, %v842
    %v947 = vpack.c.b16 %v851, %v847
    %v948 = vpack.c.b16 %v852, %v848
    %v949 = vpack.c.b16 %v853, %v849
    %v950 = vpack.c.b16 %v854, %v850
    %v951 = vpack.c.b16 %v859, %v855
    %v952 = vpack.c.b16 %v860, %v856
    %v953 = vpack.c.b16 %v861, %v857
    %v954 = vpack.c.b16 %v862, %v858
    %v955 = vpack.c.b16 %v867, %v863
    %v956 = vpack.c.b16 %v868, %v864
    %v957 = vpack.c.b16 %v869, %v865
    %v958 = vpack.c.b16 %v870, %v866
    %v959 = vpack.c.b16 %v875, %v871
    %v960 = vpack.c.b16 %v876, %v872
    %v961 = vpack.c.b16 %v877, %v873
    %v962 = vpack.c.b16 %v878, %v874
    %v963 = vpack.c.b16 %v883, %v879
    %v964 = vpack.c.b16 %v884, %v880
    %v965 = vpack.c.b16 %v885, %v881
    %v966 = vpack.c.b16 %v886, %v882
    %v967 = vpack.c.b16 %v891, %v887
    %v968 = vpack.c.b16 %v892, %v888
    %v969 = vpack.c.b16 %v893, %v889
    %v970 = vpack.c.b16 %v894, %v890
    %v971 = vpack.c.b16 %v899, %v895
    %v972 = vpack.c.b16 %v900, %v896
    %v973 = vpack.c.b16 %v901, %v897
    %v974 = vpack.c.b16 %v902, %v898
    %v975 = vpack.c.b16 %v907, %v903
    %v976 = vpack.c.b16 %v908, %v904
    %v977 = vpack.c.b16 %v909, %v905
    %v978 = vpack.c.b16 %v910, %v906
    %v979 = vpack.c.b16 %v915, %v911
    %v980 = vpack.c.b16 %v916, %v912
    %v981 = vpack.c.b16 %v917, %v913
    %v982 = vpack.c.b16 %v918, %v914
    %1047 = vmatprep.subr.bf16.mxu0 %v920
    %1048 = vmatpush1.bf16.msra.mxu0 %v919
    %1049 = vmatprep.subr.bf16.mxu0 %v924
    %1050 = vmatpush1.bf16.msra.mxu0 %v923
    %1051 = vmatprep.subr.bf16.mxu0 %v928
    %1052 = vmatpush1.bf16.msra.mxu0 %v927
    %1053 = vmatprep.subr.bf16.mxu0 %v932
    %1054 = vmatpush1.bf16.msra.mxu0 %v931
    %1055 = vmatprep.subr.bf16.mxu0 %v936
    %1056 = vmatpush1.bf16.msra.mxu0 %v935
    %1057 = vmatprep.subr.bf16.mxu0 %v940
    %1058 = vmatpush1.bf16.msra.mxu0 %v939
    %1059 = vmatprep.subr.bf16.mxu0 %v944
    %1060 = vmatpush1.bf16.msra.mxu0 %v943
    %1061 = vmatprep.subr.bf16.mxu0 %v948
    %1062 = vmatpush1.bf16.msra.mxu0 %v947
    %1063 = vmatprep.subr.bf16.mxu0 %v952
    %1064 = vmatpush1.bf16.msra.mxu0 %v951
    %1065 = vmatprep.subr.bf16.mxu0 %v956
    %1066 = vmatpush1.bf16.msra.mxu0 %v955
    %1067 = vmatprep.subr.bf16.mxu0 %v960
    %1068 = vmatpush1.bf16.msra.mxu0 %v959
    %1069 = vmatprep.subr.bf16.mxu0 %v964
    %1070 = vmatpush1.bf16.msra.mxu0 %v963
    %1071 = vmatprep.subr.bf16.mxu0 %v968
    %1072 = vmatpush1.bf16.msra.mxu0 %v967
    %1073 = vmatprep.subr.bf16.mxu0 %v972
    %1074 = vmatpush1.bf16.msra.mxu0 %v971
    %1075 = vmatprep.subr.bf16.mxu0 %v976
    %1076 = vmatpush1.bf16.msra.mxu0 %v975
    %1077 = vmatprep.subr.bf16.mxu0 %v980
    %1078 = vmatpush1.bf16.msra.mxu0 %v979
    %1079 = vmatprep.mubr.bf16.mxu0 %v640
    %1080 = vmatmul.mubr.bf16.gmra.mrb[0].mxu0 %v639
    %v1081 = vpop.f32.mrb[0].mxu0
    %v1082 = vadd.f32 %v710, %v1081
    %v1083 = vpop.f32.mrb[0].mxu0
    %v1084 = vadd.f32 %v714, %v1083
    %v1085 = vpop.f32.mrb[0].mxu0
    %v1086 = vadd.f32 %v710, %v1085
    %v1087 = vpop.f32.mrb[0].mxu0
    %v1088 = vadd.f32 %v714, %v1087
    %1089 = vdwg.mxu0
    %1090 = vmatprep.subr.bf16.mxu0 %v922
    %1091 = vmatpush1.bf16.msra.mxu0 %v921
    %1092 = vmatprep.subr.bf16.mxu0 %v926
    %1093 = vmatpush1.bf16.msra.mxu0 %v925
    %1094 = vmatprep.subr.bf16.mxu0 %v930
    %1095 = vmatpush1.bf16.msra.mxu0 %v929
    %1096 = vmatprep.subr.bf16.mxu0 %v934
    %1097 = vmatpush1.bf16.msra.mxu0 %v933
    %1098 = vmatprep.subr.bf16.mxu0 %v938
    %1099 = vmatpush1.bf16.msra.mxu0 %v937
    %1100 = vmatprep.subr.bf16.mxu0 %v942
    %1101 = vmatpush1.bf16.msra.mxu0 %v941
    %1102 = vmatprep.subr.bf16.mxu0 %v946
    %1103 = vmatpush1.bf16.msra.mxu0 %v945
    %1104 = vmatprep.subr.bf16.mxu0 %v950
    %1105 = vmatpush1.bf16.msra.mxu0 %v949
    %1106 = vmatprep.subr.bf16.mxu0 %v954
    %1107 = vmatpush1.bf16.msra.mxu0 %v953
    %1108 = vmatprep.subr.bf16.mxu0 %v958
    %1109 = vmatpush1.bf16.msra.mxu0 %v957
    %1110 = vmatprep.subr.bf16.mxu0 %v962
    %1111 = vmatpush1.bf16.msra.mxu0 %v961
    %1112 = vmatprep.subr.bf16.mxu0 %v966
    %1113 = vmatpush1.bf16.msra.mxu0 %v965
    %1114 = vmatprep.subr.bf16.mxu0 %v970
    %1115 = vmatpush1.bf16.msra.mxu0 %v969
    %1116 = vmatprep.subr.bf16.mxu0 %v974
    %1117 = vmatpush1.bf16.msra.mxu0 %v973
    %1118 = vmatprep.subr.bf16.mxu0 %v978
    %1119 = vmatpush1.bf16.msra.mxu0 %v977
    %1120 = vmatprep.subr.bf16.mxu0 %v982
    %1121 = vmatpush1.bf16.msra.mxu0 %v981
    %1122 = vmatprep.mubr.bf16.mxu0 %v640
    %1123 = vmatmul.mubr.bf16.gmra.mrb[0].mxu0 %v639
    %v1124 = vpop.f32.mrb[0].mxu0
    %v1125 = vadd.f32 %v718, %v1124
    %v1126 = vpop.f32.mrb[0].mxu0
    %v1127 = vadd.f32 %v722, %v1126
    %v1128 = vpop.f32.mrb[0].mxu0
    %v1129 = vadd.f32 %v718, %v1128
    %v1130 = vpop.f32.mrb[0].mxu0
    %v1131 = vadd.f32 %v722, %v1130
    %1132 = vdwg.mxu0
    %v1133 = vld [vmem:[%s11] sm:$0xf]
    %v1134 = vld [vmem:[#allocation12] sm:$0xf]
    %v1135 = vadd.f32 %v1082, %v1086
    %v1136 = vrot.slane %v1135, 4
    %v1137 = vadd.f32 %v1135, %v1136
    %v1138 = vrot.slane %v1137, 2
    %v1139 = vadd.f32 %v1137, %v1138
    %v1140 = vrot.slane %v1139, 1
    %v1141 = vadd.f32 %v1139, %v1140
    %v1142 = vadd.f32 %v1084, %v1088
    %v1143 = vrot.slane %v1142, 4
    %v1144 = vadd.f32 %v1142, %v1143
    %v1145 = vrot.slane %v1144, 2
    %v1146 = vadd.f32 %v1144, %v1145
    %v1147 = vrot.slane %v1146, 1
    %v1148 = vadd.f32 %v1146, %v1147
    %v1149 = vadd.f32 %v1125, %v1129
    %v1150 = vrot.slane %v1149, 4
    %v1151 = vadd.f32 %v1149, %v1150
    %v1152 = vrot.slane %v1151, 2
    %v1153 = vadd.f32 %v1151, %v1152
    %v1154 = vrot.slane %v1153, 1
    %v1155 = vadd.f32 %v1153, %v1154
    %v1156 = vadd.f32 %v1127, %v1131
    %v1157 = vrot.slane %v1156, 4
    %v1158 = vadd.f32 %v1156, %v1157
    %v1159 = vrot.slane %v1158, 2
    %v1160 = vadd.f32 %v1158, %v1159
    %v1161 = vrot.slane %v1160, 1
    %v1162 = vadd.f32 %v1160, %v1161
    %v1163 = vmul.f32 %v1141, %v528
    %v1164 = vmul.f32 %v1148, %v528
    %v1165 = vmul.f32 %v1155, %v528
    %v1166 = vmul.f32 %v1162, %v528
    %v1167 = vmul.f32 %v1082, %v1082
    %v1168 = vmul.f32 %v1084, %v1084
    %v1169 = vmul.f32 %v1125, %v1125
    %v1170 = vmul.f32 %v1127, %v1127
    %v1171 = vmul.f32 %v1086, %v1086
    %v1172 = vmul.f32 %v1088, %v1088
    %v1173 = vmul.f32 %v1129, %v1129
    %v1174 = vmul.f32 %v1131, %v1131
    %v1175 = vadd.f32 %v1167, %v1171
    %v1176 = vrot.slane %v1175, 4
    %v1177 = vadd.f32 %v1175, %v1176
    %v1178 = vrot.slane %v1177, 2
    %v1179 = vadd.f32 %v1177, %v1178
    %v1180 = vrot.slane %v1179, 1
    %v1181 = vadd.f32 %v1179, %v1180
    %v1182 = vadd.f32 %v1168, %v1172
    %v1183 = vrot.slane %v1182, 4
    %v1184 = vadd.f32 %v1182, %v1183
    %v1185 = vrot.slane %v1184, 2
    %v1186 = vadd.f32 %v1184, %v1185
    %v1187 = vrot.slane %v1186, 1
    %v1188 = vadd.f32 %v1186, %v1187
    %v1189 = vadd.f32 %v1169, %v1173
    %v1190 = vrot.slane %v1189, 4
    %v1191 = vadd.f32 %v1189, %v1190
    %v1192 = vrot.slane %v1191, 2
    %v1193 = vadd.f32 %v1191, %v1192
    %v1194 = vrot.slane %v1193, 1
    %v1195 = vadd.f32 %v1193, %v1194
    %v1196 = vadd.f32 %v1170, %v1174
    %v1197 = vrot.slane %v1196, 4
    %v1198 = vadd.f32 %v1196, %v1197
    %v1199 = vrot.slane %v1198, 2
    %v1200 = vadd.f32 %v1198, %v1199
    %v1201 = vrot.slane %v1200, 1
    %v1202 = vadd.f32 %v1200, %v1201
    %v1203 = vmul.f32 %v1181, %v528
    %v1204 = vmul.f32 %v1188, %v528
    %v1205 = vmul.f32 %v1195, %v528
    %v1206 = vmul.f32 %v1202, %v528
    %v1207 = vmul.f32 %v1163, %v1163
    %v1208 = vmul.f32 %v1164, %v1164
    %v1209 = vmul.f32 %v1165, %v1165
    %v1210 = vmul.f32 %v1166, %v1166
    %v1211 = vsub.f32 %v1203, %v1207
    %v1212 = vsub.f32 %v1204, %v1208
    %v1213 = vsub.f32 %v1205, %v1209
    %v1214 = vsub.f32 %v1206, %v1210
    %v1215 = vmax.f32 %v1211, 0.0
    %v1216 = vmax.f32 %v1212, 0.0
    %v1217 = vmax.f32 %v1213, 0.0
    %v1218 = vmax.f32 %v1214, 0.0
    %v1219 = vadd.f32 %v1215, 0.8
    %v1220 = vadd.f32 %v1216, 0.8
    %v1221 = vadd.f32 %v1217, 0.8
    %v1222 = vadd.f32 %v1218, 0.8
    %v1223 = vrsqrt.pop %v1219
    %v1224 = vrsqrt.pop %v1220
    %v1225 = vrsqrt.pop %v1221
    %v1226 = vrsqrt.pop %v1222
    %v1231 = vcombine.low %v1223, %v1224
    %v1232 = vcombine.low %v1225, %v1226
    %v1234 = vunpack.c.l.s4 1966171168
    %v1235 = vunpack.c.0.s8 %v1234
    %v1236 = vlaneseq
    %v1237 = vshrl.u32 %v1236, 7
    %v1238 = vsub.s32 %v1235, %v1237
    %v1239 = vrot.slane %v1231, %v1238
    %v1241 = vunpack.c.l.s4 1966171168
    %v1242 = vunpack.c.0.s8 %v1241
    %v1243 = vlaneseq
    %v1244 = vshrl.u32 %v1243, 7
    %v1245 = vsub.s32 %v1242, %v1244
    %v1246 = vrot.slane %v1232, %v1245
    %v1247 = vcombine.low %v1239, %v1246
    %v1249 = vunpack.c.l.s4 1966171168
    %v1250 = vunpack.c.0.s8 %v1249
    %v1251 = vlaneseq
    %v1252 = vshrl.u32 %v1251, 7
    %v1253 = vsub.s32 %v1250, %v1252
    %v1254 = vrot.slane %v1247, %v1253
    %v1256 = vmul.f32 %v1133, %v1254
    %v1258 = vlaneseq
    %v1259 = vshrl.u32 %v1258, 7
    %v1260 = vsub.s32 0, %v1259
    %v1261 = vrot.slane %v1256, %v1260
    %v1262 = vlaneseq
    %v1263 = vshrl.u32 %v1262, 7
    %v1264 = vsub.s32 1, %v1263
    %v1265 = vrot.slane %v1256, %v1264
    %v1266 = vlaneseq
    %v1267 = vshrl.u32 %v1266, 7
    %v1268 = vsub.s32 2, %v1267
    %v1269 = vrot.slane %v1256, %v1268
    %v1270 = vlaneseq
    %v1271 = vshrl.u32 %v1270, 7
    %v1272 = vsub.s32 3, %v1271
    %v1273 = vrot.slane %v1256, %v1272
    %v1278 = vmul.f32 %v1163, %v1261
    %v1279 = vmul.f32 %v1164, %v1265
    %v1280 = vmul.f32 %v1165, %v1269
    %v1281 = vmul.f32 %v1166, %v1273
    %v1286 = vcombine.low %v1278, %v1279
    %v1287 = vcombine.low %v1280, %v1281
    %v1289 = vunpack.c.l.s4 1966171168
    %v1290 = vunpack.c.0.s8 %v1289
    %v1291 = vlaneseq
    %v1292 = vshrl.u32 %v1291, 7
    %v1293 = vsub.s32 %v1290, %v1292
    %v1294 = vrot.slane %v1286, %v1293
    %v1296 = vunpack.c.l.s4 1966171168
    %v1297 = vunpack.c.0.s8 %v1296
    %v1298 = vlaneseq
    %v1299 = vshrl.u32 %v1298, 7
    %v1300 = vsub.s32 %v1297, %v1299
    %v1301 = vrot.slane %v1287, %v1300
    %v1302 = vcombine.low %v1294, %v1301
    %v1304 = vunpack.c.l.s4 1966171168
    %v1305 = vunpack.c.0.s8 %v1304
    %v1306 = vlaneseq
    %v1307 = vshrl.u32 %v1306, 7
    %v1308 = vsub.s32 %v1305, %v1307
    %v1309 = vrot.slane %v1302, %v1308
    %v1311 = vsub.f32 %v1134, %v1309
    %v1312 = vmul.f32 %v1082, %v1261
    %v1313 = vmul.f32 %v1084, %v1265
    %v1314 = vmul.f32 %v1125, %v1269
    %v1315 = vmul.f32 %v1127, %v1273
    %v1316 = vmul.f32 %v1086, %v1261
    %v1317 = vmul.f32 %v1088, %v1265
    %v1318 = vmul.f32 %v1129, %v1269
    %v1319 = vmul.f32 %v1131, %v1273
    %v1321 = vlaneseq
    %v1322 = vshrl.u32 %v1321, 7
    %v1323 = vsub.s32 0, %v1322
    %v1324 = vrot.slane %v1311, %v1323
    %v1325 = vlaneseq
    %v1326 = vshrl.u32 %v1325, 7
    %v1327 = vsub.s32 1, %v1326
    %v1328 = vrot.slane %v1311, %v1327
    %v1329 = vlaneseq
    %v1330 = vshrl.u32 %v1329, 7
    %v1331 = vsub.s32 2, %v1330
    %v1332 = vrot.slane %v1311, %v1331
    %v1333 = vlaneseq
    %v1334 = vshrl.u32 %v1333, 7
    %v1335 = vsub.s32 3, %v1334
    %v1336 = vrot.slane %v1311, %v1335
    %v1341 = vadd.f32 %v1312, %v1324
    %v1342 = vadd.f32 %v1313, %v1328
    %v1343 = vadd.f32 %v1314, %v1332
    %v1344 = vadd.f32 %v1315, %v1336
    %v1345 = vadd.f32 %v1316, %v1324
    %v1346 = vadd.f32 %v1317, %v1328
    %v1347 = vadd.f32 %v1318, %v1332
    %v1348 = vadd.f32 %v1319, %v1336
    %v1349 = vmul.f32 %v1341, 0.2
    %v1350 = vmul.f32 %v1342, 0.2
    %v1351 = vmul.f32 %v1343, 0.2
    %v1352 = vmul.f32 %v1344, 0.2
    %v1353 = vmul.f32 %v1345, 0.2
    %v1354 = vmul.f32 %v1346, 0.2
    %v1355 = vmul.f32 %v1347, 0.2
    %v1356 = vmul.f32 %v1348, 0.2
    %v1357 = vmax.f32 %v1341, %v1349
    %v1358 = vmax.f32 %v1342, %v1350
    %v1359 = vmax.f32 %v1343, %v1351
    %v1360 = vmax.f32 %v1344, %v1352
    %v1361 = vmax.f32 %v1345, %v1353
    %v1362 = vmax.f32 %v1346, %v1354
    %v1363 = vmax.f32 %v1347, %v1355
    %v1364 = vmax.f32 %v1348, %v1356
    %v1365 = vpack.c.bf16 %v1361, %v1357
    %v1366 = vpack.c.bf16 %v1362, %v1358
    %v1367 = vpack.c.bf16 %v1363, %v1359
    %v1368 = vpack.c.bf16 %v1364, %v1360
    %v1369 = vld [vmem:[#allocation13] sm:$0xff]
    %v1370 = vld [vmem:[#allocation13 + $0x8] sm:$0xff]
    %v1371 = vld [vmem:[#allocation13 + $0x10] sm:$0xff]
    %v1372 = vld [vmem:[#allocation13 + $0x18] sm:$0xff]
    %v1373 = vld [vmem:[#allocation13 + $0x20] sm:$0xff]
    %v1374 = vld [vmem:[#allocation13 + $0x28] sm:$0xff]
    %v1375 = vld [vmem:[#allocation13 + $0x30] sm:$0xff]
    %v1376 = vld [vmem:[#allocation13 + $0x38] sm:$0xff]
    %v1377 = vld [vmem:[#allocation13 + $0x40] sm:$0xff]
    %v1378 = vld [vmem:[#allocation13 + $0x48] sm:$0xff]
    %v1379 = vld [vmem:[#allocation13 + $0x50] sm:$0xff]
    %v1380 = vld [vmem:[#allocation13 + $0x58] sm:$0xff]
    %v1381 = vld [vmem:[#allocation13 + $0x60] sm:$0xff]
    %v1382 = vld [vmem:[#allocation13 + $0x68] sm:$0xff]
    %v1383 = vld [vmem:[#allocation13 + $0x70] sm:$0xff]
    %v1384 = vld [vmem:[#allocation13 + $0x78] sm:$0xff]
    %v1385 = vld [vmem:[#allocation13 + $0x80] sm:$0xff]
    %v1386 = vld [vmem:[#allocation13 + $0x88] sm:$0xff]
    %v1387 = vld [vmem:[#allocation13 + $0x90] sm:$0xff]
    %v1388 = vld [vmem:[#allocation13 + $0x98] sm:$0xff]
    %v1389 = vld [vmem:[#allocation13 + $0xa0] sm:$0xff]
    %v1390 = vld [vmem:[#allocation13 + $0xa8] sm:$0xff]
    %v1391 = vld [vmem:[#allocation13 + $0xb0] sm:$0xff]
    %v1392 = vld [vmem:[#allocation13 + $0xb8] sm:$0xff]
    %v1393 = vld [vmem:[#allocation13 + $0xc0] sm:$0xff]
    %v1394 = vld [vmem:[#allocation13 + $0xc8] sm:$0xff]
    %v1395 = vld [vmem:[#allocation13 + $0xd0] sm:$0xff]
    %v1396 = vld [vmem:[#allocation13 + $0xd8] sm:$0xff]
    %v1397 = vld [vmem:[#allocation13 + $0xe0] sm:$0xff]
    %v1398 = vld [vmem:[#allocation13 + $0xe8] sm:$0xff]
    %v1399 = vld [vmem:[#allocation13 + $0xf0] sm:$0xff]
    %v1400 = vld [vmem:[#allocation13 + $0xf8] sm:$0xff]
    %v1401 = vld [vmem:[#allocation13 + $0x100] sm:$0xff]
    %v1402 = vld [vmem:[#allocation13 + $0x108] sm:$0xff]
    %v1403 = vld [vmem:[#allocation13 + $0x110] sm:$0xff]
    %v1404 = vld [vmem:[#allocation13 + $0x118] sm:$0xff]
    %v1405 = vld [vmem:[#allocation13 + $0x120] sm:$0xff]
    %v1406 = vld [vmem:[#allocation13 + $0x128] sm:$0xff]
    %v1407 = vld [vmem:[#allocation13 + $0x130] sm:$0xff]
    %v1408 = vld [vmem:[#allocation13 + $0x138] sm:$0xff]
    %v1409 = vld [vmem:[#allocation13 + $0x140] sm:$0xff]
    %v1410 = vld [vmem:[#allocation13 + $0x148] sm:$0xff]
    %v1411 = vld [vmem:[#allocation13 + $0x150] sm:$0xff]
    %v1412 = vld [vmem:[#allocation13 + $0x158] sm:$0xff]
    %v1413 = vld [vmem:[#allocation13 + $0x160] sm:$0xff]
    %v1414 = vld [vmem:[#allocation13 + $0x168] sm:$0xff]
    %v1415 = vld [vmem:[#allocation13 + $0x170] sm:$0xff]
    %v1416 = vld [vmem:[#allocation13 + $0x178] sm:$0xff]
    %v1417 = vld [vmem:[#allocation13 + $0x180] sm:$0xff]
    %v1418 = vld [vmem:[#allocation13 + $0x188] sm:$0xff]
    %v1419 = vld [vmem:[#allocation13 + $0x190] sm:$0xff]
    %v1420 = vld [vmem:[#allocation13 + $0x198] sm:$0xff]
    %v1421 = vld [vmem:[#allocation13 + $0x1a0] sm:$0xff]
    %v1422 = vld [vmem:[#allocation13 + $0x1a8] sm:$0xff]
    %v1423 = vld [vmem:[#allocation13 + $0x1b0] sm:$0xff]
    %v1424 = vld [vmem:[#allocation13 + $0x1b8] sm:$0xff]
    %v1425 = vld [vmem:[#allocation13 + $0x1c0] sm:$0xff]
    %v1426 = vld [vmem:[#allocation13 + $0x1c8] sm:$0xff]
    %v1427 = vld [vmem:[#allocation13 + $0x1d0] sm:$0xff]
    %v1428 = vld [vmem:[#allocation13 + $0x1d8] sm:$0xff]
    %v1429 = vld [vmem:[#allocation13 + $0x1e0] sm:$0xff]
    %v1430 = vld [vmem:[#allocation13 + $0x1e8] sm:$0xff]
    %v1431 = vld [vmem:[#allocation13 + $0x1f0] sm:$0xff]
    %v1432 = vld [vmem:[#allocation13 + $0x1f8] sm:$0xff]
    %v1433 = vld [vmem:[#allocation13 + $0x200] sm:$0xff]
    %v1434 = vld [vmem:[#allocation13 + $0x208] sm:$0xff]
    %v1435 = vld [vmem:[#allocation13 + $0x210] sm:$0xff]
    %v1436 = vld [vmem:[#allocation13 + $0x218] sm:$0xff]
    %v1437 = vld [vmem:[#allocation13 + $0x220] sm:$0xff]
    %v1438 = vld [vmem:[#allocation13 + $0x228] sm:$0xff]
    %v1439 = vld [vmem:[#allocation13 + $0x230] sm:$0xff]
    %v1440 = vld [vmem:[#allocation13 + $0x238] sm:$0xff]
    %v1441 = vld [vmem:[#allocation13 + $0x240] sm:$0xff]
    %v1442 = vld [vmem:[#allocation13 + $0x248] sm:$0xff]
    %v1443 = vld [vmem:[#allocation13 + $0x250] sm:$0xff]
    %v1444 = vld [vmem:[#allocation13 + $0x258] sm:$0xff]
    %v1445 = vld [vmem:[#allocation13 + $0x260] sm:$0xff]
    %v1446 = vld [vmem:[#allocation13 + $0x268] sm:$0xff]
    %v1447 = vld [vmem:[#allocation13 + $0x270] sm:$0xff]
    %v1448 = vld [vmem:[#allocation13 + $0x278] sm:$0xff]
    %v1449 = vld [vmem:[#allocation13 + $0x280] sm:$0xff]
    %v1450 = vld [vmem:[#allocation13 + $0x288] sm:$0xff]
    %v1451 = vld [vmem:[#allocation13 + $0x290] sm:$0xff]
    %v1452 = vld [vmem:[#allocation13 + $0x298] sm:$0xff]
    %v1453 = vld [vmem:[#allocation13 + $0x2a0] sm:$0xff]
    %v1454 = vld [vmem:[#allocation13 + $0x2a8] sm:$0xff]
    %v1455 = vld [vmem:[#allocation13 + $0x2b0] sm:$0xff]
    %v1456 = vld [vmem:[#allocation13 + $0x2b8] sm:$0xff]
    %v1457 = vld [vmem:[#allocation13 + $0x2c0] sm:$0xff]
    %v1458 = vld [vmem:[#allocation13 + $0x2c8] sm:$0xff]
    %v1459 = vld [vmem:[#allocation13 + $0x2d0] sm:$0xff]
    %v1460 = vld [vmem:[#allocation13 + $0x2d8] sm:$0xff]
    %v1461 = vld [vmem:[#allocation13 + $0x2e0] sm:$0xff]
    %v1462 = vld [vmem:[#allocation13 + $0x2e8] sm:$0xff]
    %v1463 = vld [vmem:[#allocation13 + $0x2f0] sm:$0xff]
    %v1464 = vld [vmem:[#allocation13 + $0x2f8] sm:$0xff]
    %v1465 = vld [vmem:[#allocation13 + $0x300] sm:$0xff]
    %v1466 = vld [vmem:[#allocation13 + $0x308] sm:$0xff]
    %v1467 = vld [vmem:[#allocation13 + $0x310] sm:$0xff]
    %v1468 = vld [vmem:[#allocation13 + $0x318] sm:$0xff]
    %v1469 = vld [vmem:[#allocation13 + $0x320] sm:$0xff]
    %v1470 = vld [vmem:[#allocation13 + $0x328] sm:$0xff]
    %v1471 = vld [vmem:[#allocation13 + $0x330] sm:$0xff]
    %v1472 = vld [vmem:[#allocation13 + $0x338] sm:$0xff]
    %v1473 = vld [vmem:[#allocation13 + $0x340] sm:$0xff]
    %v1474 = vld [vmem:[#allocation13 + $0x348] sm:$0xff]
    %v1475 = vld [vmem:[#allocation13 + $0x350] sm:$0xff]
    %v1476 = vld [vmem:[#allocation13 + $0x358] sm:$0xff]
    %v1477 = vld [vmem:[#allocation13 + $0x360] sm:$0xff]
    %v1478 = vld [vmem:[#allocation13 + $0x368] sm:$0xff]
    %v1479 = vld [vmem:[#allocation13 + $0x370] sm:$0xff]
    %v1480 = vld [vmem:[#allocation13 + $0x378] sm:$0xff]
    %v1481 = vld [vmem:[#allocation13 + $0x380] sm:$0xff]
    %v1482 = vld [vmem:[#allocation13 + $0x388] sm:$0xff]
    %v1483 = vld [vmem:[#allocation13 + $0x390] sm:$0xff]
    %v1484 = vld [vmem:[#allocation13 + $0x398] sm:$0xff]
    %v1485 = vld [vmem:[#allocation13 + $0x3a0] sm:$0xff]
    %v1486 = vld [vmem:[#allocation13 + $0x3a8] sm:$0xff]
    %v1487 = vld [vmem:[#allocation13 + $0x3b0] sm:$0xff]
    %v1488 = vld [vmem:[#allocation13 + $0x3b8] sm:$0xff]
    %v1489 = vld [vmem:[#allocation13 + $0x3c0] sm:$0xff]
    %v1490 = vld [vmem:[#allocation13 + $0x3c8] sm:$0xff]
    %v1491 = vld [vmem:[#allocation13 + $0x3d0] sm:$0xff]
    %v1492 = vld [vmem:[#allocation13 + $0x3d8] sm:$0xff]
    %v1493 = vld [vmem:[#allocation13 + $0x3e0] sm:$0xff]
    %v1494 = vld [vmem:[#allocation13 + $0x3e8] sm:$0xff]
    %v1495 = vld [vmem:[#allocation13 + $0x3f0] sm:$0xff]
    %v1496 = vld [vmem:[#allocation13 + $0x3f8] sm:$0xff]
    %v1497 = vld [vmem:[#allocation13 + $0x400] sm:$0xff]
    %v1498 = vld [vmem:[#allocation13 + $0x408] sm:$0xff]
    %v1499 = vld [vmem:[#allocation13 + $0x410] sm:$0xff]
    %v1500 = vld [vmem:[#allocation13 + $0x418] sm:$0xff]
    %v1501 = vld [vmem:[#allocation13 + $0x420] sm:$0xff]
    %v1502 = vld [vmem:[#allocation13 + $0x428] sm:$0xff]
    %v1503 = vld [vmem:[#allocation13 + $0x430] sm:$0xff]
    %v1504 = vld [vmem:[#allocation13 + $0x438] sm:$0xff]
    %v1505 = vld [vmem:[#allocation13 + $0x440] sm:$0xff]
    %v1506 = vld [vmem:[#allocation13 + $0x448] sm:$0xff]
    %v1507 = vld [vmem:[#allocation13 + $0x450] sm:$0xff]
    %v1508 = vld [vmem:[#allocation13 + $0x458] sm:$0xff]
    %v1509 = vld [vmem:[#allocation13 + $0x460] sm:$0xff]
    %v1510 = vld [vmem:[#allocation13 + $0x468] sm:$0xff]
    %v1511 = vld [vmem:[#allocation13 + $0x470] sm:$0xff]
    %v1512 = vld [vmem:[#allocation13 + $0x478] sm:$0xff]
    %v1513 = vld [vmem:[#allocation13 + $0x480] sm:$0xff]
    %v1514 = vld [vmem:[#allocation13 + $0x488] sm:$0xff]
    %v1515 = vld [vmem:[#allocation13 + $0x490] sm:$0xff]
    %v1516 = vld [vmem:[#allocation13 + $0x498] sm:$0xff]
    %v1517 = vld [vmem:[#allocation13 + $0x4a0] sm:$0xff]
    %v1518 = vld [vmem:[#allocation13 + $0x4a8] sm:$0xff]
    %v1519 = vld [vmem:[#allocation13 + $0x4b0] sm:$0xff]
    %v1520 = vld [vmem:[#allocation13 + $0x4b8] sm:$0xff]
    %v1521 = vld [vmem:[#allocation13 + $0x4c0] sm:$0xff]
    %v1522 = vld [vmem:[#allocation13 + $0x4c8] sm:$0xff]
    %v1523 = vld [vmem:[#allocation13 + $0x4d0] sm:$0xff]
    %v1524 = vld [vmem:[#allocation13 + $0x4d8] sm:$0xff]
    %v1525 = vld [vmem:[#allocation13 + $0x4e0] sm:$0xff]
    %v1526 = vld [vmem:[#allocation13 + $0x4e8] sm:$0xff]
    %v1527 = vld [vmem:[#allocation13 + $0x4f0] sm:$0xff]
    %v1528 = vld [vmem:[#allocation13 + $0x4f8] sm:$0xff]
    %v1529 = vld [vmem:[#allocation13 + $0x500] sm:$0xff]
    %v1530 = vld [vmem:[#allocation13 + $0x508] sm:$0xff]
    %v1531 = vld [vmem:[#allocation13 + $0x510] sm:$0xff]
    %v1532 = vld [vmem:[#allocation13 + $0x518] sm:$0xff]
    %v1533 = vld [vmem:[#allocation13 + $0x520] sm:$0xff]
    %v1534 = vld [vmem:[#allocation13 + $0x528] sm:$0xff]
    %v1535 = vld [vmem:[#allocation13 + $0x530] sm:$0xff]
    %v1536 = vld [vmem:[#allocation13 + $0x538] sm:$0xff]
    %v1537 = vld [vmem:[#allocation13 + $0x540] sm:$0xff]
    %v1538 = vld [vmem:[#allocation13 + $0x548] sm:$0xff]
    %v1539 = vld [vmem:[#allocation13 + $0x550] sm:$0xff]
    %v1540 = vld [vmem:[#allocation13 + $0x558] sm:$0xff]
    %v1541 = vld [vmem:[#allocation13 + $0x560] sm:$0xff]
    %v1542 = vld [vmem:[#allocation13 + $0x568] sm:$0xff]
    %v1543 = vld [vmem:[#allocation13 + $0x570] sm:$0xff]
    %v1544 = vld [vmem:[#allocation13 + $0x578] sm:$0xff]
    %v1545 = vld [vmem:[#allocation13 + $0x580] sm:$0xff]
    %v1546 = vld [vmem:[#allocation13 + $0x588] sm:$0xff]
    %v1547 = vld [vmem:[#allocation13 + $0x590] sm:$0xff]
    %v1548 = vld [vmem:[#allocation13 + $0x598] sm:$0xff]
    %v1549 = vld [vmem:[#allocation13 + $0x5a0] sm:$0xff]
    %v1550 = vld [vmem:[#allocation13 + $0x5a8] sm:$0xff]
    %v1551 = vld [vmem:[#allocation13 + $0x5b0] sm:$0xff]
    %v1552 = vld [vmem:[#allocation13 + $0x5b8] sm:$0xff]
    %v1553 = vld [vmem:[#allocation13 + $0x5c0] sm:$0xff]
    %v1554 = vld [vmem:[#allocation13 + $0x5c8] sm:$0xff]
    %v1555 = vld [vmem:[#allocation13 + $0x5d0] sm:$0xff]
    %v1556 = vld [vmem:[#allocation13 + $0x5d8] sm:$0xff]
    %v1557 = vld [vmem:[#allocation13 + $0x5e0] sm:$0xff]
    %v1558 = vld [vmem:[#allocation13 + $0x5e8] sm:$0xff]
    %v1559 = vld [vmem:[#allocation13 + $0x5f0] sm:$0xff]
    %v1560 = vld [vmem:[#allocation13 + $0x5f8] sm:$0xff]
    %v1561 = vld [vmem:[#allocation13 + $0x600] sm:$0xff]
    %v1562 = vld [vmem:[#allocation13 + $0x608] sm:$0xff]
    %v1563 = vld [vmem:[#allocation13 + $0x610] sm:$0xff]
    %v1564 = vld [vmem:[#allocation13 + $0x618] sm:$0xff]
    %v1565 = vld [vmem:[#allocation13 + $0x620] sm:$0xff]
    %v1566 = vld [vmem:[#allocation13 + $0x628] sm:$0xff]
    %v1567 = vld [vmem:[#allocation13 + $0x630] sm:$0xff]
    %v1568 = vld [vmem:[#allocation13 + $0x638] sm:$0xff]
    %v1569 = vld [vmem:[#allocation13 + $0x640] sm:$0xff]
    %v1570 = vld [vmem:[#allocation13 + $0x648] sm:$0xff]
    %v1571 = vld [vmem:[#allocation13 + $0x650] sm:$0xff]
    %v1572 = vld [vmem:[#allocation13 + $0x658] sm:$0xff]
    %v1573 = vld [vmem:[#allocation13 + $0x660] sm:$0xff]
    %v1574 = vld [vmem:[#allocation13 + $0x668] sm:$0xff]
    %v1575 = vld [vmem:[#allocation13 + $0x670] sm:$0xff]
    %v1576 = vld [vmem:[#allocation13 + $0x678] sm:$0xff]
    %v1577 = vld [vmem:[#allocation13 + $0x680] sm:$0xff]
    %v1578 = vld [vmem:[#allocation13 + $0x688] sm:$0xff]
    %v1579 = vld [vmem:[#allocation13 + $0x690] sm:$0xff]
    %v1580 = vld [vmem:[#allocation13 + $0x698] sm:$0xff]
    %v1581 = vld [vmem:[#allocation13 + $0x6a0] sm:$0xff]
    %v1582 = vld [vmem:[#allocation13 + $0x6a8] sm:$0xff]
    %v1583 = vld [vmem:[#allocation13 + $0x6b0] sm:$0xff]
    %v1584 = vld [vmem:[#allocation13 + $0x6b8] sm:$0xff]
    %v1585 = vld [vmem:[#allocation13 + $0x6c0] sm:$0xff]
    %v1586 = vld [vmem:[#allocation13 + $0x6c8] sm:$0xff]
    %v1587 = vld [vmem:[#allocation13 + $0x6d0] sm:$0xff]
    %v1588 = vld [vmem:[#allocation13 + $0x6d8] sm:$0xff]
    %v1589 = vld [vmem:[#allocation13 + $0x6e0] sm:$0xff]
    %v1590 = vld [vmem:[#allocation13 + $0x6e8] sm:$0xff]
    %v1591 = vld [vmem:[#allocation13 + $0x6f0] sm:$0xff]
    %v1592 = vld [vmem:[#allocation13 + $0x6f8] sm:$0xff]
    %v1593 = vld [vmem:[#allocation13 + $0x700] sm:$0xff]
    %v1594 = vld [vmem:[#allocation13 + $0x708] sm:$0xff]
    %v1595 = vld [vmem:[#allocation13 + $0x710] sm:$0xff]
    %v1596 = vld [vmem:[#allocation13 + $0x718] sm:$0xff]
    %v1597 = vld [vmem:[#allocation13 + $0x720] sm:$0xff]
    %v1598 = vld [vmem:[#allocation13 + $0x728] sm:$0xff]
    %v1599 = vld [vmem:[#allocation13 + $0x730] sm:$0xff]
    %v1600 = vld [vmem:[#allocation13 + $0x738] sm:$0xff]
    %v1601 = vld [vmem:[#allocation13 + $0x740] sm:$0xff]
    %v1602 = vld [vmem:[#allocation13 + $0x748] sm:$0xff]
    %v1603 = vld [vmem:[#allocation13 + $0x750] sm:$0xff]
    %v1604 = vld [vmem:[#allocation13 + $0x758] sm:$0xff]
    %v1605 = vld [vmem:[#allocation13 + $0x760] sm:$0xff]
    %v1606 = vld [vmem:[#allocation13 + $0x768] sm:$0xff]
    %v1607 = vld [vmem:[#allocation13 + $0x770] sm:$0xff]
    %v1608 = vld [vmem:[#allocation13 + $0x778] sm:$0xff]
    %v1609 = vld [vmem:[#allocation13 + $0x780] sm:$0xff]
    %v1610 = vld [vmem:[#allocation13 + $0x788] sm:$0xff]
    %v1611 = vld [vmem:[#allocation13 + $0x790] sm:$0xff]
    %v1612 = vld [vmem:[#allocation13 + $0x798] sm:$0xff]
    %v1613 = vld [vmem:[#allocation13 + $0x7a0] sm:$0xff]
    %v1614 = vld [vmem:[#allocation13 + $0x7a8] sm:$0xff]
    %v1615 = vld [vmem:[#allocation13 + $0x7b0] sm:$0xff]
    %v1616 = vld [vmem:[#allocation13 + $0x7b8] sm:$0xff]
    %v1617 = vld [vmem:[#allocation13 + $0x7c0] sm:$0xff]
    %v1618 = vld [vmem:[#allocation13 + $0x7c8] sm:$0xff]
    %v1619 = vld [vmem:[#allocation13 + $0x7d0] sm:$0xff]
    %v1620 = vld [vmem:[#allocation13 + $0x7d8] sm:$0xff]
    %v1621 = vld [vmem:[#allocation13 + $0x7e0] sm:$0xff]
    %v1622 = vld [vmem:[#allocation13 + $0x7e8] sm:$0xff]
    %v1623 = vld [vmem:[#allocation13 + $0x7f0] sm:$0xff]
    %v1624 = vld [vmem:[#allocation13 + $0x7f8] sm:$0xff]
    %v1625 = vld [vmem:[#allocation15] sm:$0xff]
    %v1627 = vlaneseq
    %v1628 = vshrl.u32 %v1627, 7
    %v1629 = vsub.s32 0, %v1628
    %v1630 = vrot.slane %v1625, %v1629
    %v1631 = vlaneseq
    %v1632 = vshrl.u32 %v1631, 7
    %v1633 = vsub.s32 1, %v1632
    %v1634 = vrot.slane %v1625, %v1633
    %v1635 = vlaneseq
    %v1636 = vshrl.u32 %v1635, 7
    %v1637 = vsub.s32 2, %v1636
    %v1638 = vrot.slane %v1625, %v1637
    %v1639 = vlaneseq
    %v1640 = vshrl.u32 %v1639, 7
    %v1641 = vsub.s32 3, %v1640
    %v1642 = vrot.slane %v1625, %v1641
    %v1643 = vlaneseq
    %v1644 = vshrl.u32 %v1643, 7
    %v1645 = vsub.s32 4, %v1644
    %v1646 = vrot.slane %v1625, %v1645
    %v1647 = vlaneseq
    %v1648 = vshrl.u32 %v1647, 7
    %v1649 = vsub.s32 5, %v1648
    %v1650 = vrot.slane %v1625, %v1649
    %v1651 = vlaneseq
    %v1652 = vshrl.u32 %v1651, 7
    %v1653 = vsub.s32 6, %v1652
    %v1654 = vrot.slane %v1625, %v1653
    %v1655 = vlaneseq
    %v1656 = vshrl.u32 %v1655, 7
    %v1657 = vsub.s32 7, %v1656
    %v1658 = vrot.slane %v1625, %v1657
    %v1923 = vunpack.c.l.b16 %v1369
    %v1924 = vunpack.c.h.b16 %v1369
    %v1925 = vunpack.c.l.b16 %v1370
    %v1926 = vunpack.c.h.b16 %v1370
    %v1927 = vunpack.c.l.b16 %v1371
    %v1928 = vunpack.c.h.b16 %v1371
    %v1929 = vunpack.c.l.b16 %v1372
    %v1930 = vunpack.c.h.b16 %v1372
    %v1931 = vunpack.c.l.b16 %v1373
    %v1932 = vunpack.c.h.b16 %v1373
    %v1933 = vunpack.c.l.b16 %v1374
    %v1934 = vunpack.c.h.b16 %v1374
    %v1935 = vunpack.c.l.b16 %v1375
    %v1936 = vunpack.c.h.b16 %v1375
    %v1937 = vunpack.c.l.b16 %v1376
    %v1938 = vunpack.c.h.b16 %v1376
    %v1939 = vunpack.c.l.b16 %v1377
    %v1940 = vunpack.c.h.b16 %v1377
    %v1941 = vunpack.c.l.b16 %v1378
    %v1942 = vunpack.c.h.b16 %v1378
    %v1943 = vunpack.c.l.b16 %v1379
    %v1944 = vunpack.c.h.b16 %v1379
    %v1945 = vunpack.c.l.b16 %v1380
    %v1946 = vunpack.c.h.b16 %v1380
    %v1947 = vunpack.c.l.b16 %v1381
    %v1948 = vunpack.c.h.b16 %v1381
    %v1949 = vunpack.c.l.b16 %v1382
    %v1950 = vunpack.c.h.b16 %v1382
    %v1951 = vunpack.c.l.b16 %v1383
    %v1952 = vunpack.c.h.b16 %v1383
    %v1953 = vunpack.c.l.b16 %v1384
    %v1954 = vunpack.c.h.b16 %v1384
    %v1955 = vunpack.c.l.b16 %v1385
    %v1956 = vunpack.c.h.b16 %v1385
    %v1957 = vunpack.c.l.b16 %v1386
    %v1958 = vunpack.c.h.b16 %v1386
    %v1959 = vunpack.c.l.b16 %v1387
    %v1960 = vunpack.c.h.b16 %v1387
    %v1961 = vunpack.c.l.b16 %v1388
    %v1962 = vunpack.c.h.b16 %v1388
    %v1963 = vunpack.c.l.b16 %v1389
    %v1964 = vunpack.c.h.b16 %v1389
    %v1965 = vunpack.c.l.b16 %v1390
    %v1966 = vunpack.c.h.b16 %v1390
    %v1967 = vunpack.c.l.b16 %v1391
    %v1968 = vunpack.c.h.b16 %v1391
    %v1969 = vunpack.c.l.b16 %v1392
    %v1970 = vunpack.c.h.b16 %v1392
    %v1971 = vunpack.c.l.b16 %v1393
    %v1972 = vunpack.c.h.b16 %v1393
    %v1973 = vunpack.c.l.b16 %v1394
    %v1974 = vunpack.c.h.b16 %v1394
    %v1975 = vunpack.c.l.b16 %v1395
    %v1976 = vunpack.c.h.b16 %v1395
    %v1977 = vunpack.c.l.b16 %v1396
    %v1978 = vunpack.c.h.b16 %v1396
    %v1979 = vunpack.c.l.b16 %v1397
    %v1980 = vunpack.c.h.b16 %v1397
    %v1981 = vunpack.c.l.b16 %v1398
    %v1982 = vunpack.c.h.b16 %v1398
    %v1983 = vunpack.c.l.b16 %v1399
    %v1984 = vunpack.c.h.b16 %v1399
    %v1985 = vunpack.c.l.b16 %v1400
    %v1986 = vunpack.c.h.b16 %v1400
    %v1987 = vunpack.c.l.b16 %v1401
    %v1988 = vunpack.c.h.b16 %v1401
    %v1989 = vunpack.c.l.b16 %v1402
    %v1990 = vunpack.c.h.b16 %v1402
    %v1991 = vunpack.c.l.b16 %v1403
    %v1992 = vunpack.c.h.b16 %v1403
    %v1993 = vunpack.c.l.b16 %v1404
    %v1994 = vunpack.c.h.b16 %v1404
    %v1995 = vunpack.c.l.b16 %v1405
    %v1996 = vunpack.c.h.b16 %v1405
    %v1997 = vunpack.c.l.b16 %v1406
    %v1998 = vunpack.c.h.b16 %v1406
    %v1999 = vunpack.c.l.b16 %v1407
    %v2000 = vunpack.c.h.b16 %v1407
    %v2001 = vunpack.c.l.b16 %v1408
    %v2002 = vunpack.c.h.b16 %v1408
    %v2003 = vunpack.c.l.b16 %v1409
    %v2004 = vunpack.c.h.b16 %v1409
    %v2005 = vunpack.c.l.b16 %v1410
    %v2006 = vunpack.c.h.b16 %v1410
    %v2007 = vunpack.c.l.b16 %v1411
    %v2008 = vunpack.c.h.b16 %v1411
    %v2009 = vunpack.c.l.b16 %v1412
    %v2010 = vunpack.c.h.b16 %v1412
    %v2011 = vunpack.c.l.b16 %v1413
    %v2012 = vunpack.c.h.b16 %v1413
    %v2013 = vunpack.c.l.b16 %v1414
    %v2014 = vunpack.c.h.b16 %v1414
    %v2015 = vunpack.c.l.b16 %v1415
    %v2016 = vunpack.c.h.b16 %v1415
    %v2017 = vunpack.c.l.b16 %v1416
    %v2018 = vunpack.c.h.b16 %v1416
    %v2019 = vunpack.c.l.b16 %v1417
    %v2020 = vunpack.c.h.b16 %v1417
    %v2021 = vunpack.c.l.b16 %v1418
    %v2022 = vunpack.c.h.b16 %v1418
    %v2023 = vunpack.c.l.b16 %v1419
    %v2024 = vunpack.c.h.b16 %v1419
    %v2025 = vunpack.c.l.b16 %v1420
    %v2026 = vunpack.c.h.b16 %v1420
    %v2027 = vunpack.c.l.b16 %v1421
    %v2028 = vunpack.c.h.b16 %v1421
    %v2029 = vunpack.c.l.b16 %v1422
    %v2030 = vunpack.c.h.b16 %v1422
    %v2031 = vunpack.c.l.b16 %v1423
    %v2032 = vunpack.c.h.b16 %v1423
    %v2033 = vunpack.c.l.b16 %v1424
    %v2034 = vunpack.c.h.b16 %v1424
    %v2035 = vunpack.c.l.b16 %v1425
    %v2036 = vunpack.c.h.b16 %v1425
    %v2037 = vunpack.c.l.b16 %v1426
    %v2038 = vunpack.c.h.b16 %v1426
    %v2039 = vunpack.c.l.b16 %v1427
    %v2040 = vunpack.c.h.b16 %v1427
    %v2041 = vunpack.c.l.b16 %v1428
    %v2042 = vunpack.c.h.b16 %v1428
    %v2043 = vunpack.c.l.b16 %v1429
    %v2044 = vunpack.c.h.b16 %v1429
    %v2045 = vunpack.c.l.b16 %v1430
    %v2046 = vunpack.c.h.b16 %v1430
    %v2047 = vunpack.c.l.b16 %v1431
    %v2048 = vunpack.c.h.b16 %v1431
    %v2049 = vunpack.c.l.b16 %v1432
    %v2050 = vunpack.c.h.b16 %v1432
    %v2051 = vunpack.c.l.b16 %v1433
    %v2052 = vunpack.c.h.b16 %v1433
    %v2053 = vunpack.c.l.b16 %v1434
    %v2054 = vunpack.c.h.b16 %v1434
    %v2055 = vunpack.c.l.b16 %v1435
    %v2056 = vunpack.c.h.b16 %v1435
    %v2057 = vunpack.c.l.b16 %v1436
    %v2058 = vunpack.c.h.b16 %v1436
    %v2059 = vunpack.c.l.b16 %v1437
    %v2060 = vunpack.c.h.b16 %v1437
    %v2061 = vunpack.c.l.b16 %v1438
    %v2062 = vunpack.c.h.b16 %v1438
    %v2063 = vunpack.c.l.b16 %v1439
    %v2064 = vunpack.c.h.b16 %v1439
    %v2065 = vunpack.c.l.b16 %v1440
    %v2066 = vunpack.c.h.b16 %v1440
    %v2067 = vunpack.c.l.b16 %v1441
    %v2068 = vunpack.c.h.b16 %v1441
    %v2069 = vunpack.c.l.b16 %v1442
    %v2070 = vunpack.c.h.b16 %v1442
    %v2071 = vunpack.c.l.b16 %v1443
    %v2072 = vunpack.c.h.b16 %v1443
    %v2073 = vunpack.c.l.b16 %v1444
    %v2074 = vunpack.c.h.b16 %v1444
    %v2075 = vunpack.c.l.b16 %v1445
    %v2076 = vunpack.c.h.b16 %v1445
    %v2077 = vunpack.c.l.b16 %v1446
    %v2078 = vunpack.c.h.b16 %v1446
    %v2079 = vunpack.c.l.b16 %v1447
    %v2080 = vunpack.c.h.b16 %v1447
    %v2081 = vunpack.c.l.b16 %v1448
    %v2082 = vunpack.c.h.b16 %v1448
    %v2083 = vunpack.c.l.b16 %v1449
    %v2084 = vunpack.c.h.b16 %v1449
    %v2085 = vunpack.c.l.b16 %v1450
    %v2086 = vunpack.c.h.b16 %v1450
    %v2087 = vunpack.c.l.b16 %v1451
    %v2088 = vunpack.c.h.b16 %v1451
    %v2089 = vunpack.c.l.b16 %v1452
    %v2090 = vunpack.c.h.b16 %v1452
    %v2091 = vunpack.c.l.b16 %v1453
    %v2092 = vunpack.c.h.b16 %v1453
    %v2093 = vunpack.c.l.b16 %v1454
    %v2094 = vunpack.c.h.b16 %v1454
    %v2095 = vunpack.c.l.b16 %v1455
    %v2096 = vunpack.c.h.b16 %v1455
    %v2097 = vunpack.c.l.b16 %v1456
    %v2098 = vunpack.c.h.b16 %v1456
    %v2099 = vunpack.c.l.b16 %v1457
    %v2100 = vunpack.c.h.b16 %v1457
    %v2101 = vunpack.c.l.b16 %v1458
    %v2102 = vunpack.c.h.b16 %v1458
    %v2103 = vunpack.c.l.b16 %v1459
    %v2104 = vunpack.c.h.b16 %v1459
    %v2105 = vunpack.c.l.b16 %v1460
    %v2106 = vunpack.c.h.b16 %v1460
    %v2107 = vunpack.c.l.b16 %v1461
    %v2108 = vunpack.c.h.b16 %v1461
    %v2109 = vunpack.c.l.b16 %v1462
    %v2110 = vunpack.c.h.b16 %v1462
    %v2111 = vunpack.c.l.b16 %v1463
    %v2112 = vunpack.c.h.b16 %v1463
    %v2113 = vunpack.c.l.b16 %v1464
    %v2114 = vunpack.c.h.b16 %v1464
    %v2115 = vunpack.c.l.b16 %v1465
    %v2116 = vunpack.c.h.b16 %v1465
    %v2117 = vunpack.c.l.b16 %v1466
    %v2118 = vunpack.c.h.b16 %v1466
    %v2119 = vunpack.c.l.b16 %v1467
    %v2120 = vunpack.c.h.b16 %v1467
    %v2121 = vunpack.c.l.b16 %v1468
    %v2122 = vunpack.c.h.b16 %v1468
    %v2123 = vunpack.c.l.b16 %v1469
    %v2124 = vunpack.c.h.b16 %v1469
    %v2125 = vunpack.c.l.b16 %v1470
    %v2126 = vunpack.c.h.b16 %v1470
    %v2127 = vunpack.c.l.b16 %v1471
    %v2128 = vunpack.c.h.b16 %v1471
    %v2129 = vunpack.c.l.b16 %v1472
    %v2130 = vunpack.c.h.b16 %v1472
    %v2131 = vunpack.c.l.b16 %v1473
    %v2132 = vunpack.c.h.b16 %v1473
    %v2133 = vunpack.c.l.b16 %v1474
    %v2134 = vunpack.c.h.b16 %v1474
    %v2135 = vunpack.c.l.b16 %v1475
    %v2136 = vunpack.c.h.b16 %v1475
    %v2137 = vunpack.c.l.b16 %v1476
    %v2138 = vunpack.c.h.b16 %v1476
    %v2139 = vunpack.c.l.b16 %v1477
    %v2140 = vunpack.c.h.b16 %v1477
    %v2141 = vunpack.c.l.b16 %v1478
    %v2142 = vunpack.c.h.b16 %v1478
    %v2143 = vunpack.c.l.b16 %v1479
    %v2144 = vunpack.c.h.b16 %v1479
    %v2145 = vunpack.c.l.b16 %v1480
    %v2146 = vunpack.c.h.b16 %v1480
    %v2147 = vunpack.c.l.b16 %v1481
    %v2148 = vunpack.c.h.b16 %v1481
    %v2149 = vunpack.c.l.b16 %v1482
    %v2150 = vunpack.c.h.b16 %v1482
    %v2151 = vunpack.c.l.b16 %v1483
    %v2152 = vunpack.c.h.b16 %v1483
    %v2153 = vunpack.c.l.b16 %v1484
    %v2154 = vunpack.c.h.b16 %v1484
    %v2155 = vunpack.c.l.b16 %v1485
    %v2156 = vunpack.c.h.b16 %v1485
    %v2157 = vunpack.c.l.b16 %v1486
    %v2158 = vunpack.c.h.b16 %v1486
    %v2159 = vunpack.c.l.b16 %v1487
    %v2160 = vunpack.c.h.b16 %v1487
    %v2161 = vunpack.c.l.b16 %v1488
    %v2162 = vunpack.c.h.b16 %v1488
    %v2163 = vunpack.c.l.b16 %v1489
    %v2164 = vunpack.c.h.b16 %v1489
    %v2165 = vunpack.c.l.b16 %v1490
    %v2166 = vunpack.c.h.b16 %v1490
    %v2167 = vunpack.c.l.b16 %v1491
    %v2168 = vunpack.c.h.b16 %v1491
    %v2169 = vunpack.c.l.b16 %v1492
    %v2170 = vunpack.c.h.b16 %v1492
    %v2171 = vunpack.c.l.b16 %v1493
    %v2172 = vunpack.c.h.b16 %v1493
    %v2173 = vunpack.c.l.b16 %v1494
    %v2174 = vunpack.c.h.b16 %v1494
    %v2175 = vunpack.c.l.b16 %v1495
    %v2176 = vunpack.c.h.b16 %v1495
    %v2177 = vunpack.c.l.b16 %v1496
    %v2178 = vunpack.c.h.b16 %v1496
    %v2179 = vunpack.c.l.b16 %v1497
    %v2180 = vunpack.c.h.b16 %v1497
    %v2181 = vunpack.c.l.b16 %v1498
    %v2182 = vunpack.c.h.b16 %v1498
    %v2183 = vunpack.c.l.b16 %v1499
    %v2184 = vunpack.c.h.b16 %v1499
    %v2185 = vunpack.c.l.b16 %v1500
    %v2186 = vunpack.c.h.b16 %v1500
    %v2187 = vunpack.c.l.b16 %v1501
    %v2188 = vunpack.c.h.b16 %v1501
    %v2189 = vunpack.c.l.b16 %v1502
    %v2190 = vunpack.c.h.b16 %v1502
    %v2191 = vunpack.c.l.b16 %v1503
    %v2192 = vunpack.c.h.b16 %v1503
    %v2193 = vunpack.c.l.b16 %v1504
    %v2194 = vunpack.c.h.b16 %v1504
    %v2195 = vunpack.c.l.b16 %v1505
    %v2196 = vunpack.c.h.b16 %v1505
    %v2197 = vunpack.c.l.b16 %v1506
    %v2198 = vunpack.c.h.b16 %v1506
    %v2199 = vunpack.c.l.b16 %v1507
    %v2200 = vunpack.c.h.b16 %v1507
    %v2201 = vunpack.c.l.b16 %v1508
    %v2202 = vunpack.c.h.b16 %v1508
    %v2203 = vunpack.c.l.b16 %v1509
    %v2204 = vunpack.c.h.b16 %v1509
    %v2205 = vunpack.c.l.b16 %v1510
    %v2206 = vunpack.c.h.b16 %v1510
    %v2207 = vunpack.c.l.b16 %v1511
    %v2208 = vunpack.c.h.b16 %v1511
    %v2209 = vunpack.c.l.b16 %v1512
    %v2210 = vunpack.c.h.b16 %v1512
    %v2211 = vunpack.c.l.b16 %v1513
    %v2212 = vunpack.c.h.b16 %v1513
    %v2213 = vunpack.c.l.b16 %v1514
    %v2214 = vunpack.c.h.b16 %v1514
    %v2215 = vunpack.c.l.b16 %v1515
    %v2216 = vunpack.c.h.b16 %v1515
    %v2217 = vunpack.c.l.b16 %v1516
    %v2218 = vunpack.c.h.b16 %v1516
    %v2219 = vunpack.c.l.b16 %v1517
    %v2220 = vunpack.c.h.b16 %v1517
    %v2221 = vunpack.c.l.b16 %v1518
    %v2222 = vunpack.c.h.b16 %v1518
    %v2223 = vunpack.c.l.b16 %v1519
    %v2224 = vunpack.c.h.b16 %v1519
    %v2225 = vunpack.c.l.b16 %v1520
    %v2226 = vunpack.c.h.b16 %v1520
    %v2227 = vunpack.c.l.b16 %v1521
    %v2228 = vunpack.c.h.b16 %v1521
    %v2229 = vunpack.c.l.b16 %v1522
    %v2230 = vunpack.c.h.b16 %v1522
    %v2231 = vunpack.c.l.b16 %v1523
    %v2232 = vunpack.c.h.b16 %v1523
    %v2233 = vunpack.c.l.b16 %v1524
    %v2234 = vunpack.c.h.b16 %v1524
    %v2235 = vunpack.c.l.b16 %v1525
    %v2236 = vunpack.c.h.b16 %v1525
    %v2237 = vunpack.c.l.b16 %v1526
    %v2238 = vunpack.c.h.b16 %v1526
    %v2239 = vunpack.c.l.b16 %v1527
    %v2240 = vunpack.c.h.b16 %v1527
    %v2241 = vunpack.c.l.b16 %v1528
    %v2242 = vunpack.c.h.b16 %v1528
    %v2243 = vunpack.c.l.b16 %v1529
    %v2244 = vunpack.c.h.b16 %v1529
    %v2245 = vunpack.c.l.b16 %v1530
    %v2246 = vunpack.c.h.b16 %v1530
    %v2247 = vunpack.c.l.b16 %v1531
    %v2248 = vunpack.c.h.b16 %v1531
    %v2249 = vunpack.c.l.b16 %v1532
    %v2250 = vunpack.c.h.b16 %v1532
    %v2251 = vunpack.c.l.b16 %v1533
    %v2252 = vunpack.c.h.b16 %v1533
    %v2253 = vunpack.c.l.b16 %v1534
    %v2254 = vunpack.c.h.b16 %v1534
    %v2255 = vunpack.c.l.b16 %v1535
    %v2256 = vunpack.c.h.b16 %v1535
    %v2257 = vunpack.c.l.b16 %v1536
    %v2258 = vunpack.c.h.b16 %v1536
    %v2259 = vunpack.c.l.b16 %v1537
    %v2260 = vunpack.c.h.b16 %v1537
    %v2261 = vunpack.c.l.b16 %v1538
    %v2262 = vunpack.c.h.b16 %v1538
    %v2263 = vunpack.c.l.b16 %v1539
    %v2264 = vunpack.c.h.b16 %v1539
    %v2265 = vunpack.c.l.b16 %v1540
    %v2266 = vunpack.c.h.b16 %v1540
    %v2267 = vunpack.c.l.b16 %v1541
    %v2268 = vunpack.c.h.b16 %v1541
    %v2269 = vunpack.c.l.b16 %v1542
    %v2270 = vunpack.c.h.b16 %v1542
    %v2271 = vunpack.c.l.b16 %v1543
    %v2272 = vunpack.c.h.b16 %v1543
    %v2273 = vunpack.c.l.b16 %v1544
    %v2274 = vunpack.c.h.b16 %v1544
    %v2275 = vunpack.c.l.b16 %v1545
    %v2276 = vunpack.c.h.b16 %v1545
    %v2277 = vunpack.c.l.b16 %v1546
    %v2278 = vunpack.c.h.b16 %v1546
    %v2279 = vunpack.c.l.b16 %v1547
    %v2280 = vunpack.c.h.b16 %v1547
    %v2281 = vunpack.c.l.b16 %v1548
    %v2282 = vunpack.c.h.b16 %v1548
    %v2283 = vunpack.c.l.b16 %v1549
    %v2284 = vunpack.c.h.b16 %v1549
    %v2285 = vunpack.c.l.b16 %v1550
    %v2286 = vunpack.c.h.b16 %v1550
    %v2287 = vunpack.c.l.b16 %v1551
    %v2288 = vunpack.c.h.b16 %v1551
    %v2289 = vunpack.c.l.b16 %v1552
    %v2290 = vunpack.c.h.b16 %v1552
    %v2291 = vunpack.c.l.b16 %v1553
    %v2292 = vunpack.c.h.b16 %v1553
    %v2293 = vunpack.c.l.b16 %v1554
    %v2294 = vunpack.c.h.b16 %v1554
    %v2295 = vunpack.c.l.b16 %v1555
    %v2296 = vunpack.c.h.b16 %v1555
    %v2297 = vunpack.c.l.b16 %v1556
    %v2298 = vunpack.c.h.b16 %v1556
    %v2299 = vunpack.c.l.b16 %v1557
    %v2300 = vunpack.c.h.b16 %v1557
    %v2301 = vunpack.c.l.b16 %v1558
    %v2302 = vunpack.c.h.b16 %v1558
    %v2303 = vunpack.c.l.b16 %v1559
    %v2304 = vunpack.c.h.b16 %v1559
    %v2305 = vunpack.c.l.b16 %v1560
    %v2306 = vunpack.c.h.b16 %v1560
    %v2307 = vunpack.c.l.b16 %v1561
    %v2308 = vunpack.c.h.b16 %v1561
    %v2309 = vunpack.c.l.b16 %v1562
    %v2310 = vunpack.c.h.b16 %v1562
    %v2311 = vunpack.c.l.b16 %v1563
    %v2312 = vunpack.c.h.b16 %v1563
    %v2313 = vunpack.c.l.b16 %v1564
    %v2314 = vunpack.c.h.b16 %v1564
    %v2315 = vunpack.c.l.b16 %v1565
    %v2316 = vunpack.c.h.b16 %v1565
    %v2317 = vunpack.c.l.b16 %v1566
    %v2318 = vunpack.c.h.b16 %v1566
    %v2319 = vunpack.c.l.b16 %v1567
    %v2320 = vunpack.c.h.b16 %v1567
    %v2321 = vunpack.c.l.b16 %v1568
    %v2322 = vunpack.c.h.b16 %v1568
    %v2323 = vunpack.c.l.b16 %v1569
    %v2324 = vunpack.c.h.b16 %v1569
    %v2325 = vunpack.c.l.b16 %v1570
    %v2326 = vunpack.c.h.b16 %v1570
    %v2327 = vunpack.c.l.b16 %v1571
    %v2328 = vunpack.c.h.b16 %v1571
    %v2329 = vunpack.c.l.b16 %v1572
    %v2330 = vunpack.c.h.b16 %v1572
    %v2331 = vunpack.c.l.b16 %v1573
    %v2332 = vunpack.c.h.b16 %v1573
    %v2333 = vunpack.c.l.b16 %v1574
    %v2334 = vunpack.c.h.b16 %v1574
    %v2335 = vunpack.c.l.b16 %v1575
    %v2336 = vunpack.c.h.b16 %v1575
    %v2337 = vunpack.c.l.b16 %v1576
    %v2338 = vunpack.c.h.b16 %v1576
    %v2339 = vunpack.c.l.b16 %v1577
    %v2340 = vunpack.c.h.b16 %v1577
    %v2341 = vunpack.c.l.b16 %v1578
    %v2342 = vunpack.c.h.b16 %v1578
    %v2343 = vunpack.c.l.b16 %v1579
    %v2344 = vunpack.c.h.b16 %v1579
    %v2345 = vunpack.c.l.b16 %v1580
    %v2346 = vunpack.c.h.b16 %v1580
    %v2347 = vunpack.c.l.b16 %v1581
    %v2348 = vunpack.c.h.b16 %v1581
    %v2349 = vunpack.c.l.b16 %v1582
    %v2350 = vunpack.c.h.b16 %v1582
    %v2351 = vunpack.c.l.b16 %v1583
    %v2352 = vunpack.c.h.b16 %v1583
    %v2353 = vunpack.c.l.b16 %v1584
    %v2354 = vunpack.c.h.b16 %v1584
    %v2355 = vunpack.c.l.b16 %v1585
    %v2356 = vunpack.c.h.b16 %v1585
    %v2357 = vunpack.c.l.b16 %v1586
    %v2358 = vunpack.c.h.b16 %v1586
    %v2359 = vunpack.c.l.b16 %v1587
    %v2360 = vunpack.c.h.b16 %v1587
    %v2361 = vunpack.c.l.b16 %v1588
    %v2362 = vunpack.c.h.b16 %v1588
    %v2363 = vunpack.c.l.b16 %v1589
    %v2364 = vunpack.c.h.b16 %v1589
    %v2365 = vunpack.c.l.b16 %v1590
    %v2366 = vunpack.c.h.b16 %v1590
    %v2367 = vunpack.c.l.b16 %v1591
    %v2368 = vunpack.c.h.b16 %v1591
    %v2369 = vunpack.c.l.b16 %v1592
    %v2370 = vunpack.c.h.b16 %v1592
    %v2371 = vunpack.c.l.b16 %v1593
    %v2372 = vunpack.c.h.b16 %v1593
    %v2373 = vunpack.c.l.b16 %v1594
    %v2374 = vunpack.c.h.b16 %v1594
    %v2375 = vunpack.c.l.b16 %v1595
    %v2376 = vunpack.c.h.b16 %v1595
    %v2377 = vunpack.c.l.b16 %v1596
    %v2378 = vunpack.c.h.b16 %v1596
    %v2379 = vunpack.c.l.b16 %v1597
    %v2380 = vunpack.c.h.b16 %v1597
    %v2381 = vunpack.c.l.b16 %v1598
    %v2382 = vunpack.c.h.b16 %v1598
    %v2383 = vunpack.c.l.b16 %v1599
    %v2384 = vunpack.c.h.b16 %v1599
    %v2385 = vunpack.c.l.b16 %v1600
    %v2386 = vunpack.c.h.b16 %v1600
    %v2387 = vunpack.c.l.b16 %v1601
    %v2388 = vunpack.c.h.b16 %v1601
    %v2389 = vunpack.c.l.b16 %v1602
    %v2390 = vunpack.c.h.b16 %v1602
    %v2391 = vunpack.c.l.b16 %v1603
    %v2392 = vunpack.c.h.b16 %v1603
    %v2393 = vunpack.c.l.b16 %v1604
    %v2394 = vunpack.c.h.b16 %v1604
    %v2395 = vunpack.c.l.b16 %v1605
    %v2396 = vunpack.c.h.b16 %v1605
    %v2397 = vunpack.c.l.b16 %v1606
    %v2398 = vunpack.c.h.b16 %v1606
    %v2399 = vunpack.c.l.b16 %v1607
    %v2400 = vunpack.c.h.b16 %v1607
    %v2401 = vunpack.c.l.b16 %v1608
    %v2402 = vunpack.c.h.b16 %v1608
    %v2403 = vunpack.c.l.b16 %v1609
    %v2404 = vunpack.c.h.b16 %v1609
    %v2405 = vunpack.c.l.b16 %v1610
    %v2406 = vunpack.c.h.b16 %v1610
    %v2407 = vunpack.c.l.b16 %v1611
    %v2408 = vunpack.c.h.b16 %v1611
    %v2409 = vunpack.c.l.b16 %v1612
    %v2410 = vunpack.c.h.b16 %v1612
    %v2411 = vunpack.c.l.b16 %v1613
    %v2412 = vunpack.c.h.b16 %v1613
    %v2413 = vunpack.c.l.b16 %v1614
    %v2414 = vunpack.c.h.b16 %v1614
    %v2415 = vunpack.c.l.b16 %v1615
    %v2416 = vunpack.c.h.b16 %v1615
    %v2417 = vunpack.c.l.b16 %v1616
    %v2418 = vunpack.c.h.b16 %v1616
    %v2419 = vunpack.c.l.b16 %v1617
    %v2420 = vunpack.c.h.b16 %v1617
    %v2421 = vunpack.c.l.b16 %v1618
    %v2422 = vunpack.c.h.b16 %v1618
    %v2423 = vunpack.c.l.b16 %v1619
    %v2424 = vunpack.c.h.b16 %v1619
    %v2425 = vunpack.c.l.b16 %v1620
    %v2426 = vunpack.c.h.b16 %v1620
    %v2427 = vunpack.c.l.b16 %v1621
    %v2428 = vunpack.c.h.b16 %v1621
    %v2429 = vunpack.c.l.b16 %v1622
    %v2430 = vunpack.c.h.b16 %v1622
    %v2431 = vunpack.c.l.b16 %v1623
    %v2432 = vunpack.c.h.b16 %v1623
    %v2433 = vunpack.c.l.b16 %v1624
    %v2434 = vunpack.c.h.b16 %v1624
    %v2435 = vpack.c.b16 %v1931, %v1923
    %v2436 = vpack.c.b16 %v1932, %v1924
    %v2437 = vpack.c.b16 %v1933, %v1925
    %v2438 = vpack.c.b16 %v1934, %v1926
    %v2439 = vpack.c.b16 %v1935, %v1927
    %v2440 = vpack.c.b16 %v1936, %v1928
    %v2441 = vpack.c.b16 %v1937, %v1929
    %v2442 = vpack.c.b16 %v1938, %v1930
    %v2443 = vpack.c.b16 %v1947, %v1939
    %v2444 = vpack.c.b16 %v1948, %v1940
    %v2445 = vpack.c.b16 %v1949, %v1941
    %v2446 = vpack.c.b16 %v1950, %v1942
    %v2447 = vpack.c.b16 %v1951, %v1943
    %v2448 = vpack.c.b16 %v1952, %v1944
    %v2449 = vpack.c.b16 %v1953, %v1945
    %v2450 = vpack.c.b16 %v1954, %v1946
    %v2451 = vpack.c.b16 %v1963, %v1955
    %v2452 = vpack.c.b16 %v1964, %v1956
    %v2453 = vpack.c.b16 %v1965, %v1957
    %v2454 = vpack.c.b16 %v1966, %v1958
    %v2455 = vpack.c.b16 %v1967, %v1959
    %v2456 = vpack.c.b16 %v1968, %v1960
    %v2457 = vpack.c.b16 %v1969, %v1961
    %v2458 = vpack.c.b16 %v1970, %v1962
    %v2459 = vpack.c.b16 %v1979, %v1971
    %v2460 = vpack.c.b16 %v1980, %v1972
    %v2461 = vpack.c.b16 %v1981, %v1973
    %v2462 = vpack.c.b16 %v1982, %v1974
    %v2463 = vpack.c.b16 %v1983, %v1975
    %v2464 = vpack.c.b16 %v1984, %v1976
    %v2465 = vpack.c.b16 %v1985, %v1977
    %v2466 = vpack.c.b16 %v1986, %v1978
    %v2467 = vpack.c.b16 %v1995, %v1987
    %v2468 = vpack.c.b16 %v1996, %v1988
    %v2469 = vpack.c.b16 %v1997, %v1989
    %v2470 = vpack.c.b16 %v1998, %v1990
    %v2471 = vpack.c.b16 %v1999, %v1991
    %v2472 = vpack.c.b16 %v2000, %v1992
    %v2473 = vpack.c.b16 %v2001, %v1993
    %v2474 = vpack.c.b16 %v2002, %v1994
    %v2475 = vpack.c.b16 %v2011, %v2003
    %v2476 = vpack.c.b16 %v2012, %v2004
    %v2477 = vpack.c.b16 %v2013, %v2005
    %v2478 = vpack.c.b16 %v2014, %v2006
    %v2479 = vpack.c.b16 %v2015, %v2007
    %v2480 = vpack.c.b16 %v2016, %v2008
    %v2481 = vpack.c.b16 %v2017, %v2009
    %v2482 = vpack.c.b16 %v2018, %v2010
    %v2483 = vpack.c.b16 %v2027, %v2019
    %v2484 = vpack.c.b16 %v2028, %v2020
    %v2485 = vpack.c.b16 %v2029, %v2021
    %v2486 = vpack.c.b16 %v2030, %v2022
    %v2487 = vpack.c.b16 %v2031, %v2023
    %v2488 = vpack.c.b16 %v2032, %v2024
    %v2489 = vpack.c.b16 %v2033, %v2025
    %v2490 = vpack.c.b16 %v2034, %v2026
    %v2491 = vpack.c.b16 %v2043, %v2035
    %v2492 = vpack.c.b16 %v2044, %v2036
    %v2493 = vpack.c.b16 %v2045, %v2037
    %v2494 = vpack.c.b16 %v2046, %v2038
    %v2495 = vpack.c.b16 %v2047, %v2039
    %v2496 = vpack.c.b16 %v2048, %v2040
    %v2497 = vpack.c.b16 %v2049, %v2041
    %v2498 = vpack.c.b16 %v2050, %v2042
    %v2499 = vpack.c.b16 %v2059, %v2051
    %v2500 = vpack.c.b16 %v2060, %v2052
    %v2501 = vpack.c.b16 %v2061, %v2053
    %v2502 = vpack.c.b16 %v2062, %v2054
    %v2503 = vpack.c.b16 %v2063, %v2055
    %v2504 = vpack.c.b16 %v2064, %v2056
    %v2505 = vpack.c.b16 %v2065, %v2057
    %v2506 = vpack.c.b16 %v2066, %v2058
    %v2507 = vpack.c.b16 %v2075, %v2067
    %v2508 = vpack.c.b16 %v2076, %v2068
    %v2509 = vpack.c.b16 %v2077, %v2069
    %v2510 = vpack.c.b16 %v2078, %v2070
    %v2511 = vpack.c.b16 %v2079, %v2071
    %v2512 = vpack.c.b16 %v2080, %v2072
    %v2513 = vpack.c.b16 %v2081, %v2073
    %v2514 = vpack.c.b16 %v2082, %v2074
    %v2515 = vpack.c.b16 %v2091, %v2083
    %v2516 = vpack.c.b16 %v2092, %v2084
    %v2517 = vpack.c.b16 %v2093, %v2085
    %v2518 = vpack.c.b16 %v2094, %v2086
    %v2519 = vpack.c.b16 %v2095, %v2087
    %v2520 = vpack.c.b16 %v2096, %v2088
    %v2521 = vpack.c.b16 %v2097, %v2089
    %v2522 = vpack.c.b16 %v2098, %v2090
    %v2523 = vpack.c.b16 %v2107, %v2099
    %v2524 = vpack.c.b16 %v2108, %v2100
    %v2525 = vpack.c.b16 %v2109, %v2101
    %v2526 = vpack.c.b16 %v2110, %v2102
    %v2527 = vpack.c.b16 %v2111, %v2103
    %v2528 = vpack.c.b16 %v2112, %v2104
    %v2529 = vpack.c.b16 %v2113, %v2105
    %v2530 = vpack.c.b16 %v2114, %v2106
    %v2531 = vpack.c.b16 %v2123, %v2115
    %v2532 = vpack.c.b16 %v2124, %v2116
    %v2533 = vpack.c.b16 %v2125, %v2117
    %v2534 = vpack.c.b16 %v2126, %v2118
    %v2535 = vpack.c.b16 %v2127, %v2119
    %v2536 = vpack.c.b16 %v2128, %v2120
    %v2537 = vpack.c.b16 %v2129, %v2121
    %v2538 = vpack.c.b16 %v2130, %v2122
    %v2539 = vpack.c.b16 %v2139, %v2131
    %v2540 = vpack.c.b16 %v2140, %v2132
    %v2541 = vpack.c.b16 %v2141, %v2133
    %v2542 = vpack.c.b16 %v2142, %v2134
    %v2543 = vpack.c.b16 %v2143, %v2135
    %v2544 = vpack.c.b16 %v2144, %v2136
    %v2545 = vpack.c.b16 %v2145, %v2137
    %v2546 = vpack.c.b16 %v2146, %v2138
    %v2547 = vpack.c.b16 %v2155, %v2147
    %v2548 = vpack.c.b16 %v2156, %v2148
    %v2549 = vpack.c.b16 %v2157, %v2149
    %v2550 = vpack.c.b16 %v2158, %v2150
    %v2551 = vpack.c.b16 %v2159, %v2151
    %v2552 = vpack.c.b16 %v2160, %v2152
    %v2553 = vpack.c.b16 %v2161, %v2153
    %v2554 = vpack.c.b16 %v2162, %v2154
    %v2555 = vpack.c.b16 %v2171, %v2163
    %v2556 = vpack.c.b16 %v2172, %v2164
    %v2557 = vpack.c.b16 %v2173, %v2165
    %v2558 = vpack.c.b16 %v2174, %v2166
    %v2559 = vpack.c.b16 %v2175, %v2167
    %v2560 = vpack.c.b16 %v2176, %v2168
    %v2561 = vpack.c.b16 %v2177, %v2169
    %v2562 = vpack.c.b16 %v2178, %v2170
    %v2563 = vpack.c.b16 %v2187, %v2179
    %v2564 = vpack.c.b16 %v2188, %v2180
    %v2565 = vpack.c.b16 %v2189, %v2181
    %v2566 = vpack.c.b16 %v2190, %v2182
    %v2567 = vpack.c.b16 %v2191, %v2183
    %v2568 = vpack.c.b16 %v2192, %v2184
    %v2569 = vpack.c.b16 %v2193, %v2185
    %v2570 = vpack.c.b16 %v2194, %v2186
    %v2571 = vpack.c.b16 %v2203, %v2195
    %v2572 = vpack.c.b16 %v2204, %v2196
    %v2573 = vpack.c.b16 %v2205, %v2197
    %v2574 = vpack.c.b16 %v2206, %v2198
    %v2575 = vpack.c.b16 %v2207, %v2199
    %v2576 = vpack.c.b16 %v2208, %v2200
    %v2577 = vpack.c.b16 %v2209, %v2201
    %v2578 = vpack.c.b16 %v2210, %v2202
    %v2579 = vpack.c.b16 %v2219, %v2211
    %v2580 = vpack.c.b16 %v2220, %v2212
    %v2581 = vpack.c.b16 %v2221, %v2213
    %v2582 = vpack.c.b16 %v2222, %v2214
    %v2583 = vpack.c.b16 %v2223, %v2215
    %v2584 = vpack.c.b16 %v2224, %v2216
    %v2585 = vpack.c.b16 %v2225, %v2217
    %v2586 = vpack.c.b16 %v2226, %v2218
    %v2587 = vpack.c.b16 %v2235, %v2227
    %v2588 = vpack.c.b16 %v2236, %v2228
    %v2589 = vpack.c.b16 %v2237, %v2229
    %v2590 = vpack.c.b16 %v2238, %v2230
    %v2591 = vpack.c.b16 %v2239, %v2231
    %v2592 = vpack.c.b16 %v2240, %v2232
    %v2593 = vpack.c.b16 %v2241, %v2233
    %v2594 = vpack.c.b16 %v2242, %v2234
    %v2595 = vpack.c.b16 %v2251, %v2243
    %v2596 = vpack.c.b16 %v2252, %v2244
    %v2597 = vpack.c.b16 %v2253, %v2245
    %v2598 = vpack.c.b16 %v2254, %v2246
    %v2599 = vpack.c.b16 %v2255, %v2247
    %v2600 = vpack.c.b16 %v2256, %v2248
    %v2601 = vpack.c.b16 %v2257, %v2249
    %v2602 = vpack.c.b16 %v2258, %v2250
    %v2603 = vpack.c.b16 %v2267, %v2259
    %v2604 = vpack.c.b16 %v2268, %v2260
    %v2605 = vpack.c.b16 %v2269, %v2261
    %v2606 = vpack.c.b16 %v2270, %v2262
    %v2607 = vpack.c.b16 %v2271, %v2263
    %v2608 = vpack.c.b16 %v2272, %v2264
    %v2609 = vpack.c.b16 %v2273, %v2265
    %v2610 = vpack.c.b16 %v2274, %v2266
    %v2611 = vpack.c.b16 %v2283, %v2275
    %v2612 = vpack.c.b16 %v2284, %v2276
    %v2613 = vpack.c.b16 %v2285, %v2277
    %v2614 = vpack.c.b16 %v2286, %v2278
    %v2615 = vpack.c.b16 %v2287, %v2279
    %v2616 = vpack.c.b16 %v2288, %v2280
    %v2617 = vpack.c.b16 %v2289, %v2281
    %v2618 = vpack.c.b16 %v2290, %v2282
    %v2619 = vpack.c.b16 %v2299, %v2291
    %v2620 = vpack.c.b16 %v2300, %v2292
    %v2621 = vpack.c.b16 %v2301, %v2293
    %v2622 = vpack.c.b16 %v2302, %v2294
    %v2623 = vpack.c.b16 %v2303, %v2295
    %v2624 = vpack.c.b16 %v2304, %v2296
    %v2625 = vpack.c.b16 %v2305, %v2297
    %v2626 = vpack.c.b16 %v2306, %v2298
    %v2627 = vpack.c.b16 %v2315, %v2307
    %v2628 = vpack.c.b16 %v2316, %v2308
    %v2629 = vpack.c.b16 %v2317, %v2309
    %v2630 = vpack.c.b16 %v2318, %v2310
    %v2631 = vpack.c.b16 %v2319, %v2311
    %v2632 = vpack.c.b16 %v2320, %v2312
    %v2633 = vpack.c.b16 %v2321, %v2313
    %v2634 = vpack.c.b16 %v2322, %v2314
    %v2635 = vpack.c.b16 %v2331, %v2323
    %v2636 = vpack.c.b16 %v2332, %v2324
    %v2637 = vpack.c.b16 %v2333, %v2325
    %v2638 = vpack.c.b16 %v2334, %v2326
    %v2639 = vpack.c.b16 %v2335, %v2327
    %v2640 = vpack.c.b16 %v2336, %v2328
    %v2641 = vpack.c.b16 %v2337, %v2329
    %v2642 = vpack.c.b16 %v2338, %v2330
    %v2643 = vpack.c.b16 %v2347, %v2339
    %v2644 = vpack.c.b16 %v2348, %v2340
    %v2645 = vpack.c.b16 %v2349, %v2341
    %v2646 = vpack.c.b16 %v2350, %v2342
    %v2647 = vpack.c.b16 %v2351, %v2343
    %v2648 = vpack.c.b16 %v2352, %v2344
    %v2649 = vpack.c.b16 %v2353, %v2345
    %v2650 = vpack.c.b16 %v2354, %v2346
    %v2651 = vpack.c.b16 %v2363, %v2355
    %v2652 = vpack.c.b16 %v2364, %v2356
    %v2653 = vpack.c.b16 %v2365, %v2357
    %v2654 = vpack.c.b16 %v2366, %v2358
    %v2655 = vpack.c.b16 %v2367, %v2359
    %v2656 = vpack.c.b16 %v2368, %v2360
    %v2657 = vpack.c.b16 %v2369, %v2361
    %v2658 = vpack.c.b16 %v2370, %v2362
    %v2659 = vpack.c.b16 %v2379, %v2371
    %v2660 = vpack.c.b16 %v2380, %v2372
    %v2661 = vpack.c.b16 %v2381, %v2373
    %v2662 = vpack.c.b16 %v2382, %v2374
    %v2663 = vpack.c.b16 %v2383, %v2375
    %v2664 = vpack.c.b16 %v2384, %v2376
    %v2665 = vpack.c.b16 %v2385, %v2377
    %v2666 = vpack.c.b16 %v2386, %v2378
    %v2667 = vpack.c.b16 %v2395, %v2387
    %v2668 = vpack.c.b16 %v2396, %v2388
    %v2669 = vpack.c.b16 %v2397, %v2389
    %v2670 = vpack.c.b16 %v2398, %v2390
    %v2671 = vpack.c.b16 %v2399, %v2391
    %v2672 = vpack.c.b16 %v2400, %v2392
    %v2673 = vpack.c.b16 %v2401, %v2393
    %v2674 = vpack.c.b16 %v2402, %v2394
    %v2675 = vpack.c.b16 %v2411, %v2403
    %v2676 = vpack.c.b16 %v2412, %v2404
    %v2677 = vpack.c.b16 %v2413, %v2405
    %v2678 = vpack.c.b16 %v2414, %v2406
    %v2679 = vpack.c.b16 %v2415, %v2407
    %v2680 = vpack.c.b16 %v2416, %v2408
    %v2681 = vpack.c.b16 %v2417, %v2409
    %v2682 = vpack.c.b16 %v2418, %v2410
    %v2683 = vpack.c.b16 %v2427, %v2419
    %v2684 = vpack.c.b16 %v2428, %v2420
    %v2685 = vpack.c.b16 %v2429, %v2421
    %v2686 = vpack.c.b16 %v2430, %v2422
    %v2687 = vpack.c.b16 %v2431, %v2423
    %v2688 = vpack.c.b16 %v2432, %v2424
    %v2689 = vpack.c.b16 %v2433, %v2425
    %v2690 = vpack.c.b16 %v2434, %v2426
    %2947 = vmatprep.subr.bf16.mxu0 %v2436
    %2948 = vmatpush1.bf16.msra.mxu0 %v2435
    %2949 = vmatprep.subr.bf16.mxu0 %v2444
    %2950 = vmatpush1.bf16.msra.mxu0 %v2443
    %2951 = vmatprep.subr.bf16.mxu0 %v2452
    %2952 = vmatpush1.bf16.msra.mxu0 %v2451
    %2953 = vmatprep.subr.bf16.mxu0 %v2460
    %2954 = vmatpush1.bf16.msra.mxu0 %v2459
    %2955 = vmatprep.subr.bf16.mxu0 %v2468
    %2956 = vmatpush1.bf16.msra.mxu0 %v2467
    %2957 = vmatprep.subr.bf16.mxu0 %v2476
    %2958 = vmatpush1.bf16.msra.mxu0 %v2475
    %2959 = vmatprep.subr.bf16.mxu0 %v2484
    %2960 = vmatpush1.bf16.msra.mxu0 %v2483
    %2961 = vmatprep.subr.bf16.mxu0 %v2492
    %2962 = vmatpush1.bf16.msra.mxu0 %v2491
    %2963 = vmatprep.subr.bf16.mxu0 %v2500
    %2964 = vmatpush1.bf16.msra.mxu0 %v2499
    %2965 = vmatprep.subr.bf16.mxu0 %v2508
    %2966 = vmatpush1.bf16.msra.mxu0 %v2507
    %2967 = vmatprep.subr.bf16.mxu0 %v2516
    %2968 = vmatpush1.bf16.msra.mxu0 %v2515
    %2969 = vmatprep.subr.bf16.mxu0 %v2524
    %2970 = vmatpush1.bf16.msra.mxu0 %v2523
    %2971 = vmatprep.subr.bf16.mxu0 %v2532
    %2972 = vmatpush1.bf16.msra.mxu0 %v2531
    %2973 = vmatprep.subr.bf16.mxu0 %v2540
    %2974 = vmatpush1.bf16.msra.mxu0 %v2539
    %2975 = vmatprep.subr.bf16.mxu0 %v2548
    %2976 = vmatpush1.bf16.msra.mxu0 %v2547
    %2977 = vmatprep.subr.bf16.mxu0 %v2556
    %2978 = vmatpush1.bf16.msra.mxu0 %v2555
    %2979 = vmatprep.mubr.bf16.mxu0 %v1366
    %2980 = vmatmul.mubr.bf16.gmra.mrb[0].mxu0 %v1365
    %v2981 = vpop.f32.mrb[0].mxu0
    %v2982 = vadd.f32 %v1630, %v2981
    %v2983 = vpop.f32.mrb[0].mxu0
    %v2984 = vadd.f32 %v1634, %v2983
    %v2985 = vpop.f32.mrb[0].mxu0
    %v2986 = vadd.f32 %v1630, %v2985
    %v2987 = vpop.f32.mrb[0].mxu0
    %v2988 = vadd.f32 %v1634, %v2987
    %2989 = vdwg.mxu0
    %2990 = vmatprep.subr.bf16.mxu0 %v2564
    %2991 = vmatpush1.bf16.msra.mxu0 %v2563
    %2992 = vmatprep.subr.bf16.mxu0 %v2572
    %2993 = vmatpush1.bf16.msra.mxu0 %v2571
    %2994 = vmatprep.subr.bf16.mxu0 %v2580
    %2995 = vmatpush1.bf16.msra.mxu0 %v2579
    %2996 = vmatprep.subr.bf16.mxu0 %v2588
    %2997 = vmatpush1.bf16.msra.mxu0 %v2587
    %2998 = vmatprep.subr.bf16.mxu0 %v2596
    %2999 = vmatpush1.bf16.msra.mxu0 %v2595
    %3000 = vmatprep.subr.bf16.mxu0 %v2604
    %3001 = vmatpush1.bf16.msra.mxu0 %v2603
    %3002 = vmatprep.subr.bf16.mxu0 %v2612
    %3003 = vmatpush1.bf16.msra.mxu0 %v2611
    %3004 = vmatprep.subr.bf16.mxu0 %v2620
    %3005 = vmatpush1.bf16.msra.mxu0 %v2619
    %3006 = vmatprep.subr.bf16.mxu0 %v2628
    %3007 = vmatpush1.bf16.msra.mxu0 %v2627
    %3008 = vmatprep.subr.bf16.mxu0 %v2636
    %3009 = vmatpush1.bf16.msra.mxu0 %v2635
    %3010 = vmatprep.subr.bf16.mxu0 %v2644
    %3011 = vmatpush1.bf16.msra.mxu0 %v2643
    %3012 = vmatprep.subr.bf16.mxu0 %v2652
    %3013 = vmatpush1.bf16.msra.mxu0 %v2651
    %3014 = vmatprep.subr.bf16.mxu0 %v2660
    %3015 = vmatpush1.bf16.msra.mxu0 %v2659
    %3016 = vmatprep.subr.bf16.mxu0 %v2668
    %3017 = vmatpush1.bf16.msra.mxu0 %v2667
    %3018 = vmatprep.subr.bf16.mxu0 %v2676
    %3019 = vmatpush1.bf16.msra.mxu0 %v2675
    %3020 = vmatprep.subr.bf16.mxu0 %v2684
    %3021 = vmatpush1.bf16.msra.mxu0 %v2683
    %3022 = vmatprep.mubr.bf16.mxu0 %v1368
    %3023 = vmatmul.mubr.bf16.gmra.mrb[0].mxu0 %v1367
    %v3024 = vpop.f32.mrb[0].mxu0
    %v3025 = vadd.f32 %v2982, %v3024
    %v3026 = vpop.f32.mrb[0].mxu0
    %v3027 = vadd.f32 %v2984, %v3026
    %v3028 = vpop.f32.mrb[0].mxu0
    %v3029 = vadd.f32 %v2986, %v3028
    %v3030 = vpop.f32.mrb[0].mxu0
    %v3031 = vadd.f32 %v2988, %v3030
    %3032 = vdwg.mxu0
    %3033 = vmatprep.subr.bf16.mxu0 %v2438
    %3034 = vmatpush1.bf16.msra.mxu0 %v2437
    %3035 = vmatprep.subr.bf16.mxu0 %v2446
    %3036 = vmatpush1.bf16.msra.mxu0 %v2445
    %3037 = vmatprep.subr.bf16.mxu0 %v2454
    %3038 = vmatpush1.bf16.msra.mxu0 %v2453
    %3039 = vmatprep.subr.bf16.mxu0 %v2462
    %3040 = vmatpush1.bf16.msra.mxu0 %v2461
    %3041 = vmatprep.subr.bf16.mxu0 %v2470
    %3042 = vmatpush1.bf16.msra.mxu0 %v2469
    %3043 = vmatprep.subr.bf16.mxu0 %v2478
    %3044 = vmatpush1.bf16.msra.mxu0 %v2477
    %3045 = vmatprep.subr.bf16.mxu0 %v2486
    %3046 = vmatpush1.bf16.msra.mxu0 %v2485
    %3047 = vmatprep.subr.bf16.mxu0 %v2494
    %3048 = vmatpush1.bf16.msra.mxu0 %v2493
    %3049 = vmatprep.subr.bf16.mxu0 %v2502
    %3050 = vmatpush1.bf16.msra.mxu0 %v2501
    %3051 = vmatprep.subr.bf16.mxu0 %v2510
    %3052 = vmatpush1.bf16.msra.mxu0 %v2509
    %3053 = vmatprep.subr.bf16.mxu0 %v2518
    %3054 = vmatpush1.bf16.msra.mxu0 %v2517
    %3055 = vmatprep.subr.bf16.mxu0 %v2526
    %3056 = vmatpush1.bf16.msra.mxu0 %v2525
    %3057 = vmatprep.subr.bf16.mxu0 %v2534
    %3058 = vmatpush1.bf16.msra.mxu0 %v2533
    %3059 = vmatprep.subr.bf16.mxu0 %v2542
    %3060 = vmatpush1.bf16.msra.mxu0 %v2541
    %3061 = vmatprep.subr.bf16.mxu0 %v2550
    %3062 = vmatpush1.bf16.msra.mxu0 %v2549
    %3063 = vmatprep.subr.bf16.mxu0 %v2558
    %3064 = vmatpush1.bf16.msra.mxu0 %v2557
    %3065 = vmatprep.mubr.bf16.mxu0 %v1366
    %3066 = vmatmul.mubr.bf16.gmra.mrb[0].mxu0 %v1365
    %v3067 = vpop.f32.mrb[0].mxu0
    %v3068 = vadd.f32 %v1638, %v3067
    %v3069 = vpop.f32.mrb[0].mxu0
    %v3070 = vadd.f32 %v1642, %v3069
    %v3071 = vpop.f32.mrb[0].mxu0
    %v3072 = vadd.f32 %v1638, %v3071
    %v3073 = vpop.f32.mrb[0].mxu0
    %v3074 = vadd.f32 %v1642, %v3073
    %3075 = vdwg.mxu0
    %3076 = vmatprep.subr.bf16.mxu0 %v2566
    %3077 = vmatpush1.bf16.msra.mxu0 %v2565
    %3078 = vmatprep.subr.bf16.mxu0 %v2574
    %3079 = vmatpush1.bf16.msra.mxu0 %v2573
    %3080 = vmatprep.subr.bf16.mxu0 %v2582
    %3081 = vmatpush1.bf16.msra.mxu0 %v2581
    %3082 = vmatprep.subr.bf16.mxu0 %v2590
    %3083 = vmatpush1.bf16.msra.mxu0 %v2589
    %3084 = vmatprep.subr.bf16.mxu0 %v2598
    %3085 = vmatpush1.bf16.msra.mxu0 %v2597
    %3086 = vmatprep.subr.bf16.mxu0 %v2606
    %3087 = vmatpush1.bf16.msra.mxu0 %v2605
    %3088 = vmatprep.subr.bf16.mxu0 %v2614
    %3089 = vmatpush1.bf16.msra.mxu0 %v2613
    %3090 = vmatprep.subr.bf16.mxu0 %v2622
    %3091 = vmatpush1.bf16.msra.mxu0 %v2621
    %3092 = vmatprep.subr.bf16.mxu0 %v2630
    %3093 = vmatpush1.bf16.msra.mxu0 %v2629
    %3094 = vmatprep.subr.bf16.mxu0 %v2638
    %3095 = vmatpush1.bf16.msra.mxu0 %v2637
    %3096 = vmatprep.subr.bf16.mxu0 %v2646
    %3097 = vmatpush1.bf16.msra.mxu0 %v2645
    %3098 = vmatprep.subr.bf16.mxu0 %v2654
    %3099 = vmatpush1.bf16.msra.mxu0 %v2653
    %3100 = vmatprep.subr.bf16.mxu0 %v2662
    %3101 = vmatpush1.bf16.msra.mxu0 %v2661
    %3102 = vmatprep.subr.bf16.mxu0 %v2670
    %3103 = vmatpush1.bf16.msra.mxu0 %v2669
    %3104 = vmatprep.subr.bf16.mxu0 %v2678
    %3105 = vmatpush1.bf16.msra.mxu0 %v2677
    %3106 = vmatprep.subr.bf16.mxu0 %v2686
    %3107 = vmatpush1.bf16.msra.mxu0 %v2685
    %3108 = vmatprep.mubr.bf16.mxu0 %v1368
    %3109 = vmatmul.mubr.bf16.gmra.mrb[0].mxu0 %v1367
    %v3110 = vpop.f32.mrb[0].mxu0
    %v3111 = vadd.f32 %v3068, %v3110
    %v3112 = vpop.f32.mrb[0].mxu0
    %v3113 = vadd.f32 %v3070, %v3112
    %v3114 = vpop.f32.mrb[0].mxu0
    %v3115 = vadd.f32 %v3072, %v3114
    %v3116 = vpop.f32.mrb[0].mxu0
    %v3117 = vadd.f32 %v3074, %v3116
    %3118 = vdwg.mxu0
    %3119 = vmatprep.subr.bf16.mxu0 %v2440
    %3120 = vmatpush1.bf16.msra.mxu0 %v2439
    %3121 = vmatprep.subr.bf16.mxu0 %v2448
    %3122 = vmatpush1.bf16.msra.mxu0 %v2447
    %3123 = vmatprep.subr.bf16.mxu0 %v2456
    %3124 = vmatpush1.bf16.msra.mxu0 %v2455
    %3125 = vmatprep.subr.bf16.mxu0 %v2464
    %3126 = vmatpush1.bf16.msra.mxu0 %v2463
    %3127 = vmatprep.subr.bf16.mxu0 %v2472
    %3128 = vmatpush1.bf16.msra.mxu0 %v2471
    %3129 = vmatprep.subr.bf16.mxu0 %v2480
    %3130 = vmatpush1.bf16.msra.mxu0 %v2479
    %3131 = vmatprep.subr.bf16.mxu0 %v2488
    %3132 = vmatpush1.bf16.msra.mxu0 %v2487
    %3133 = vmatprep.subr.bf16.mxu0 %v2496
    %3134 = vmatpush1.bf16.msra.mxu0 %v2495
    %3135 = vmatprep.subr.bf16.mxu0 %v2504
    %3136 = vmatpush1.bf16.msra.mxu0 %v2503
    %3137 = vmatprep.subr.bf16.mxu0 %v2512
    %3138 = vmatpush1.bf16.msra.mxu0 %v2511
    %3139 = vmatprep.subr.bf16.mxu0 %v2520
    %3140 = vmatpush1.bf16.msra.mxu0 %v2519
    %3141 = vmatprep.subr.bf16.mxu0 %v2528
    %3142 = vmatpush1.bf16.msra.mxu0 %v2527
    %3143 = vmatprep.subr.bf16.mxu0 %v2536
    %3144 = vmatpush1.bf16.msra.mxu0 %v2535
    %3145 = vmatprep.subr.bf16.mxu0 %v2544
    %3146 = vmatpush1.bf16.msra.mxu0 %v2543
    %3147 = vmatprep.subr.bf16.mxu0 %v2552
    %3148 = vmatpush1.bf16.msra.mxu0 %v2551
    %3149 = vmatprep.subr.bf16.mxu0 %v2560
    %3150 = vmatpush1.bf16.msra.mxu0 %v2559
    %3151 = vmatprep.mubr.bf16.mxu0 %v1366
    %3152 = vmatmul.mubr.bf16.gmra.mrb[0].mxu0 %v1365
    %v3153 = vpop.f32.mrb[0].mxu0
    %v3154 = vadd.f32 %v1646, %v3153
    %v3155 = vpop.f32.mrb[0].mxu0
    %v3156 = vadd.f32 %v1650, %v3155
    %v3157 = vpop.f32.mrb[0].mxu0
    %v3158 = vadd.f32 %v1646, %v3157
    %v3159 = vpop.f32.mrb[0].mxu0
    %v3160 = vadd.f32 %v1650, %v3159
    %3161 = vdwg.mxu0
    %3162 = vmatprep.subr.bf16.mxu0 %v2568
    %3163 = vmatpush1.bf16.msra.mxu0 %v2567
    %3164 = vmatprep.subr.bf16.mxu0 %v2576
    %3165 = vmatpush1.bf16.msra.mxu0 %v2575
    %3166 = vmatprep.subr.bf16.mxu0 %v2584
    %3167 = vmatpush1.bf16.msra.mxu0 %v2583
    %3168 = vmatprep.subr.bf16.mxu0 %v2592
    %3169 = vmatpush1.bf16.msra.mxu0 %v2591
    %3170 = vmatprep.subr.bf16.mxu0 %v2600
    %3171 = vmatpush1.bf16.msra.mxu0 %v2599
    %3172 = vmatprep.subr.bf16.mxu0 %v2608
    %3173 = vmatpush1.bf16.msra.mxu0 %v2607
    %3174 = vmatprep.subr.bf16.mxu0 %v2616
    %3175 = vmatpush1.bf16.msra.mxu0 %v2615
    %3176 = vmatprep.subr.bf16.mxu0 %v2624
    %3177 = vmatpush1.bf16.msra.mxu0 %v2623
    %3178 = vmatprep.subr.bf16.mxu0 %v2632
    %3179 = vmatpush1.bf16.msra.mxu0 %v2631
    %3180 = vmatprep.subr.bf16.mxu0 %v2640
    %3181 = vmatpush1.bf16.msra.mxu0 %v2639
    %3182 = vmatprep.subr.bf16.mxu0 %v2648
    %3183 = vmatpush1.bf16.msra.mxu0 %v2647
    %3184 = vmatprep.subr.bf16.mxu0 %v2656
    %3185 = vmatpush1.bf16.msra.mxu0 %v2655
    %3186 = vmatprep.subr.bf16.mxu0 %v2664
    %3187 = vmatpush1.bf16.msra.mxu0 %v2663
    %3188 = vmatprep.subr.bf16.mxu0 %v2672
    %3189 = vmatpush1.bf16.msra.mxu0 %v2671
    %3190 = vmatprep.subr.bf16.mxu0 %v2680
    %3191 = vmatpush1.bf16.msra.mxu0 %v2679
    %3192 = vmatprep.subr.bf16.mxu0 %v2688
    %3193 = vmatpush1.bf16.msra.mxu0 %v2687
    %3194 = vmatprep.mubr.bf16.mxu0 %v1368
    %3195 = vmatmul.mubr.bf16.gmra.mrb[0].mxu0 %v1367
    %v3196 = vpop.f32.mrb[0].mxu0
    %v3197 = vadd.f32 %v3154, %v3196
    %v3198 = vpop.f32.mrb[0].mxu0
    %v3199 = vadd.f32 %v3156, %v3198
    %v3200 = vpop.f32.mrb[0].mxu0
    %v3201 = vadd.f32 %v3158, %v3200
    %v3202 = vpop.f32.mrb[0].mxu0
    %v3203 = vadd.f32 %v3160, %v3202
    %3204 = vdwg.mxu0
    %3205 = vmatprep.subr.bf16.mxu0 %v2442
    %3206 = vmatpush1.bf16.msra.mxu0 %v2441
    %3207 = vmatprep.subr.bf16.mxu0 %v2450
    %3208 = vmatpush1.bf16.msra.mxu0 %v2449
    %3209 = vmatprep.subr.bf16.mxu0 %v2458
    %3210 = vmatpush1.bf16.msra.mxu0 %v2457
    %3211 = vmatprep.subr.bf16.mxu0 %v2466
    %3212 = vmatpush1.bf16.msra.mxu0 %v2465
    %3213 = vmatprep.subr.bf16.mxu0 %v2474
    %3214 = vmatpush1.bf16.msra.mxu0 %v2473
    %3215 = vmatprep.subr.bf16.mxu0 %v2482
    %3216 = vmatpush1.bf16.msra.mxu0 %v2481
    %3217 = vmatprep.subr.bf16.mxu0 %v2490
    %3218 = vmatpush1.bf16.msra.mxu0 %v2489
    %3219 = vmatprep.subr.bf16.mxu0 %v2498
    %3220 = vmatpush1.bf16.msra.mxu0 %v2497
    %3221 = vmatprep.subr.bf16.mxu0 %v2506
    %3222 = vmatpush1.bf16.msra.mxu0 %v2505
    %3223 = vmatprep.subr.bf16.mxu0 %v2514
    %3224 = vmatpush1.bf16.msra.mxu0 %v2513
    %3225 = vmatprep.subr.bf16.mxu0 %v2522
    %3226 = vmatpush1.bf16.msra.mxu0 %v2521
    %3227 = vmatprep.subr.bf16.mxu0 %v2530
    %3228 = vmatpush1.bf16.msra.mxu0 %v2529
    %3229 = vmatprep.subr.bf16.mxu0 %v2538
    %3230 = vmatpush1.bf16.msra.mxu0 %v2537
    %3231 = vmatprep.subr.bf16.mxu0 %v2546
    %3232 = vmatpush1.bf16.msra.mxu0 %v2545
    %3233 = vmatprep.subr.bf16.mxu0 %v2554
    %3234 = vmatpush1.bf16.msra.mxu0 %v2553
    %3235 = vmatprep.subr.bf16.mxu0 %v2562
    %3236 = vmatpush1.bf16.msra.mxu0 %v2561
    %3237 = vmatprep.mubr.bf16.mxu0 %v1366
    %3238 = vmatmul.mubr.bf16.gmra.mrb[0].mxu0 %v1365
    %v3239 = vpop.f32.mrb[0].mxu0
    %v3240 = vadd.f32 %v1654, %v3239
    %v3241 = vpop.f32.mrb[0].mxu0
    %v3242 = vadd.f32 %v1658, %v3241
    %v3243 = vpop.f32.mrb[0].mxu0
    %v3244 = vadd.f32 %v1654, %v3243
    %v3245 = vpop.f32.mrb[0].mxu0
    %v3246 = vadd.f32 %v1658, %v3245
    %3247 = vdwg.mxu0
    %3248 = vmatprep.subr.bf16.mxu0 %v2570
    %3249 = vmatpush1.bf16.msra.mxu0 %v2569
    %3250 = vmatprep.subr.bf16.mxu0 %v2578
    %3251 = vmatpush1.bf16.msra.mxu0 %v2577
    %3252 = vmatprep.subr.bf16.mxu0 %v2586
    %3253 = vmatpush1.bf16.msra.mxu0 %v2585
    %3254 = vmatprep.subr.bf16.mxu0 %v2594
    %3255 = vmatpush1.bf16.msra.mxu0 %v2593
    %3256 = vmatprep.subr.bf16.mxu0 %v2602
    %3257 = vmatpush1.bf16.msra.mxu0 %v2601
    %3258 = vmatprep.subr.bf16.mxu0 %v2610
    %3259 = vmatpush1.bf16.msra.mxu0 %v2609
    %3260 = vmatprep.subr.bf16.mxu0 %v2618
    %3261 = vmatpush1.bf16.msra.mxu0 %v2617
    %3262 = vmatprep.subr.bf16.mxu0 %v2626
    %3263 = vmatpush1.bf16.msra.mxu0 %v2625
    %3264 = vmatprep.subr.bf16.mxu0 %v2634
    %3265 = vmatpush1.bf16.msra.mxu0 %v2633
    %3266 = vmatprep.subr.bf16.mxu0 %v2642
    %3267 = vmatpush1.bf16.msra.mxu0 %v2641
    %3268 = vmatprep.subr.bf16.mxu0 %v2650
    %3269 = vmatpush1.bf16.msra.mxu0 %v2649
    %3270 = vmatprep.subr.bf16.mxu0 %v2658
    %3271 = vmatpush1.bf16.msra.mxu0 %v2657
    %3272 = vmatprep.subr.bf16.mxu0 %v2666
    %3273 = vmatpush1.bf16.msra.mxu0 %v2665
    %3274 = vmatprep.subr.bf16.mxu0 %v2674
    %3275 = vmatpush1.bf16.msra.mxu0 %v2673
    %3276 = vmatprep.subr.bf16.mxu0 %v2682
    %3277 = vmatpush1.bf16.msra.mxu0 %v2681
    %3278 = vmatprep.subr.bf16.mxu0 %v2690
    %3279 = vmatpush1.bf16.msra.mxu0 %v2689
    %3280 = vmatprep.mubr.bf16.mxu0 %v1368
    %3281 = vmatmul.mubr.bf16.gmra.mrb[0].mxu0 %v1367
    %v3282 = vpop.f32.mrb[0].mxu0
    %v3283 = vadd.f32 %v3240, %v3282
    %v3284 = vpop.f32.mrb[0].mxu0
    %v3285 = vadd.f32 %v3242, %v3284
    %v3286 = vpop.f32.mrb[0].mxu0
    %v3287 = vadd.f32 %v3244, %v3286
    %v3288 = vpop.f32.mrb[0].mxu0
    %v3289 = vadd.f32 %v3246, %v3288
    %3290 = vdwg.mxu0
    %v3291 = vld [vmem:[%s15] sm:$0xff]
    %v3292 = vld [vmem:[#allocation16] sm:$0xff]
    %v3293 = vadd.f32 %v3025, %v3029
    %v3294 = vrot.slane %v3293, 4
    %v3295 = vadd.f32 %v3293, %v3294
    %v3296 = vrot.slane %v3295, 2
    %v3297 = vadd.f32 %v3295, %v3296
    %v3298 = vrot.slane %v3297, 1
    %v3299 = vadd.f32 %v3297, %v3298
    %v3300 = vadd.f32 %v3027, %v3031
    %v3301 = vrot.slane %v3300, 4
    %v3302 = vadd.f32 %v3300, %v3301
    %v3303 = vrot.slane %v3302, 2
    %v3304 = vadd.f32 %v3302, %v3303
    %v3305 = vrot.slane %v3304, 1
    %v3306 = vadd.f32 %v3304, %v3305
    %v3307 = vadd.f32 %v3111, %v3115
    %v3308 = vrot.slane %v3307, 4
    %v3309 = vadd.f32 %v3307, %v3308
    %v3310 = vrot.slane %v3309, 2
    %v3311 = vadd.f32 %v3309, %v3310
    %v3312 = vrot.slane %v3311, 1
    %v3313 = vadd.f32 %v3311, %v3312
    %v3314 = vadd.f32 %v3113, %v3117
    %v3315 = vrot.slane %v3314, 4
    %v3316 = vadd.f32 %v3314, %v3315
    %v3317 = vrot.slane %v3316, 2
    %v3318 = vadd.f32 %v3316, %v3317
    %v3319 = vrot.slane %v3318, 1
    %v3320 = vadd.f32 %v3318, %v3319
    %v3321 = vadd.f32 %v3197, %v3201
    %v3322 = vrot.slane %v3321, 4
    %v3323 = vadd.f32 %v3321, %v3322
    %v3324 = vrot.slane %v3323, 2
    %v3325 = vadd.f32 %v3323, %v3324
    %v3326 = vrot.slane %v3325, 1
    %v3327 = vadd.f32 %v3325, %v3326
    %v3328 = vadd.f32 %v3199, %v3203
    %v3329 = vrot.slane %v3328, 4
    %v3330 = vadd.f32 %v3328, %v3329
    %v3331 = vrot.slane %v3330, 2
    %v3332 = vadd.f32 %v3330, %v3331
    %v3333 = vrot.slane %v3332, 1
    %v3334 = vadd.f32 %v3332, %v3333
    %v3335 = vadd.f32 %v3283, %v3287
    %v3336 = vrot.slane %v3335, 4
    %v3337 = vadd.f32 %v3335, %v3336
    %v3338 = vrot.slane %v3337, 2
    %v3339 = vadd.f32 %v3337, %v3338
    %v3340 = vrot.slane %v3339, 1
    %v3341 = vadd.f32 %v3339, %v3340
    %v3342 = vadd.f32 %v3285, %v3289
    %v3343 = vrot.slane %v3342, 4
    %v3344 = vadd.f32 %v3342, %v3343
    %v3345 = vrot.slane %v3344, 2
    %v3346 = vadd.f32 %v3344, %v3345
    %v3347 = vrot.slane %v3346, 1
    %v3348 = vadd.f32 %v3346, %v3347
    %v3349 = vmul.f32 %v3299, %v528
    %v3350 = vmul.f32 %v3306, %v528
    %v3351 = vmul.f32 %v3313, %v528
    %v3352 = vmul.f32 %v3320, %v528
    %v3353 = vmul.f32 %v3327, %v528
    %v3354 = vmul.f32 %v3334, %v528
    %v3355 = vmul.f32 %v3341, %v528
    %v3356 = vmul.f32 %v3348, %v528
    %v3357 = vmul.f32 %v3025, %v3025
    %v3358 = vmul.f32 %v3027, %v3027
    %v3359 = vmul.f32 %v3111, %v3111
    %v3360 = vmul.f32 %v3113, %v3113
    %v3361 = vmul.f32 %v3197, %v3197
    %v3362 = vmul.f32 %v3199, %v3199
    %v3363 = vmul.f32 %v3283, %v3283
    %v3364 = vmul.f32 %v3285, %v3285
    %v3365 = vmul.f32 %v3029, %v3029
    %v3366 = vmul.f32 %v3031, %v3031
    %v3367 = vmul.f32 %v3115, %v3115
    %v3368 = vmul.f32 %v3117, %v3117
    %v3369 = vmul.f32 %v3201, %v3201
    %v3370 = vmul.f32 %v3203, %v3203
    %v3371 = vmul.f32 %v3287, %v3287
    %v3372 = vmul.f32 %v3289, %v3289
    %v3373 = vadd.f32 %v3357, %v3365
    %v3374 = vrot.slane %v3373, 4
    %v3375 = vadd.f32 %v3373, %v3374
    %v3376 = vrot.slane %v3375, 2
    %v3377 = vadd.f32 %v3375, %v3376
    %v3378 = vrot.slane %v3377, 1
    %v3379 = vadd.f32 %v3377, %v3378
    %v3380 = vadd.f32 %v3358, %v3366
    %v3381 = vrot.slane %v3380, 4
    %v3382 = vadd.f32 %v3380, %v3381
    %v3383 = vrot.slane %v3382, 2
    %v3384 = vadd.f32 %v3382, %v3383
    %v3385 = vrot.slane %v3384, 1
    %v3386 = vadd.f32 %v3384, %v3385
    %v3387 = vadd.f32 %v3359, %v3367
    %v3388 = vrot.slane %v3387, 4
    %v3389 = vadd.f32 %v3387, %v3388
    %v3390 = vrot.slane %v3389, 2
    %v3391 = vadd.f32 %v3389, %v3390
    %v3392 = vrot.slane %v3391, 1
    %v3393 = vadd.f32 %v3391, %v3392
    %v3394 = vadd.f32 %v3360, %v3368
    %v3395 = vrot.slane %v3394, 4
    %v3396 = vadd.f32 %v3394, %v3395
    %v3397 = vrot.slane %v3396, 2
    %v3398 = vadd.f32 %v3396, %v3397
    %v3399 = vrot.slane %v3398, 1
    %v3400 = vadd.f32 %v3398, %v3399
    %v3401 = vadd.f32 %v3361, %v3369
    %v3402 = vrot.slane %v3401, 4
    %v3403 = vadd.f32 %v3401, %v3402
    %v3404 = vrot.slane %v3403, 2
    %v3405 = vadd.f32 %v3403, %v3404
    %v3406 = vrot.slane %v3405, 1
    %v3407 = vadd.f32 %v3405, %v3406
    %v3408 = vadd.f32 %v3362, %v3370
    %v3409 = vrot.slane %v3408, 4
    %v3410 = vadd.f32 %v3408, %v3409
    %v3411 = vrot.slane %v3410, 2
    %v3412 = vadd.f32 %v3410, %v3411
    %v3413 = vrot.slane %v3412, 1
    %v3414 = vadd.f32 %v3412, %v3413
    %v3415 = vadd.f32 %v3363, %v3371
    %v3416 = vrot.slane %v3415, 4
    %v3417 = vadd.f32 %v3415, %v3416
    %v3418 = vrot.slane %v3417, 2
    %v3419 = vadd.f32 %v3417, %v3418
    %v3420 = vrot.slane %v3419, 1
    %v3421 = vadd.f32 %v3419, %v3420
    %v3422 = vadd.f32 %v3364, %v3372
    %v3423 = vrot.slane %v3422, 4
    %v3424 = vadd.f32 %v3422, %v3423
    %v3425 = vrot.slane %v3424, 2
    %v3426 = vadd.f32 %v3424, %v3425
    %v3427 = vrot.slane %v3426, 1
    %v3428 = vadd.f32 %v3426, %v3427
    %v3429 = vmul.f32 %v3379, %v528
    %v3430 = vmul.f32 %v3386, %v528
    %v3431 = vmul.f32 %v3393, %v528
    %v3432 = vmul.f32 %v3400, %v528
    %v3433 = vmul.f32 %v3407, %v528
    %v3434 = vmul.f32 %v3414, %v528
    %v3435 = vmul.f32 %v3421, %v528
    %v3436 = vmul.f32 %v3428, %v528
    %v3437 = vmul.f32 %v3349, %v3349
    %v3438 = vmul.f32 %v3350, %v3350
    %v3439 = vmul.f32 %v3351, %v3351
    %v3440 = vmul.f32 %v3352, %v3352
    %v3441 = vmul.f32 %v3353, %v3353
    %v3442 = vmul.f32 %v3354, %v3354
    %v3443 = vmul.f32 %v3355, %v3355
    %v3444 = vmul.f32 %v3356, %v3356
    %v3445 = vsub.f32 %v3429, %v3437
    %v3446 = vsub.f32 %v3430, %v3438
    %v3447 = vsub.f32 %v3431, %v3439
    %v3448 = vsub.f32 %v3432, %v3440
    %v3449 = vsub.f32 %v3433, %v3441
    %v3450 = vsub.f32 %v3434, %v3442
    %v3451 = vsub.f32 %v3435, %v3443
    %v3452 = vsub.f32 %v3436, %v3444
    %v3453 = vmax.f32 %v3445, 0.0
    %v3454 = vmax.f32 %v3446, 0.0
    %v3455 = vmax.f32 %v3447, 0.0
    %v3456 = vmax.f32 %v3448, 0.0
    %v3457 = vmax.f32 %v3449, 0.0
    %v3458 = vmax.f32 %v3450, 0.0
    %v3459 = vmax.f32 %v3451, 0.0
    %v3460 = vmax.f32 %v3452, 0.0
    %v3461 = vadd.f32 %v3453, 0.8
    %v3462 = vadd.f32 %v3454, 0.8
    %v3463 = vadd.f32 %v3455, 0.8
    %v3464 = vadd.f32 %v3456, 0.8
    %v3465 = vadd.f32 %v3457, 0.8
    %v3466 = vadd.f32 %v3458, 0.8
    %v3467 = vadd.f32 %v3459, 0.8
    %v3468 = vadd.f32 %v3460, 0.8
    %v3469 = vrsqrt.pop %v3461
    %v3470 = vrsqrt.pop %v3462
    %v3471 = vrsqrt.pop %v3463
    %v3472 = vrsqrt.pop %v3464
    %v3473 = vrsqrt.pop %v3465
    %v3474 = vrsqrt.pop %v3466
    %v3475 = vrsqrt.pop %v3467
    %v3476 = vrsqrt.pop %v3468
    %v3485 = vcombine.low %v3469, %v3470
    %v3486 = vcombine.low %v3471, %v3472
    %v3487 = vcombine.low %v3473, %v3474
    %v3488 = vcombine.low %v3475, %v3476
    %v3490 = vunpack.c.l.s4 1966171168
    %v3491 = vunpack.c.0.s8 %v3490
    %v3492 = vlaneseq
    %v3493 = vshrl.u32 %v3492, 7
    %v3494 = vsub.s32 %v3491, %v3493
    %v3495 = vrot.slane %v3485, %v3494
    %v3497 = vunpack.c.l.s4 1966171168
    %v3498 = vunpack.c.0.s8 %v3497
    %v3499 = vlaneseq
    %v3500 = vshrl.u32 %v3499, 7
    %v3501 = vsub.s32 %v3498, %v3500
    %v3502 = vrot.slane %v3486, %v3501
    %v3504 = vunpack.c.l.s4 1966171168
    %v3505 = vunpack.c.0.s8 %v3504
    %v3506 = vlaneseq
    %v3507 = vshrl.u32 %v3506, 7
    %v3508 = vsub.s32 %v3505, %v3507
    %v3509 = vrot.slane %v3487, %v3508
    %v3511 = vunpack.c.l.s4 1966171168
    %v3512 = vunpack.c.0.s8 %v3511
    %v3513 = vlaneseq
    %v3514 = vshrl.u32 %v3513, 7
    %v3515 = vsub.s32 %v3512, %v3514
    %v3516 = vrot.slane %v3488, %v3515
    %v3517 = vcombine.low %v3495, %v3502
    %v3518 = vcombine.low %v3509, %v3516
    %v3520 = vunpack.c.l.s4 1966171168
    %v3521 = vunpack.c.0.s8 %v3520
    %v3522 = vlaneseq
    %v3523 = vshrl.u32 %v3522, 7
    %v3524 = vsub.s32 %v3521, %v3523
    %v3525 = vrot.slane %v3517, %v3524
    %v3527 = vunpack.c.l.s4 1966171168
    %v3528 = vunpack.c.0.s8 %v3527
    %v3529 = vlaneseq
    %v3530 = vshrl.u32 %v3529, 7
    %v3531 = vsub.s32 %v3528, %v3530
    %v3532 = vrot.slane %v3518, %v3531
    %v3533 = vcombine.low %v3525, %v3532
    %v3535 = vmul.f32 %v3291, %v3533
    %v3537 = vlaneseq
    %v3538 = vshrl.u32 %v3537, 7
    %v3539 = vsub.s32 0, %v3538
    %v3540 = vrot.slane %v3535, %v3539
    %v3541 = vlaneseq
    %v3542 = vshrl.u32 %v3541, 7
    %v3543 = vsub.s32 1, %v3542
    %v3544 = vrot.slane %v3535, %v3543
    %v3545 = vlaneseq
    %v3546 = vshrl.u32 %v3545, 7
    %v3547 = vsub.s32 2, %v3546
    %v3548 = vrot.slane %v3535, %v3547
    %v3549 = vlaneseq
    %v3550 = vshrl.u32 %v3549, 7
    %v3551 = vsub.s32 3, %v3550
    %v3552 = vrot.slane %v3535, %v3551
    %v3553 = vlaneseq
    %v3554 = vshrl.u32 %v3553, 7
    %v3555 = vsub.s32 4, %v3554
    %v3556 = vrot.slane %v3535, %v3555
    %v3557 = vlaneseq
    %v3558 = vshrl.u32 %v3557, 7
    %v3559 = vsub.s32 5, %v3558
    %v3560 = vrot.slane %v3535, %v3559
    %v3561 = vlaneseq
    %v3562 = vshrl.u32 %v3561, 7
    %v3563 = vsub.s32 6, %v3562
    %v3564 = vrot.slane %v3535, %v3563
    %v3565 = vlaneseq
    %v3566 = vshrl.u32 %v3565, 7
    %v3567 = vsub.s32 7, %v3566
    %v3568 = vrot.slane %v3535, %v3567
    %v3577 = vmul.f32 %v3349, %v3540
    %v3578 = vmul.f32 %v3350, %v3544
    %v3579 = vmul.f32 %v3351, %v3548
    %v3580 = vmul.f32 %v3352, %v3552
    %v3581 = vmul.f32 %v3353, %v3556
    %v3582 = vmul.f32 %v3354, %v3560
    %v3583 = vmul.f32 %v3355, %v3564
    %v3584 = vmul.f32 %v3356, %v3568
    %v3593 = vcombine.low %v3577, %v3578
    %v3594 = vcombine.low %v3579, %v3580
    %v3595 = vcombine.low %v3581, %v3582
    %v3596 = vcombine.low %v3583, %v3584
    %v3598 = vunpack.c.l.s4 1966171168
    %v3599 = vunpack.c.0.s8 %v3598
    %v3600 = vlaneseq
    %v3601 = vshrl.u32 %v3600, 7
    %v3602 = vsub.s32 %v3599, %v3601
    %v3603 = vrot.slane %v3593, %v3602
    %v3605 = vunpack.c.l.s4 1966171168
    %v3606 = vunpack.c.0.s8 %v3605
    %v3607 = vlaneseq
    %v3608 = vshrl.u32 %v3607, 7
    %v3609 = vsub.s32 %v3606, %v3608
    %v3610 = vrot.slane %v3594, %v3609
    %v3612 = vunpack.c.l.s4 1966171168
    %v3613 = vunpack.c.0.s8 %v3612
    %v3614 = vlaneseq
    %v3615 = vshrl.u32 %v3614, 7
    %v3616 = vsub.s32 %v3613, %v3615
    %v3617 = vrot.slane %v3595, %v3616
    %v3619 = vunpack.c.l.s4 1966171168
    %v3620 = vunpack.c.0.s8 %v3619
    %v3621 = vlaneseq
    %v3622 = vshrl.u32 %v3621, 7
    %v3623 = vsub.s32 %v3620, %v3622
    %v3624 = vrot.slane %v3596, %v3623
    %v3625 = vcombine.low %v3603, %v3610
    %v3626 = vcombine.low %v3617, %v3624
    %v3628 = vunpack.c.l.s4 1966171168
    %v3629 = vunpack.c.0.s8 %v3628
    %v3630 = vlaneseq
    %v3631 = vshrl.u32 %v3630, 7
    %v3632 = vsub.s32 %v3629, %v3631
    %v3633 = vrot.slane %v3625, %v3632
    %v3635 = vunpack.c.l.s4 1966171168
    %v3636 = vunpack.c.0.s8 %v3635
    %v3637 = vlaneseq
    %v3638 = vshrl.u32 %v3637, 7
    %v3639 = vsub.s32 %v3636, %v3638
    %v3640 = vrot.slane %v3626, %v3639
    %v3641 = vcombine.low %v3633, %v3640
    %v3643 = vsub.f32 %v3292, %v3641
    %v3644 = vmul.f32 %v3025, %v3540
    %v3645 = vmul.f32 %v3027, %v3544
    %v3646 = vmul.f32 %v3111, %v3548
    %v3647 = vmul.f32 %v3113, %v3552
    %v3648 = vmul.f32 %v3197, %v3556
    %v3649 = vmul.f32 %v3199, %v3560
    %v3650 = vmul.f32 %v3283, %v3564
    %v3651 = vmul.f32 %v3285, %v3568
    %v3652 = vmul.f32 %v3029, %v3540
    %v3653 = vmul.f32 %v3031, %v3544
    %v3654 = vmul.f32 %v3115, %v3548
    %v3655 = vmul.f32 %v3117, %v3552
    %v3656 = vmul.f32 %v3201, %v3556
    %v3657 = vmul.f32 %v3203, %v3560
    %v3658 = vmul.f32 %v3287, %v3564
    %v3659 = vmul.f32 %v3289, %v3568
    %v3661 = vlaneseq
    %v3662 = vshrl.u32 %v3661, 7
    %v3663 = vsub.s32 0, %v3662
    %v3664 = vrot.slane %v3643, %v3663
    %v3665 = vlaneseq
    %v3666 = vshrl.u32 %v3665, 7
    %v3667 = vsub.s32 1, %v3666
    %v3668 = vrot.slane %v3643, %v3667
    %v3669 = vlaneseq
    %v3670 = vshrl.u32 %v3669, 7
    %v3671 = vsub.s32 2, %v3670
    %v3672 = vrot.slane %v3643, %v3671
    %v3673 = vlaneseq
    %v3674 = vshrl.u32 %v3673, 7
    %v3675 = vsub.s32 3, %v3674
    %v3676 = vrot.slane %v3643, %v3675
    %v3677 = vlaneseq
    %v3678 = vshrl.u32 %v3677, 7
    %v3679 = vsub.s32 4, %v3678
    %v3680 = vrot.slane %v3643, %v3679
    %v3681 = vlaneseq
    %v3682 = vshrl.u32 %v3681, 7
    %v3683 = vsub.s32 5, %v3682
    %v3684 = vrot.slane %v3643, %v3683
    %v3685 = vlaneseq
    %v3686 = vshrl.u32 %v3685, 7
    %v3687 = vsub.s32 6, %v3686
    %v3688 = vrot.slane %v3643, %v3687
    %v3689 = vlaneseq
    %v3690 = vshrl.u32 %v3689, 7
    %v3691 = vsub.s32 7, %v3690
    %v3692 = vrot.slane %v3643, %v3691
    %v3701 = vadd.f32 %v3644, %v3664
    %v3702 = vadd.f32 %v3645, %v3668
    %v3703 = vadd.f32 %v3646, %v3672
    %v3704 = vadd.f32 %v3647, %v3676
    %v3705 = vadd.f32 %v3648, %v3680
    %v3706 = vadd.f32 %v3649, %v3684
    %v3707 = vadd.f32 %v3650, %v3688
    %v3708 = vadd.f32 %v3651, %v3692
    %v3709 = vadd.f32 %v3652, %v3664
    %v3710 = vadd.f32 %v3653, %v3668
    %v3711 = vadd.f32 %v3654, %v3672
    %v3712 = vadd.f32 %v3655, %v3676
    %v3713 = vadd.f32 %v3656, %v3680
    %v3714 = vadd.f32 %v3657, %v3684
    %v3715 = vadd.f32 %v3658, %v3688
    %v3716 = vadd.f32 %v3659, %v3692
    %v3717 = vmul.f32 %v3701, 0.2
    %v3718 = vmul.f32 %v3702, 0.2
    %v3719 = vmul.f32 %v3703, 0.2
    %v3720 = vmul.f32 %v3704, 0.2
    %v3721 = vmul.f32 %v3705, 0.2
    %v3722 = vmul.f32 %v3706, 0.2
    %v3723 = vmul.f32 %v3707, 0.2
    %v3724 = vmul.f32 %v3708, 0.2
    %v3725 = vmul.f32 %v3709, 0.2
    %v3726 = vmul.f32 %v3710, 0.2
    %v3727 = vmul.f32 %v3711, 0.2
    %v3728 = vmul.f32 %v3712, 0.2
    %v3729 = vmul.f32 %v3713, 0.2
    %v3730 = vmul.f32 %v3714, 0.2
    %v3731 = vmul.f32 %v3715, 0.2
    %v3732 = vmul.f32 %v3716, 0.2
    %v3733 = vmax.f32 %v3701, %v3717
    %v3734 = vmax.f32 %v3702, %v3718
    %v3735 = vmax.f32 %v3703, %v3719
    %v3736 = vmax.f32 %v3704, %v3720
    %v3737 = vmax.f32 %v3705, %v3721
    %v3738 = vmax.f32 %v3706, %v3722
    %v3739 = vmax.f32 %v3707, %v3723
    %v3740 = vmax.f32 %v3708, %v3724
    %v3741 = vmax.f32 %v3709, %v3725
    %v3742 = vmax.f32 %v3710, %v3726
    %v3743 = vmax.f32 %v3711, %v3727
    %v3744 = vmax.f32 %v3712, %v3728
    %v3745 = vmax.f32 %v3713, %v3729
    %v3746 = vmax.f32 %v3714, %v3730
    %v3747 = vmax.f32 %v3715, %v3731
    %v3748 = vmax.f32 %v3716, %v3732
    %v3749 = vpack.c.bf16 %v3741, %v3733
    %v3750 = vpack.c.bf16 %v3742, %v3734
    %v3751 = vpack.c.bf16 %v3743, %v3735
    %v3752 = vpack.c.bf16 %v3744, %v3736
    %v3753 = vpack.c.bf16 %v3745, %v3737
    %v3754 = vpack.c.bf16 %v3746, %v3738
    %v3755 = vpack.c.bf16 %v3747, %v3739
    %v3756 = vpack.c.bf16 %v3748, %v3740
    %v3765 = vunpack.c.l.b16 %v3749
    %v3766 = vunpack.c.l.b16 %v3750
    %v3767 = vunpack.c.l.b16 %v3751
    %v3768 = vunpack.c.l.b16 %v3752
    %v3769 = vunpack.c.l.b16 %v3753
    %v3770 = vunpack.c.l.b16 %v3754
    %v3771 = vunpack.c.l.b16 %v3755
    %v3772 = vunpack.c.l.b16 %v3756
    %v3773 = vunpack.c.h.b16 %v3749
    %v3774 = vunpack.c.h.b16 %v3750
    %v3775 = vunpack.c.h.b16 %v3751
    %v3776 = vunpack.c.h.b16 %v3752
    %v3777 = vunpack.c.h.b16 %v3753
    %v3778 = vunpack.c.h.b16 %v3754
    %v3779 = vunpack.c.h.b16 %v3755
    %v3780 = vunpack.c.h.b16 %v3756
    %v3781 = vpack.c.b16 %v3766, %v3765
    %v3782 = vpack.c.b16 %v3768, %v3767
    %v3783 = vpack.c.b16 %v3770, %v3769
    %v3784 = vpack.c.b16 %v3772, %v3771
    %v3785 = vpack.c.b16 %v3774, %v3773
    %v3786 = vpack.c.b16 %v3776, %v3775
    %v3787 = vpack.c.b16 %v3778, %v3777
    %v3788 = vpack.c.b16 %v3780, %v3779
    %3797 = vst [vmem:[%s17] sm:$0xff] %v3781
    %3798 = vst [vmem:[%s17 + $0x8] sm:$0xff] %v3782
    %3799 = vst [vmem:[%s17 + $0x10] sm:$0xff] %v3783
    %3800 = vst [vmem:[%s17 + $0x18] sm:$0xff] %v3784
    %3801 = vst [vmem:[%s17 + $0x20] sm:$0xff] %v3785
    %3802 = vst [vmem:[%s17 + $0x28] sm:$0xff] %v3786
    %3803 = vst [vmem:[%s17 + $0x30] sm:$0xff] %v3787
    %3804 = vst [vmem:[%s17 + $0x38] sm:$0xff] %v3788
    // Predicated region
    $region110: #{generator_forward.2} parent=1 // pred_check
      _
    $region111: #{generator_forward.2} parent=1 // pred_check_branch
      %3806 = sbr.rel (0) target = $region113
    $region112: #{generator_forward.2} parent=1 // pred_region
      _
    $region113: #{generator_forward.2} parent=1 // pred_fallthru
      _
    // Predicated region
    $region114: #{generator_forward.2} parent=1 // pred_check
      _
    $region115: #{generator_forward.2} parent=1 // pred_check_branch
      %3808 = sbr.rel (0) target = $region117
    $region116: #{generator_forward.2} parent=1 // pred_region
      _
    $region117: #{generator_forward.2} parent=1 // pred_fallthru
      _
    %3809 = vsyncpa [#allocation3], 1
    %3810 = vsyncpa [#allocation5], 1
    %3811 = vsyncpa [#allocation8], 1
    %3812 = vsyncpa [#allocation11], 1
    %3813 = vsyncpa [#allocation14], 1
    %3814 = vsyncpa [#allocation17], 1

</llo_original>
